<compile_context>
chip_gen: v7x
topology: tpu7x:2x2x1
jax: 0.10.0
libtpu: 0.0.40
codegen_flags: <defaults>
</compile_context>

<pallas_src>
import functools

import jax
import jax.numpy as jnp
from jax.experimental import pallas as pl
from jax.experimental.pallas import tpu as pltpu

VMEM = pltpu.MemorySpace.VMEM

_LANE_PAD = 128  # lane-aligned zero halo on the flattened spatial axis
_OFFSETS = tuple((oy, ox) for oy in (-1, 0, 1) for ox in (-1, 0, 1))  # 3x3 taps


# --------------------------------- kernel ------------------------------------
def _basic_block_kernel(x_ref, m_ref, w1_ref, b1_ref, w2_ref, b2_ref,
                        wc1_ref, bc1_ref, wch_ref, bch_ref, wcw_ref, bcw_ref,
                        ph_ref, pw_ref, eh_ref, ew_ref,
                        o_ref, pad_ref, *, width):
    n = x_ref.shape[-1]
    pad = _LANE_PAD

    x = x_ref[...]                     # (C, N) identity / block1 input
    masks = m_ref[...]                 # (9, N) conv zero-padding validity masks

    def conv3x3(w_ref_, b_ref_):
        """3x3 conv (+ folded-BN bias) of whatever currently sits in pad_ref."""
        acc = None
        for t, (oy, ox) in enumerate(_OFFSETS):
            s = oy * width + ox                                  # static shift
            tap = pad_ref[:, pad + s: pad + s + n] * masks[t:t + 1, :]  # (Cin,N)
            part = jnp.dot(w_ref_[t], tap,                        # (Cout,Cin)@(Cin,N)
                           preferred_element_type=jnp.float32)
            acc = part if acc is None else acc + part
        return acc + b_ref_[...]                                  # (Cout,1) bias

    def hswish(z):
        return z * jnp.clip(z + 3.0, 0.0, 6.0) * (1.0 / 6.0)

    def sigmoid(z):
        return 1.0 / (1.0 + jnp.exp(-z))

    # ---- block1: conv3x3 + folded BN + ReLU ---------------------------------
    pad_ref[...] = jnp.zeros_like(pad_ref)          # zero halo once
    pad_ref[:, pad: pad + n] = x
    out1 = jnp.maximum(conv3x3(w1_ref, b1_ref), 0.0)              # (C, N)

    # ---- block2: conv3x3 + folded BN + ReLU (out1 stays in VMEM) ------------
    pad_ref[:, pad: pad + n] = out1
    out2 = jnp.maximum(conv3x3(w2_ref, b2_ref), 0.0)              # (C, N)

    # ---- CoordAtt ------------------------------------------------------------
    # Pooled branches as matmuls against the pooling matrices (mean over W / H).
    x_h = jnp.dot(out2, ph_ref[...], preferred_element_type=jnp.float32)  # (C, B*H)
    x_w = jnp.dot(out2, pw_ref[...], preferred_element_type=jnp.float32)  # (C, B*W)
    # Shared 1x1 conv (+ folded BN) + h_swish: applying it to each pooled branch
    # separately is exact because it is pointwise along the concatenated axis.
    y_h = hswish(jnp.dot(wc1_ref[...], x_h,
                         preferred_element_type=jnp.float32) + bc1_ref[...])  # (mip, B*H)
    y_w = hswish(jnp.dot(wc1_ref[...], x_w,
                         preferred_element_type=jnp.float32) + bc1_ref[...])  # (mip, B*W)
    a_h = sigmoid(jnp.dot(wch_ref[...], y_h,
                          preferred_element_type=jnp.float32) + bch_ref[...])  # (C, B*H)
    a_w = sigmoid(jnp.dot(wcw_ref[...], y_w,
                          preferred_element_type=jnp.float32) + bcw_ref[...])  # (C, B*W)
    # Broadcast gates back to (C, N) exactly once via the 0/1 expansion matrices.
    a_h_full = jnp.dot(a_h, eh_ref[...], preferred_element_type=jnp.float32)   # (C, N)
    a_w_full = jnp.dot(a_w, ew_ref[...], preferred_element_type=jnp.float32)   # (C, N)

    out = out2 * a_w_full * a_h_full

    # ---- residual (identity: stride==1, inplanes==planes) + final ReLU ------
    o_ref[...] = jnp.maximum(out + x, 0.0)


# ----------------------- geometry (masks / pool / expand) --------------------
def _geometry(B, H, W):
    """Static per-shape tensors: conv masks, pooling and expansion matrices."""
    HW = H * W
    N = B * HW
    p = jnp.arange(N, dtype=jnp.int32)
    b_idx = p // HW
    h_idx = (p // W) % H
    w_idx = p % W

    masks = []
    for oy, ox in _OFFSETS:
        ok = ((h_idx + oy >= 0) & (h_idx + oy < H)
              & (w_idx + ox >= 0) & (w_idx + ox < W))
        masks.append(ok.astype(jnp.float32))
    masks = jnp.stack(masks, axis=0)                                    # (9, N)

    row_id = b_idx * H + h_idx
    col_id = b_idx * W + w_idx
    e_h = (row_id[None, :] ==
           jnp.arange(B * H, dtype=jnp.int32)[:, None]).astype(jnp.float32)  # (B*H, N)
    e_w = (col_id[None, :] ==
           jnp.arange(B * W, dtype=jnp.int32)[:, None]).astype(jnp.float32)  # (B*W, N)
    p_h = e_h.T * (1.0 / W)                                             # (N, B*H)
    p_w = e_w.T * (1.0 / H)                                             # (N, B*W)
    return masks, p_h, p_w, e_h, e_w


def _pack_params(params):
    """Natural-layout params -> kernel layout (tap-major conv weights, column biases)."""
    def conv_w(w):                       # (3,3,Cin,Cout) -> (9, Cout, Cin)
        kh, kw, cin, cout = w.shape
        return jnp.transpose(w.reshape(kh * kw, cin, cout), (0, 2, 1))

    def col(b):
        return b.reshape(-1, 1)

    return (conv_w(params["w1"]), col(params["b1"]),
            conv_w(params["w2"]), col(params["b2"]),
            params["wc1"].T, col(params["bc1"]),
            params["wch"].T, col(params["bch"]),
            params["wcw"].T, col(params["bcw"]))


# ------------------------------- host wrapper --------------------------------
@jax.jit
def basic_block_forward(x_nchw, params):
    x_nchw = x_nchw.astype(jnp.float32)
    B, C, H, W = x_nchw.shape
    N = B * H * W

    # NCHW -> (C, B*H*W): lane-dense flattened layout for the kernel.
    x_flat = jnp.transpose(x_nchw, (1, 0, 2, 3)).reshape(C, N)
    masks, p_h, p_w, e_h, e_w = _geometry(B, H, W)
    packed = _pack_params(params)

    kernel = functools.partial(_basic_block_kernel, width=W)
    out_flat = pl.pallas_call(
        kernel,
        out_shape=jax.ShapeDtypeStruct((C, N), jnp.float32),
        in_specs=[pl.BlockSpec(memory_space=VMEM)] * 16,
        out_specs=pl.BlockSpec(memory_space=VMEM),
        scratch_shapes=[pltpu.VMEM((C, N + 2 * _LANE_PAD), jnp.float32)],
    )(x_flat, masks, *packed, p_h, p_w, e_h, e_w)

    return jnp.transpose(out_flat.reshape(C, B, H, W), (1, 0, 2, 3))    # -> NCHW


# ----------------------------- parameter set-up -------------------------------
def _fold_bn(w, gamma, beta, mean, var, bias=None, eps=1e-5):
    """Fold an eval-mode BatchNorm into conv weights (scale over the out-channel dim)."""
    scale = gamma / jnp.sqrt(var + eps)
    w_f = (w * scale).astype(jnp.float32)
    b_f = beta - mean * scale if bias is None else beta + (bias - mean) * scale
    return w_f, b_f.astype(jnp.float32)


def init_params(key, inplanes, planes, reduction=32, eps=1e-5):
    mip = max(8, planes // reduction)
    keys = iter(jax.random.split(key, 24))

    def nrm(shape, scale=0.1):
        return scale * jax.random.normal(next(keys), shape, jnp.float32)

    def bn(c):
        gamma = 1.0 + 0.1 * jax.random.normal(next(keys), (c,), jnp.float32)
        beta = 0.1 * jax.random.normal(next(keys), (c,), jnp.float32)
        mean = 0.1 * jax.random.normal(next(keys), (c,), jnp.float32)
        var = jnp.abs(1.0 + 0.1 * jax.random.normal(next(keys), (c,), jnp.float32))
        return gamma, beta, mean, var

    # block1 / block2: conv3x3 (no bias) + BN (+ ReLU), BN folded
    w1, b1 = _fold_bn(nrm((3, 3, inplanes, planes)), *bn(planes), eps=eps)
    w2, b2 = _fold_bn(nrm((3, 3, planes, planes)), *bn(planes), eps=eps)

    # CoordAtt: conv1 (1x1, bias) + BN + h_swish ; conv_h / conv_w (1x1, bias)
    wc1, bc1 = _fold_bn(nrm((planes, mip)), *bn(mip), bias=nrm((mip,)), eps=eps)
    wch, bch = nrm((mip, planes)), nrm((planes,))
    wcw, bcw = nrm((mip, planes)), nrm((planes,))

    return dict(w1=w1, b1=b1, w2=w2, b2=b2, wc1=wc1, bc1=bc1,
                wch=wch, bch=bch, wcw=wcw, bcw=bcw)


# ------------------------------ pure-JAX reference ----------------------------
def reference_forward(x_nchw, params):
    x = jnp.transpose(x_nchw.astype(jnp.float32), (0, 2, 3, 1))     # NHWC
    hp = jax.lax.Precision.HIGHEST

    def conv3x3(v, w, b):
        out = jax.lax.conv_general_dilated(
            v, w, window_strides=(1, 1), padding="SAME",
            dimension_numbers=("NHWC", "HWIO", "NHWC"), precision=hp)
        return out + b

    def hswish(z):
        return z * jnp.clip(z + 3.0, 0.0, 6.0) / 6.0

    out1 = jax.nn.relu(conv3x3(x, params["w1"], params["b1"]))
    out2 = jax.nn.relu(conv3x3(out1, params["w2"], params["b2"]))

    x_h = jnp.mean(out2, axis=2, keepdims=True)                     # avg over W
    x_w = jnp.mean(out2, axis=1, keepdims=True)                     # avg over H
    y_h = hswish(jnp.einsum("bhwc,cm->bhwm", x_h, params["wc1"], precision=hp)
                 + params["bc1"])
    y_w = hswish(jnp.einsum("bhwc,cm->bhwm", x_w, params["wc1"], precision=hp)
                 + params["bc1"])
    a_h = jax.nn.sigmoid(jnp.einsum("bhwm,mc->bhwc", y_h, params["wch"], precision=hp)
                         + params["bch"])
    a_w = jax.nn.sigmoid(jnp.einsum("bhwm,mc->bhwc", y_w, params["wcw"], precision=hp)
                         + params["bcw"])
    out = jax.nn.relu(out2 * a_w * a_h + x)
    return jnp.transpose(out, (0, 3, 1, 2))


# ----------------------------------- main -------------------------------------
if __name__ == "__main__":
    key = jax.random.PRNGKey(0)
    k_x, k_p = jax.random.split(key)

    # BasicBlock(CONV, inplanes=4, planes=4, stride=1): default path
    B, C, H, W = 2, 4, 16, 16
    x = jax.random.normal(k_x, (B, C, H, W), jnp.float32)           # NCHW like PyTorch
    params = init_params(k_p, inplanes=C, planes=C)

    out = basic_block_forward(x, params)
    jax.block_until_ready(out)
    assert out.shape == (B, C, H, W)

    ref = reference_forward(x, params)
    err = float(jnp.max(jnp.abs(out - ref)))
    assert jnp.allclose(out, ref, rtol=5e-2, atol=5e-2), f"max abs err {err}"
    print("KERNEL_OK")
</pallas_src>

<mosaic_0001>
module attributes {stable_mosaic.version = 11 : i64} {
  func.func @_basic_block_kernel(%arg0: memref<4x512xf32, #tpu.memory_space<vmem>>, %arg1: memref<9x512xf32, #tpu.memory_space<vmem>>, %arg2: memref<9x4x4xf32, #tpu.memory_space<vmem>>, %arg3: memref<4x1xf32, #tpu.memory_space<vmem>>, %arg4: memref<9x4x4xf32, #tpu.memory_space<vmem>>, %arg5: memref<4x1xf32, #tpu.memory_space<vmem>>, %arg6: memref<8x4xf32, #tpu.memory_space<vmem>>, %arg7: memref<8x1xf32, #tpu.memory_space<vmem>>, %arg8: memref<4x8xf32, #tpu.memory_space<vmem>>, %arg9: memref<4x1xf32, #tpu.memory_space<vmem>>, %arg10: memref<4x8xf32, #tpu.memory_space<vmem>>, %arg11: memref<4x1xf32, #tpu.memory_space<vmem>>, %arg12: memref<512x32xf32, #tpu.memory_space<vmem>>, %arg13: memref<512x32xf32, #tpu.memory_space<vmem>>, %arg14: memref<32x512xf32, #tpu.memory_space<vmem>>, %arg15: memref<32x512xf32, #tpu.memory_space<vmem>>, %arg16: memref<4x512xf32, #tpu.memory_space<vmem>>, %arg17: memref<4x768xf32, #tpu.memory_space<vmem>>) attributes {dimension_semantics = [], scalar_prefetch = 0 : i64, scratch_operands = 1 : i64, tpu.core_type = #tpu.core_type<tc>} {
    %c0 = arith.constant 0 : index
    %c0_0 = arith.constant 0 : index
    %0 = vector.load %arg0[%c0, %c0_0] : memref<4x512xf32, #tpu.memory_space<vmem>>, vector<4x512xf32>
    %c0_1 = arith.constant 0 : index
    %c0_2 = arith.constant 0 : index
    %1 = vector.load %arg1[%c0_1, %c0_2] : memref<9x512xf32, #tpu.memory_space<vmem>>, vector<9x512xf32>
    %cst = arith.constant 0.000000e+00 : f32
    %2 = vector.broadcast %cst : f32 to vector<4x768xf32>
    %c0_3 = arith.constant 0 : index
    %c0_4 = arith.constant 0 : index
    %3 = vector.load %arg17[%c0_3, %c0_4] : memref<4x768xf32, #tpu.memory_space<vmem>>, vector<4x768xf32>
    tpu.vector_store %arg17[%c0_3, %c0_4], %2 {strides = array<i32>} : memref<4x768xf32, #tpu.memory_space<vmem>>, vector<4x768xf32>,
    %c0_5 = arith.constant 0 : index
    %c128 = arith.constant 128 : index
    %4 = vector.load %arg17[%c0_5, %c128] : memref<4x768xf32, #tpu.memory_space<vmem>>, vector<4x512xf32>
    tpu.vector_store %arg17[%c0_5, %c128], %0 {strides = array<i32>} : memref<4x768xf32, #tpu.memory_space<vmem>>, vector<4x512xf32>,
    %c0_6 = arith.constant 0 : index
    %c111 = arith.constant 111 : index
    %5 = vector.load %arg17[%c0_6, %c111] : memref<4x768xf32, #tpu.memory_space<vmem>>, vector<4x512xf32>
    %6 = vector.extract_strided_slice %1 {offsets = [0, 0], sizes = [1, 512], strides = [1, 1]} : vector<9x512xf32> to vector<1x512xf32>
    %7 = vector.broadcast %6 : vector<1x512xf32> to vector<4x512xf32>
    %8 = arith.mulf %5, %7 : vector<4x512xf32>
    %c0_7 = arith.constant 0 : index
    %c0_8 = arith.constant 0 : index
    %c0_9 = arith.constant 0 : index
    %9 = vector.load %arg2[%c0_7, %c0_8, %c0_9] : memref<9x4x4xf32, #tpu.memory_space<vmem>>, vector<1x4x4xf32>
    %10 = vector.shape_cast %9 : vector<1x4x4xf32> to vector<4x4xf32>
    %cst_10 = arith.constant dense<0.000000e+00> : vector<4x512xf32>
    %11 = tpu.matmul %10, %8, %cst_10 {dimension_numbers = #tpu.dot_dimension_numbers<[1], [0], [0], [1], [0, 0, 1, 1], [], []>} : vector<4x4xf32>, vector<4x512xf32>, vector<4x512xf32> -> vector<4x512xf32>
    %c0_11 = arith.constant 0 : index
    %c112 = arith.constant 112 : index
    %12 = vector.load %arg17[%c0_11, %c112] : memref<4x768xf32, #tpu.memory_space<vmem>>, vector<4x512xf32>
    %13 = vector.extract_strided_slice %1 {offsets = [1, 0], sizes = [1, 512], strides = [1, 1]} : vector<9x512xf32> to vector<1x512xf32>
    %14 = vector.broadcast %13 : vector<1x512xf32> to vector<4x512xf32>
    %15 = arith.mulf %12, %14 : vector<4x512xf32>
    %c1 = arith.constant 1 : index
    %c0_12 = arith.constant 0 : index
    %c0_13 = arith.constant 0 : index
    %16 = vector.load %arg2[%c1, %c0_12, %c0_13] : memref<9x4x4xf32, #tpu.memory_space<vmem>>, vector<1x4x4xf32>
    %17 = vector.shape_cast %16 : vector<1x4x4xf32> to vector<4x4xf32>
    %cst_14 = arith.constant dense<0.000000e+00> : vector<4x512xf32>
    %18 = tpu.matmul %17, %15, %cst_14 {dimension_numbers = #tpu.dot_dimension_numbers<[1], [0], [0], [1], [0, 0, 1, 1], [], []>} : vector<4x4xf32>, vector<4x512xf32>, vector<4x512xf32> -> vector<4x512xf32>
    %19 = arith.addf %11, %18 : vector<4x512xf32>
    %c0_15 = arith.constant 0 : index
    %c113 = arith.constant 113 : index
    %20 = vector.load %arg17[%c0_15, %c113] : memref<4x768xf32, #tpu.memory_space<vmem>>, vector<4x512xf32>
    %21 = vector.extract_strided_slice %1 {offsets = [2, 0], sizes = [1, 512], strides = [1, 1]} : vector<9x512xf32> to vector<1x512xf32>
    %22 = vector.broadcast %21 : vector<1x512xf32> to vector<4x512xf32>
    %23 = arith.mulf %20, %22 : vector<4x512xf32>
    %c2 = arith.constant 2 : index
    %c0_16 = arith.constant 0 : index
    %c0_17 = arith.constant 0 : index
    %24 = vector.load %arg2[%c2, %c0_16, %c0_17] : memref<9x4x4xf32, #tpu.memory_space<vmem>>, vector<1x4x4xf32>
    %25 = vector.shape_cast %24 : vector<1x4x4xf32> to vector<4x4xf32>
    %cst_18 = arith.constant dense<0.000000e+00> : vector<4x512xf32>
    %26 = tpu.matmul %25, %23, %cst_18 {dimension_numbers = #tpu.dot_dimension_numbers<[1], [0], [0], [1], [0, 0, 1, 1], [], []>} : vector<4x4xf32>, vector<4x512xf32>, vector<4x512xf32> -> vector<4x512xf32>
    %27 = arith.addf %19, %26 : vector<4x512xf32>
    %c0_19 = arith.constant 0 : index
    %c127 = arith.constant 127 : index
    %28 = vector.load %arg17[%c0_19, %c127] : memref<4x768xf32, #tpu.memory_space<vmem>>, vector<4x512xf32>
    %29 = vector.extract_strided_slice %1 {offsets = [3, 0], sizes = [1, 512], strides = [1, 1]} : vector<9x512xf32> to vector<1x512xf32>
    %30 = vector.broadcast %29 : vector<1x512xf32> to vector<4x512xf32>
    %31 = arith.mulf %28, %30 : vector<4x512xf32>
    %c3 = arith.constant 3 : index
    %c0_20 = arith.constant 0 : index
    %c0_21 = arith.constant 0 : index
    %32 = vector.load %arg2[%c3, %c0_20, %c0_21] : memref<9x4x4xf32, #tpu.memory_space<vmem>>, vector<1x4x4xf32>
    %33 = vector.shape_cast %32 : vector<1x4x4xf32> to vector<4x4xf32>
    %cst_22 = arith.constant dense<0.000000e+00> : vector<4x512xf32>
    %34 = tpu.matmul %33, %31, %cst_22 {dimension_numbers = #tpu.dot_dimension_numbers<[1], [0], [0], [1], [0, 0, 1, 1], [], []>} : vector<4x4xf32>, vector<4x512xf32>, vector<4x512xf32> -> vector<4x512xf32>
    %35 = arith.addf %27, %34 : vector<4x512xf32>
    %c0_23 = arith.constant 0 : index
    %c128_24 = arith.constant 128 : index
    %36 = vector.load %arg17[%c0_23, %c128_24] : memref<4x768xf32, #tpu.memory_space<vmem>>, vector<4x512xf32>
    %37 = vector.extract_strided_slice %1 {offsets = [4, 0], sizes = [1, 512], strides = [1, 1]} : vector<9x512xf32> to vector<1x512xf32>
    %38 = vector.broadcast %37 : vector<1x512xf32> to vector<4x512xf32>
    %39 = arith.mulf %36, %38 : vector<4x512xf32>
    %c4 = arith.constant 4 : index
    %c0_25 = arith.constant 0 : index
    %c0_26 = arith.constant 0 : index
    %40 = vector.load %arg2[%c4, %c0_25, %c0_26] : memref<9x4x4xf32, #tpu.memory_space<vmem>>, vector<1x4x4xf32>
    %41 = vector.shape_cast %40 : vector<1x4x4xf32> to vector<4x4xf32>
    %cst_27 = arith.constant dense<0.000000e+00> : vector<4x512xf32>
    %42 = tpu.matmul %41, %39, %cst_27 {dimension_numbers = #tpu.dot_dimension_numbers<[1], [0], [0], [1], [0, 0, 1, 1], [], []>} : vector<4x4xf32>, vector<4x512xf32>, vector<4x512xf32> -> vector<4x512xf32>
    %43 = arith.addf %35, %42 : vector<4x512xf32>
    %c0_28 = arith.constant 0 : index
    %c129 = arith.constant 129 : index
    %44 = vector.load %arg17[%c0_28, %c129] : memref<4x768xf32, #tpu.memory_space<vmem>>, vector<4x512xf32>
    %45 = vector.extract_strided_slice %1 {offsets = [5, 0], sizes = [1, 512], strides = [1, 1]} : vector<9x512xf32> to vector<1x512xf32>
    %46 = vector.broadcast %45 : vector<1x512xf32> to vector<4x512xf32>
    %47 = arith.mulf %44, %46 : vector<4x512xf32>
    %c5 = arith.constant 5 : index
    %c0_29 = arith.constant 0 : index
    %c0_30 = arith.constant 0 : index
    %48 = vector.load %arg2[%c5, %c0_29, %c0_30] : memref<9x4x4xf32, #tpu.memory_space<vmem>>, vector<1x4x4xf32>
    %49 = vector.shape_cast %48 : vector<1x4x4xf32> to vector<4x4xf32>
    %cst_31 = arith.constant dense<0.000000e+00> : vector<4x512xf32>
    %50 = tpu.matmul %49, %47, %cst_31 {dimension_numbers = #tpu.dot_dimension_numbers<[1], [0], [0], [1], [0, 0, 1, 1], [], []>} : vector<4x4xf32>, vector<4x512xf32>, vector<4x512xf32> -> vector<4x512xf32>
    %51 = arith.addf %43, %50 : vector<4x512xf32>
    %c0_32 = arith.constant 0 : index
    %c143 = arith.constant 143 : index
    %52 = vector.load %arg17[%c0_32, %c143] : memref<4x768xf32, #tpu.memory_space<vmem>>, vector<4x512xf32>
    %53 = vector.extract_strided_slice %1 {offsets = [6, 0], sizes = [1, 512], strides = [1, 1]} : vector<9x512xf32> to vector<1x512xf32>
    %54 = vector.broadcast %53 : vector<1x512xf32> to vector<4x512xf32>
    %55 = arith.mulf %52, %54 : vector<4x512xf32>
    %c6 = arith.constant 6 : index
    %c0_33 = arith.constant 0 : index
    %c0_34 = arith.constant 0 : index
    %56 = vector.load %arg2[%c6, %c0_33, %c0_34] : memref<9x4x4xf32, #tpu.memory_space<vmem>>, vector<1x4x4xf32>
    %57 = vector.shape_cast %56 : vector<1x4x4xf32> to vector<4x4xf32>
    %cst_35 = arith.constant dense<0.000000e+00> : vector<4x512xf32>
    %58 = tpu.matmul %57, %55, %cst_35 {dimension_numbers = #tpu.dot_dimension_numbers<[1], [0], [0], [1], [0, 0, 1, 1], [], []>} : vector<4x4xf32>, vector<4x512xf32>, vector<4x512xf32> -> vector<4x512xf32>
    %59 = arith.addf %51, %58 : vector<4x512xf32>
    %c0_36 = arith.constant 0 : index
    %c144 = arith.constant 144 : index
    %60 = vector.load %arg17[%c0_36, %c144] : memref<4x768xf32, #tpu.memory_space<vmem>>, vector<4x512xf32>
    %61 = vector.extract_strided_slice %1 {offsets = [7, 0], sizes = [1, 512], strides = [1, 1]} : vector<9x512xf32> to vector<1x512xf32>
    %62 = vector.broadcast %61 : vector<1x512xf32> to vector<4x512xf32>
    %63 = arith.mulf %60, %62 : vector<4x512xf32>
    %c7 = arith.constant 7 : index
    %c0_37 = arith.constant 0 : index
    %c0_38 = arith.constant 0 : index
    %64 = vector.load %arg2[%c7, %c0_37, %c0_38] : memref<9x4x4xf32, #tpu.memory_space<vmem>>, vector<1x4x4xf32>
    %65 = vector.shape_cast %64 : vector<1x4x4xf32> to vector<4x4xf32>
    %cst_39 = arith.constant dense<0.000000e+00> : vector<4x512xf32>
    %66 = tpu.matmul %65, %63, %cst_39 {dimension_numbers = #tpu.dot_dimension_numbers<[1], [0], [0], [1], [0, 0, 1, 1], [], []>} : vector<4x4xf32>, vector<4x512xf32>, vector<4x512xf32> -> vector<4x512xf32>
    %67 = arith.addf %59, %66 : vector<4x512xf32>
    %c0_40 = arith.constant 0 : index
    %c145 = arith.constant 145 : index
    %68 = vector.load %arg17[%c0_40, %c145] : memref<4x768xf32, #tpu.memory_space<vmem>>, vector<4x512xf32>
    %69 = vector.extract_strided_slice %1 {offsets = [8, 0], sizes = [1, 512], strides = [1, 1]} : vector<9x512xf32> to vector<1x512xf32>
    %70 = vector.broadcast %69 : vector<1x512xf32> to vector<4x512xf32>
    %71 = arith.mulf %68, %70 : vector<4x512xf32>
    %c8 = arith.constant 8 : index
    %c0_41 = arith.constant 0 : index
    %c0_42 = arith.constant 0 : index
    %72 = vector.load %arg2[%c8, %c0_41, %c0_42] : memref<9x4x4xf32, #tpu.memory_space<vmem>>, vector<1x4x4xf32>
    %73 = vector.shape_cast %72 : vector<1x4x4xf32> to vector<4x4xf32>
    %cst_43 = arith.constant dense<0.000000e+00> : vector<4x512xf32>
    %74 = tpu.matmul %73, %71, %cst_43 {dimension_numbers = #tpu.dot_dimension_numbers<[1], [0], [0], [1], [0, 0, 1, 1], [], []>} : vector<4x4xf32>, vector<4x512xf32>, vector<4x512xf32> -> vector<4x512xf32>
    %75 = arith.addf %67, %74 : vector<4x512xf32>
    %c0_44 = arith.constant 0 : index
    %c0_45 = arith.constant 0 : index
    %76 = vector.load %arg3[%c0_44, %c0_45] : memref<4x1xf32, #tpu.memory_space<vmem>>, vector<4x1xf32>
    %77 = vector.broadcast %76 : vector<4x1xf32> to vector<4x512xf32>
    %78 = arith.addf %75, %77 : vector<4x512xf32>
    %cst_46 = arith.constant 0.000000e+00 : f32
    %79 = vector.broadcast %cst_46 : f32 to vector<4x512xf32>
    %80 = arith.maximumf %78, %79 : vector<4x512xf32>
    %c0_47 = arith.constant 0 : index
    %c128_48 = arith.constant 128 : index
    %81 = vector.load %arg17[%c0_47, %c128_48] : memref<4x768xf32, #tpu.memory_space<vmem>>, vector<4x512xf32>
    tpu.vector_store %arg17[%c0_47, %c128_48], %80 {strides = array<i32>} : memref<4x768xf32, #tpu.memory_space<vmem>>, vector<4x512xf32>,
    %c0_49 = arith.constant 0 : index
    %c111_50 = arith.constant 111 : index
    %82 = vector.load %arg17[%c0_49, %c111_50] : memref<4x768xf32, #tpu.memory_space<vmem>>, vector<4x512xf32>
    %83 = vector.extract_strided_slice %1 {offsets = [0, 0], sizes = [1, 512], strides = [1, 1]} : vector<9x512xf32> to vector<1x512xf32>
    %84 = vector.broadcast %83 : vector<1x512xf32> to vector<4x512xf32>
    %85 = arith.mulf %82, %84 : vector<4x512xf32>
    %c0_51 = arith.constant 0 : index
    %c0_52 = arith.constant 0 : index
    %c0_53 = arith.constant 0 : index
    %86 = vector.load %arg4[%c0_51, %c0_52, %c0_53] : memref<9x4x4xf32, #tpu.memory_space<vmem>>, vector<1x4x4xf32>
    %87 = vector.shape_cast %86 : vector<1x4x4xf32> to vector<4x4xf32>
    %cst_54 = arith.constant dense<0.000000e+00> : vector<4x512xf32>
    %88 = tpu.matmul %87, %85, %cst_54 {dimension_numbers = #tpu.dot_dimension_numbers<[1], [0], [0], [1], [0, 0, 1, 1], [], []>} : vector<4x4xf32>, vector<4x512xf32>, vector<4x512xf32> -> vector<4x512xf32>
    %c0_55 = arith.constant 0 : index
    %c112_56 = arith.constant 112 : index
    %89 = vector.load %arg17[%c0_55, %c112_56] : memref<4x768xf32, #tpu.memory_space<vmem>>, vector<4x512xf32>
    %90 = vector.extract_strided_slice %1 {offsets = [1, 0], sizes = [1, 512], strides = [1, 1]} : vector<9x512xf32> to vector<1x512xf32>
    %91 = vector.broadcast %90 : vector<1x512xf32> to vector<4x512xf32>
    %92 = arith.mulf %89, %91 : vector<4x512xf32>
    %c1_57 = arith.constant 1 : index
    %c0_58 = arith.constant 0 : index
    %c0_59 = arith.constant 0 : index
    %93 = vector.load %arg4[%c1_57, %c0_58, %c0_59] : memref<9x4x4xf32, #tpu.memory_space<vmem>>, vector<1x4x4xf32>
    %94 = vector.shape_cast %93 : vector<1x4x4xf32> to vector<4x4xf32>
    %cst_60 = arith.constant dense<0.000000e+00> : vector<4x512xf32>
    %95 = tpu.matmul %94, %92, %cst_60 {dimension_numbers = #tpu.dot_dimension_numbers<[1], [0], [0], [1], [0, 0, 1, 1], [], []>} : vector<4x4xf32>, vector<4x512xf32>, vector<4x512xf32> -> vector<4x512xf32>
    %96 = arith.addf %88, %95 : vector<4x512xf32>
    %c0_61 = arith.constant 0 : index
    %c113_62 = arith.constant 113 : index
    %97 = vector.load %arg17[%c0_61, %c113_62] : memref<4x768xf32, #tpu.memory_space<vmem>>, vector<4x512xf32>
    %98 = vector.extract_strided_slice %1 {offsets = [2, 0], sizes = [1, 512], strides = [1, 1]} : vector<9x512xf32> to vector<1x512xf32>
    %99 = vector.broadcast %98 : vector<1x512xf32> to vector<4x512xf32>
    %100 = arith.mulf %97, %99 : vector<4x512xf32>
    %c2_63 = arith.constant 2 : index
    %c0_64 = arith.constant 0 : index
    %c0_65 = arith.constant 0 : index
    %101 = vector.load %arg4[%c2_63, %c0_64, %c0_65] : memref<9x4x4xf32, #tpu.memory_space<vmem>>, vector<1x4x4xf32>
    %102 = vector.shape_cast %101 : vector<1x4x4xf32> to vector<4x4xf32>
    %cst_66 = arith.constant dense<0.000000e+00> : vector<4x512xf32>
    %103 = tpu.matmul %102, %100, %cst_66 {dimension_numbers = #tpu.dot_dimension_numbers<[1], [0], [0], [1], [0, 0, 1, 1], [], []>} : vector<4x4xf32>, vector<4x512xf32>, vector<4x512xf32> -> vector<4x512xf32>
    %104 = arith.addf %96, %103 : vector<4x512xf32>
    %c0_67 = arith.constant 0 : index
    %c127_68 = arith.constant 127 : index
    %105 = vector.load %arg17[%c0_67, %c127_68] : memref<4x768xf32, #tpu.memory_space<vmem>>, vector<4x512xf32>
    %106 = vector.extract_strided_slice %1 {offsets = [3, 0], sizes = [1, 512], strides = [1, 1]} : vector<9x512xf32> to vector<1x512xf32>
    %107 = vector.broadcast %106 : vector<1x512xf32> to vector<4x512xf32>
    %108 = arith.mulf %105, %107 : vector<4x512xf32>
    %c3_69 = arith.constant 3 : index
    %c0_70 = arith.constant 0 : index
    %c0_71 = arith.constant 0 : index
    %109 = vector.load %arg4[%c3_69, %c0_70, %c0_71] : memref<9x4x4xf32, #tpu.memory_space<vmem>>, vector<1x4x4xf32>
    %110 = vector.shape_cast %109 : vector<1x4x4xf32> to vector<4x4xf32>
    %cst_72 = arith.constant dense<0.000000e+00> : vector<4x512xf32>
    %111 = tpu.matmul %110, %108, %cst_72 {dimension_numbers = #tpu.dot_dimension_numbers<[1], [0], [0], [1], [0, 0, 1, 1], [], []>} : vector<4x4xf32>, vector<4x512xf32>, vector<4x512xf32> -> vector<4x512xf32>
    %112 = arith.addf %104, %111 : vector<4x512xf32>
    %c0_73 = arith.constant 0 : index
    %c128_74 = arith.constant 128 : index
    %113 = vector.load %arg17[%c0_73, %c128_74] : memref<4x768xf32, #tpu.memory_space<vmem>>, vector<4x512xf32>
    %114 = vector.extract_strided_slice %1 {offsets = [4, 0], sizes = [1, 512], strides = [1, 1]} : vector<9x512xf32> to vector<1x512xf32>
    %115 = vector.broadcast %114 : vector<1x512xf32> to vector<4x512xf32>
    %116 = arith.mulf %113, %115 : vector<4x512xf32>
    %c4_75 = arith.constant 4 : index
    %c0_76 = arith.constant 0 : index
    %c0_77 = arith.constant 0 : index
    %117 = vector.load %arg4[%c4_75, %c0_76, %c0_77] : memref<9x4x4xf32, #tpu.memory_space<vmem>>, vector<1x4x4xf32>
    %118 = vector.shape_cast %117 : vector<1x4x4xf32> to vector<4x4xf32>
    %cst_78 = arith.constant dense<0.000000e+00> : vector<4x512xf32>
    %119 = tpu.matmul %118, %116, %cst_78 {dimension_numbers = #tpu.dot_dimension_numbers<[1], [0], [0], [1], [0, 0, 1, 1], [], []>} : vector<4x4xf32>, vector<4x512xf32>, vector<4x512xf32> -> vector<4x512xf32>
    %120 = arith.addf %112, %119 : vector<4x512xf32>
    %c0_79 = arith.constant 0 : index
    %c129_80 = arith.constant 129 : index
    %121 = vector.load %arg17[%c0_79, %c129_80] : memref<4x768xf32, #tpu.memory_space<vmem>>, vector<4x512xf32>
    %122 = vector.extract_strided_slice %1 {offsets = [5, 0], sizes = [1, 512], strides = [1, 1]} : vector<9x512xf32> to vector<1x512xf32>
    %123 = vector.broadcast %122 : vector<1x512xf32> to vector<4x512xf32>
    %124 = arith.mulf %121, %123 : vector<4x512xf32>
    %c5_81 = arith.constant 5 : index
    %c0_82 = arith.constant 0 : index
    %c0_83 = arith.constant 0 : index
    %125 = vector.load %arg4[%c5_81, %c0_82, %c0_83] : memref<9x4x4xf32, #tpu.memory_space<vmem>>, vector<1x4x4xf32>
    %126 = vector.shape_cast %125 : vector<1x4x4xf32> to vector<4x4xf32>
    %cst_84 = arith.constant dense<0.000000e+00> : vector<4x512xf32>
    %127 = tpu.matmul %126, %124, %cst_84 {dimension_numbers = #tpu.dot_dimension_numbers<[1], [0], [0], [1], [0, 0, 1, 1], [], []>} : vector<4x4xf32>, vector<4x512xf32>, vector<4x512xf32> -> vector<4x512xf32>
    %128 = arith.addf %120, %127 : vector<4x512xf32>
    %c0_85 = arith.constant 0 : index
    %c143_86 = arith.constant 143 : index
    %129 = vector.load %arg17[%c0_85, %c143_86] : memref<4x768xf32, #tpu.memory_space<vmem>>, vector<4x512xf32>
    %130 = vector.extract_strided_slice %1 {offsets = [6, 0], sizes = [1, 512], strides = [1, 1]} : vector<9x512xf32> to vector<1x512xf32>
    %131 = vector.broadcast %130 : vector<1x512xf32> to vector<4x512xf32>
    %132 = arith.mulf %129, %131 : vector<4x512xf32>
    %c6_87 = arith.constant 6 : index
    %c0_88 = arith.constant 0 : index
    %c0_89 = arith.constant 0 : index
    %133 = vector.load %arg4[%c6_87, %c0_88, %c0_89] : memref<9x4x4xf32, #tpu.memory_space<vmem>>, vector<1x4x4xf32>
    %134 = vector.shape_cast %133 : vector<1x4x4xf32> to vector<4x4xf32>
    %cst_90 = arith.constant dense<0.000000e+00> : vector<4x512xf32>
    %135 = tpu.matmul %134, %132, %cst_90 {dimension_numbers = #tpu.dot_dimension_numbers<[1], [0], [0], [1], [0, 0, 1, 1], [], []>} : vector<4x4xf32>, vector<4x512xf32>, vector<4x512xf32> -> vector<4x512xf32>
    %136 = arith.addf %128, %135 : vector<4x512xf32>
    %c0_91 = arith.constant 0 : index
    %c144_92 = arith.constant 144 : index
    %137 = vector.load %arg17[%c0_91, %c144_92] : memref<4x768xf32, #tpu.memory_space<vmem>>, vector<4x512xf32>
    %138 = vector.extract_strided_slice %1 {offsets = [7, 0], sizes = [1, 512], strides = [1, 1]} : vector<9x512xf32> to vector<1x512xf32>
    %139 = vector.broadcast %138 : vector<1x512xf32> to vector<4x512xf32>
    %140 = arith.mulf %137, %139 : vector<4x512xf32>
    %c7_93 = arith.constant 7 : index
    %c0_94 = arith.constant 0 : index
    %c0_95 = arith.constant 0 : index
    %141 = vector.load %arg4[%c7_93, %c0_94, %c0_95] : memref<9x4x4xf32, #tpu.memory_space<vmem>>, vector<1x4x4xf32>
    %142 = vector.shape_cast %141 : vector<1x4x4xf32> to vector<4x4xf32>
    %cst_96 = arith.constant dense<0.000000e+00> : vector<4x512xf32>
    %143 = tpu.matmul %142, %140, %cst_96 {dimension_numbers = #tpu.dot_dimension_numbers<[1], [0], [0], [1], [0, 0, 1, 1], [], []>} : vector<4x4xf32>, vector<4x512xf32>, vector<4x512xf32> -> vector<4x512xf32>
    %144 = arith.addf %136, %143 : vector<4x512xf32>
    %c0_97 = arith.constant 0 : index
    %c145_98 = arith.constant 145 : index
    %145 = vector.load %arg17[%c0_97, %c145_98] : memref<4x768xf32, #tpu.memory_space<vmem>>, vector<4x512xf32>
    %146 = vector.extract_strided_slice %1 {offsets = [8, 0], sizes = [1, 512], strides = [1, 1]} : vector<9x512xf32> to vector<1x512xf32>
    %147 = vector.broadcast %146 : vector<1x512xf32> to vector<4x512xf32>
    %148 = arith.mulf %145, %147 : vector<4x512xf32>
    %c8_99 = arith.constant 8 : index
    %c0_100 = arith.constant 0 : index
    %c0_101 = arith.constant 0 : index
    %149 = vector.load %arg4[%c8_99, %c0_100, %c0_101] : memref<9x4x4xf32, #tpu.memory_space<vmem>>, vector<1x4x4xf32>
    %150 = vector.shape_cast %149 : vector<1x4x4xf32> to vector<4x4xf32>
    %cst_102 = arith.constant dense<0.000000e+00> : vector<4x512xf32>
    %151 = tpu.matmul %150, %148, %cst_102 {dimension_numbers = #tpu.dot_dimension_numbers<[1], [0], [0], [1], [0, 0, 1, 1], [], []>} : vector<4x4xf32>, vector<4x512xf32>, vector<4x512xf32> -> vector<4x512xf32>
    %152 = arith.addf %144, %151 : vector<4x512xf32>
    %c0_103 = arith.constant 0 : index
    %c0_104 = arith.constant 0 : index
    %153 = vector.load %arg5[%c0_103, %c0_104] : memref<4x1xf32, #tpu.memory_space<vmem>>, vector<4x1xf32>
    %154 = vector.broadcast %153 : vector<4x1xf32> to vector<4x512xf32>
    %155 = arith.addf %152, %154 : vector<4x512xf32>
    %cst_105 = arith.constant 0.000000e+00 : f32
    %156 = vector.broadcast %cst_105 : f32 to vector<4x512xf32>
    %157 = arith.maximumf %155, %156 : vector<4x512xf32>
    %c0_106 = arith.constant 0 : index
    %c0_107 = arith.constant 0 : index
    %158 = vector.load %arg12[%c0_106, %c0_107] : memref<512x32xf32, #tpu.memory_space<vmem>>, vector<512x32xf32>
    %cst_108 = arith.constant dense<0.000000e+00> : vector<4x32xf32>
    %159 = tpu.matmul %157, %158, %cst_108 {dimension_numbers = #tpu.dot_dimension_numbers<[1], [0], [0], [1], [0, 0, 1, 1], [], []>} : vector<4x512xf32>, vector<512x32xf32>, vector<4x32xf32> -> vector<4x32xf32>
    %c0_109 = arith.constant 0 : index
    %c0_110 = arith.constant 0 : index
    %160 = vector.load %arg13[%c0_109, %c0_110] : memref<512x32xf32, #tpu.memory_space<vmem>>, vector<512x32xf32>
    %cst_111 = arith.constant dense<0.000000e+00> : vector<4x32xf32>
    %161 = tpu.matmul %157, %160, %cst_111 {dimension_numbers = #tpu.dot_dimension_numbers<[1], [0], [0], [1], [0, 0, 1, 1], [], []>} : vector<4x512xf32>, vector<512x32xf32>, vector<4x32xf32> -> vector<4x32xf32>
    %c0_112 = arith.constant 0 : index
    %c0_113 = arith.constant 0 : index
    %162 = vector.load %arg6[%c0_112, %c0_113] : memref<8x4xf32, #tpu.memory_space<vmem>>, vector<8x4xf32>
    %cst_114 = arith.constant dense<0.000000e+00> : vector<8x32xf32>
    %163 = tpu.matmul %162, %159, %cst_114 {dimension_numbers = #tpu.dot_dimension_numbers<[1], [0], [0], [1], [0, 0, 1, 1], [], []>} : vector<8x4xf32>, vector<4x32xf32>, vector<8x32xf32> -> vector<8x32xf32>
    %c0_115 = arith.constant 0 : index
    %c0_116 = arith.constant 0 : index
    %164 = vector.load %arg7[%c0_115, %c0_116] : memref<8x1xf32, #tpu.memory_space<vmem>>, vector<8x1xf32>
    %165 = vector.broadcast %164 : vector<8x1xf32> to vector<8x32xf32>
    %166 = arith.addf %163, %165 : vector<8x32xf32>
    %cst_117 = arith.constant 3.000000e+00 : f32
    %167 = vector.broadcast %cst_117 : f32 to vector<8x32xf32>
    %168 = arith.addf %166, %167 : vector<8x32xf32>
    %cst_118 = arith.constant 0.000000e+00 : f32
    %cst_119 = arith.constant 6.000000e+00 : f32
    %169 = vector.broadcast %cst_118 : f32 to vector<8x32xf32>
    %170 = arith.maximumf %169, %168 : vector<8x32xf32>
    %171 = vector.broadcast %cst_119 : f32 to vector<8x32xf32>
    %172 = arith.minimumf %171, %170 : vector<8x32xf32>
    %173 = arith.mulf %166, %172 : vector<8x32xf32>
    %cst_120 = arith.constant 0.166666672 : f32
    %174 = vector.broadcast %cst_120 : f32 to vector<8x32xf32>
    %175 = arith.mulf %173, %174 : vector<8x32xf32>
    %c0_121 = arith.constant 0 : index
    %c0_122 = arith.constant 0 : index
    %176 = vector.load %arg6[%c0_121, %c0_122] : memref<8x4xf32, #tpu.memory_space<vmem>>, vector<8x4xf32>
    %cst_123 = arith.constant dense<0.000000e+00> : vector<8x32xf32>
    %177 = tpu.matmul %176, %161, %cst_123 {dimension_numbers = #tpu.dot_dimension_numbers<[1], [0], [0], [1], [0, 0, 1, 1], [], []>} : vector<8x4xf32>, vector<4x32xf32>, vector<8x32xf32> -> vector<8x32xf32>
    %c0_124 = arith.constant 0 : index
    %c0_125 = arith.constant 0 : index
    %178 = vector.load %arg7[%c0_124, %c0_125] : memref<8x1xf32, #tpu.memory_space<vmem>>, vector<8x1xf32>
    %179 = vector.broadcast %178 : vector<8x1xf32> to vector<8x32xf32>
    %180 = arith.addf %177, %179 : vector<8x32xf32>
    %cst_126 = arith.constant 3.000000e+00 : f32
    %181 = vector.broadcast %cst_126 : f32 to vector<8x32xf32>
    %182 = arith.addf %180, %181 : vector<8x32xf32>
    %cst_127 = arith.constant 0.000000e+00 : f32
    %cst_128 = arith.constant 6.000000e+00 : f32
    %183 = vector.broadcast %cst_127 : f32 to vector<8x32xf32>
    %184 = arith.maximumf %183, %182 : vector<8x32xf32>
    %185 = vector.broadcast %cst_128 : f32 to vector<8x32xf32>
    %186 = arith.minimumf %185, %184 : vector<8x32xf32>
    %187 = arith.mulf %180, %186 : vector<8x32xf32>
    %cst_129 = arith.constant 0.166666672 : f32
    %188 = vector.broadcast %cst_129 : f32 to vector<8x32xf32>
    %189 = arith.mulf %187, %188 : vector<8x32xf32>
    %c0_130 = arith.constant 0 : index
    %c0_131 = arith.constant 0 : index
    %190 = vector.load %arg8[%c0_130, %c0_131] : memref<4x8xf32, #tpu.memory_space<vmem>>, vector<4x8xf32>
    %cst_132 = arith.constant dense<0.000000e+00> : vector<4x32xf32>
    %191 = tpu.matmul %190, %175, %cst_132 {dimension_numbers = #tpu.dot_dimension_numbers<[1], [0], [0], [1], [0, 0, 1, 1], [], []>} : vector<4x8xf32>, vector<8x32xf32>, vector<4x32xf32> -> vector<4x32xf32>
    %c0_133 = arith.constant 0 : index
    %c0_134 = arith.constant 0 : index
    %192 = vector.load %arg9[%c0_133, %c0_134] : memref<4x1xf32, #tpu.memory_space<vmem>>, vector<4x1xf32>
    %193 = vector.broadcast %192 : vector<4x1xf32> to vector<4x32xf32>
    %194 = arith.addf %191, %193 : vector<4x32xf32>
    %cst_135 = arith.constant 0.000000e+00 : f32
    %195 = vector.broadcast %cst_135 : f32 to vector<4x32xf32>
    %196 = arith.subf %195, %194 : vector<4x32xf32>
    %197 = math.exp %196 : vector<4x32xf32>
    %cst_136 = arith.constant 1.000000e+00 : f32
    %198 = vector.broadcast %cst_136 : f32 to vector<4x32xf32>
    %199 = arith.addf %198, %197 : vector<4x32xf32>
    %cst_137 = arith.constant 1.000000e+00 : f32
    %200 = vector.broadcast %cst_137 : f32 to vector<4x32xf32>
    %201 = arith.divf %200, %199 : vector<4x32xf32>
    %c0_138 = arith.constant 0 : index
    %c0_139 = arith.constant 0 : index
    %202 = vector.load %arg10[%c0_138, %c0_139] : memref<4x8xf32, #tpu.memory_space<vmem>>, vector<4x8xf32>
    %cst_140 = arith.constant dense<0.000000e+00> : vector<4x32xf32>
    %203 = tpu.matmul %202, %189, %cst_140 {dimension_numbers = #tpu.dot_dimension_numbers<[1], [0], [0], [1], [0, 0, 1, 1], [], []>} : vector<4x8xf32>, vector<8x32xf32>, vector<4x32xf32> -> vector<4x32xf32>
    %c0_141 = arith.constant 0 : index
    %c0_142 = arith.constant 0 : index
    %204 = vector.load %arg11[%c0_141, %c0_142] : memref<4x1xf32, #tpu.memory_space<vmem>>, vector<4x1xf32>
    %205 = vector.broadcast %204 : vector<4x1xf32> to vector<4x32xf32>
    %206 = arith.addf %203, %205 : vector<4x32xf32>
    %cst_143 = arith.constant 0.000000e+00 : f32
    %207 = vector.broadcast %cst_143 : f32 to vector<4x32xf32>
    %208 = arith.subf %207, %206 : vector<4x32xf32>
    %209 = math.exp %208 : vector<4x32xf32>
    %cst_144 = arith.constant 1.000000e+00 : f32
    %210 = vector.broadcast %cst_144 : f32 to vector<4x32xf32>
    %211 = arith.addf %210, %209 : vector<4x32xf32>
    %cst_145 = arith.constant 1.000000e+00 : f32
    %212 = vector.broadcast %cst_145 : f32 to vector<4x32xf32>
    %213 = arith.divf %212, %211 : vector<4x32xf32>
    %c0_146 = arith.constant 0 : index
    %c0_147 = arith.constant 0 : index
    %214 = vector.load %arg14[%c0_146, %c0_147] : memref<32x512xf32, #tpu.memory_space<vmem>>, vector<32x512xf32>
    %cst_148 = arith.constant dense<0.000000e+00> : vector<4x512xf32>
    %215 = tpu.matmul %201, %214, %cst_148 {dimension_numbers = #tpu.dot_dimension_numbers<[1], [0], [0], [1], [0, 0, 1, 1], [], []>} : vector<4x32xf32>, vector<32x512xf32>, vector<4x512xf32> -> vector<4x512xf32>
    %c0_149 = arith.constant 0 : index
    %c0_150 = arith.constant 0 : index
    %216 = vector.load %arg15[%c0_149, %c0_150] : memref<32x512xf32, #tpu.memory_space<vmem>>, vector<32x512xf32>
    %cst_151 = arith.constant dense<0.000000e+00> : vector<4x512xf32>
    %217 = tpu.matmul %213, %216, %cst_151 {dimension_numbers = #tpu.dot_dimension_numbers<[1], [0], [0], [1], [0, 0, 1, 1], [], []>} : vector<4x32xf32>, vector<32x512xf32>, vector<4x512xf32> -> vector<4x512xf32>
    %218 = arith.mulf %157, %217 : vector<4x512xf32>
    %219 = arith.mulf %218, %215 : vector<4x512xf32>
    %220 = arith.addf %219, %0 : vector<4x512xf32>
    %cst_152 = arith.constant 0.000000e+00 : f32
    %221 = vector.broadcast %cst_152 : f32 to vector<4x512xf32>
    %222 = arith.maximumf %220, %221 : vector<4x512xf32>
    %c0_153 = arith.constant 0 : index
    %c0_154 = arith.constant 0 : index
    %223 = vector.load %arg16[%c0_153, %c0_154] : memref<4x512xf32, #tpu.memory_space<vmem>>, vector<4x512xf32>
    tpu.vector_store %arg16[%c0_153, %c0_154], %222 {strides = array<i32>} : memref<4x512xf32, #tpu.memory_space<vmem>>, vector<4x512xf32>,
    return
  }
}

</mosaic_0001>

<llo_original>
// kernel: basic_block_forward.1
$region0: #{basic_block_forward.1}
  #allocation0 [shape = 'u32[]', space=smem, size = 0x4, offset = 0x4, fixed_abs, tag = 'smem constant byte address 0x4 - core index']
  #allocation1 [shape = 'u32[144,128]{1,0:T(1,128)}', space=vmem, size = 0x12000, scoped, tag = 'internal scratch']
  #allocation2 [shape = 'f32[4,768]{1,0:T(4,128)}', space=vmem, size = 0x3000, scoped, tag = 'scratch operand']
  %s0 = inlined_call_operand.vmem [shape: f32[4,512], index: 0, kind: input, shape index: {}]
  %s1 = inlined_call_operand.vmem [shape: f32[9,512], index: 1, kind: input, shape index: {}]
  %s2 = inlined_call_operand.vmem [shape: f32[9,4,4], index: 2, kind: input, shape index: {}]
  %s3 = inlined_call_operand.vmem [shape: f32[4,1], index: 3, kind: input, shape index: {}]
  %s4 = inlined_call_operand.vmem [shape: f32[9,4,4], index: 4, kind: input, shape index: {}]
  %s5 = inlined_call_operand.vmem [shape: f32[4,1], index: 5, kind: input, shape index: {}]
  %s6 = inlined_call_operand.vmem [shape: f32[8,4], index: 6, kind: input, shape index: {}]
  %s7 = inlined_call_operand.vmem [shape: f32[8,1], index: 7, kind: input, shape index: {}]
  %s8 = inlined_call_operand.vmem [shape: f32[4,8], index: 8, kind: input, shape index: {}]
  %s9 = inlined_call_operand.vmem [shape: f32[4,1], index: 9, kind: input, shape index: {}]
  %s10 = inlined_call_operand.vmem [shape: f32[4,8], index: 10, kind: input, shape index: {}]
  %s11 = inlined_call_operand.vmem [shape: f32[4,1], index: 11, kind: input, shape index: {}]
  %s12 = inlined_call_operand.vmem [shape: f32[512,32], index: 12, kind: input, shape index: {}]
  %s13 = inlined_call_operand.vmem [shape: f32[512,32], index: 13, kind: input, shape index: {}]
  %s14 = inlined_call_operand.vmem [shape: f32[32,512], index: 14, kind: input, shape index: {}]
  %s15 = inlined_call_operand.vmem [shape: f32[32,512], index: 15, kind: input, shape index: {}]
  %s16 = inlined_call_operand.vmem [shape: f32[4,512], index: 16, kind: output, shape index: {}]
  %s17 = sld [smem:[#allocation0]]
  $region74: #{basic_block_forward.1} parent=0
    _
  %s19 = ssub.s32 1, %s17
  %s20 = scalar_select 0, %s19, %s17
  // Predicated region
  $region2: #{basic_block_forward.1} parent=0 // pred_check
    _
  $region3: #{basic_block_forward.1} parent=0 // pred_check_branch
    %22 = sbr.rel (0) target = $region5
  $region4: #{basic_block_forward.1} parent=0 // pred_region
    _
  $region5: #{basic_block_forward.1} parent=0 // pred_fallthru
    _
  // Predicated region
  $region6: #{basic_block_forward.1} parent=0 // pred_check
    _
  $region7: #{basic_block_forward.1} parent=0 // pred_check_branch
    %24 = sbr.rel (0) target = $region9
  $region8: #{basic_block_forward.1} parent=0 // pred_region
    _
  $region9: #{basic_block_forward.1} parent=0 // pred_fallthru
    _
  // Predicated region
  $region10: #{basic_block_forward.1} parent=0 // pred_check
    _
  $region11: #{basic_block_forward.1} parent=0 // pred_check_branch
    %26 = sbr.rel (0) target = $region13
  $region12: #{basic_block_forward.1} parent=0 // pred_region
    _
  $region13: #{basic_block_forward.1} parent=0 // pred_fallthru
    _
  // Predicated region
  $region14: #{basic_block_forward.1} parent=0 // pred_check
    _
  $region15: #{basic_block_forward.1} parent=0 // pred_check_branch
    %28 = sbr.rel (0) target = $region17
  $region16: #{basic_block_forward.1} parent=0 // pred_region
    _
  $region17: #{basic_block_forward.1} parent=0 // pred_fallthru
    _
  // Predicated region
  $region18: #{basic_block_forward.1} parent=0 // pred_check
    _
  $region19: #{basic_block_forward.1} parent=0 // pred_check_branch
    %30 = sbr.rel (0) target = $region21
  $region20: #{basic_block_forward.1} parent=0 // pred_region
    _
  $region21: #{basic_block_forward.1} parent=0 // pred_fallthru
    _
  // Predicated region
  $region22: #{basic_block_forward.1} parent=0 // pred_check
    _
  $region23: #{basic_block_forward.1} parent=0 // pred_check_branch
    %32 = sbr.rel (0) target = $region25
  $region24: #{basic_block_forward.1} parent=0 // pred_region
    _
  $region25: #{basic_block_forward.1} parent=0 // pred_fallthru
    _
  // Predicated region
  $region26: #{basic_block_forward.1} parent=0 // pred_check
    _
  $region27: #{basic_block_forward.1} parent=0 // pred_check_branch
    %34 = sbr.rel (0) target = $region29
  $region28: #{basic_block_forward.1} parent=0 // pred_region
    _
  $region29: #{basic_block_forward.1} parent=0 // pred_fallthru
    _
  // Predicated region
  $region30: #{basic_block_forward.1} parent=0 // pred_check
    _
  $region31: #{basic_block_forward.1} parent=0 // pred_check_branch
    %36 = sbr.rel (0) target = $region33
  $region32: #{basic_block_forward.1} parent=0 // pred_region
    _
  $region33: #{basic_block_forward.1} parent=0 // pred_fallthru
    _
  // Predicated region
  $region34: #{basic_block_forward.1} parent=0 // pred_check
    _
  $region35: #{basic_block_forward.1} parent=0 // pred_check_branch
    %38 = sbr.rel (0) target = $region37
  $region36: #{basic_block_forward.1} parent=0 // pred_region
    _
  $region37: #{basic_block_forward.1} parent=0 // pred_fallthru
    _
  // Predicated region
  $region38: #{basic_block_forward.1} parent=0 // pred_check
    _
  $region39: #{basic_block_forward.1} parent=0 // pred_check_branch
    %40 = sbr.rel (0) target = $region41
  $region40: #{basic_block_forward.1} parent=0 // pred_region
    _
  $region41: #{basic_block_forward.1} parent=0 // pred_fallthru
    _
  // Predicated region
  $region42: #{basic_block_forward.1} parent=0 // pred_check
    _
  $region43: #{basic_block_forward.1} parent=0 // pred_check_branch
    %42 = sbr.rel (0) target = $region45
  $region44: #{basic_block_forward.1} parent=0 // pred_region
    _
  $region45: #{basic_block_forward.1} parent=0 // pred_fallthru
    _
  // Predicated region
  $region46: #{basic_block_forward.1} parent=0 // pred_check
    _
  $region47: #{basic_block_forward.1} parent=0 // pred_check_branch
    %44 = sbr.rel (0) target = $region49
  $region48: #{basic_block_forward.1} parent=0 // pred_region
    _
  $region49: #{basic_block_forward.1} parent=0 // pred_fallthru
    _
  // Predicated region
  $region50: #{basic_block_forward.1} parent=0 // pred_check
    _
  $region51: #{basic_block_forward.1} parent=0 // pred_check_branch
    %46 = sbr.rel (0) target = $region53
  $region52: #{basic_block_forward.1} parent=0 // pred_region
    _
  $region53: #{basic_block_forward.1} parent=0 // pred_fallthru
    _
  // Predicated region
  $region54: #{basic_block_forward.1} parent=0 // pred_check
    _
  $region55: #{basic_block_forward.1} parent=0 // pred_check_branch
    %48 = sbr.rel (0) target = $region57
  $region56: #{basic_block_forward.1} parent=0 // pred_region
    _
  $region57: #{basic_block_forward.1} parent=0 // pred_fallthru
    _
  // Predicated region
  $region58: #{basic_block_forward.1} parent=0 // pred_check
    _
  $region59: #{basic_block_forward.1} parent=0 // pred_check_branch
    %50 = sbr.rel (0) target = $region61
  $region60: #{basic_block_forward.1} parent=0 // pred_region
    _
  $region61: #{basic_block_forward.1} parent=0 // pred_fallthru
    _
  // Predicated region
  $region62: #{basic_block_forward.1} parent=0 // pred_check
    _
  $region63: #{basic_block_forward.1} parent=0 // pred_check_branch
    %52 = sbr.rel (0) target = $region65
  $region64: #{basic_block_forward.1} parent=0 // pred_region
    _
  $region65: #{basic_block_forward.1} parent=0 // pred_fallthru
    _
  %v53 = vld [vmem:[%s0] sm:$0xff]
  %v54 = vld [vmem:[%s0 + $0x8] sm:$0xff]
  %v55 = vld [vmem:[%s1] sm:$0xff]
  %v56 = vld [vmem:[%s1 + $0x8] sm:$0xff]
  %v57 = vld [vmem:[%s1 + $0x10] sm:$0xff]
  %v58 = vld [vmem:[%s1 + $0x18] sm:$0xff]
  %v59 = vld [vmem:[%s1 + $0x20] sm:$0x1]
  %v60 = vld [vmem:[%s1 + $0x28] sm:$0x1]
  %v61 = vld [vmem:[%s1 + $0x30] sm:$0x1]
  %v62 = vld [vmem:[%s1 + $0x38] sm:$0x1]
  %63 = vst [vmem:[#allocation2] sm:$0xff] 0.0
  %64 = vst [vmem:[#allocation2 + $0x8] sm:$0xff] 0.0
  %65 = vst [vmem:[#allocation2 + $0x10] sm:$0xff] 0.0
  %66 = vst [vmem:[#allocation2 + $0x4] sm:$0xff] %v53
  %67 = vst [vmem:[#allocation2 + $0xc] sm:$0xff] %v54
  %v68 = vld [vmem:[#allocation2] sm:$0xff]
  %v69 = vld [vmem:[#allocation2 + $0x8] sm:$0xff]
  %v70 = vld [vmem:[#allocation2 + $0x10] sm:$0xf]
  %v71 = vlaneseq
  %v72 = vshrl.u32 %v71, 7
  %v73 = vsub.s32 0, %v72
  %v74 = vrot.slane %v55, %v73
  %v75 = vlaneseq
  %v76 = vshrl.u32 %v75, 7
  %v77 = vsub.s32 0, %v76
  %v78 = vrot.slane %v56, %v77
  %v79 = vlaneseq
  %v80 = vshrl.u32 %v79, 7
  %v81 = vsub.s32 0, %v80
  %v82 = vrot.slane %v57, %v81
  %v83 = vlaneseq
  %v84 = vshrl.u32 %v83, 7
  %v85 = vsub.s32 0, %v84
  %v86 = vrot.slane %v58, %v85
  %v91 = vcombine.low %v74, %v78
  %v92 = vcombine.low %v82, %v86
  %93 = vrot.lane.b32.xlu0 %v91, 111
  %v94 = vpop.permute.xlu0 %93
  %95 = vrot.lane.b32.xlu0 %v92, 111
  %v96 = vpop.permute.xlu0 %95
  %v97 = vrot.slane %v94, 4
  %v98 = vrot.slane %v96, 4
  %vm99 = vcmask 908288
  %v100 = vsel %vm99, %v97, %v94
  %vm101 = vcmask 1043456
  %v102 = vsel %vm101, %v97, %v98
  %v103 = vsel %vm99, %v102, %v96
  %v107 = vmul.f32 %v68, %v100
  %v108 = vmul.f32 %v69, %v103
  %v109 = vmul.f32 %v70, %v98
  %v110 = vld [vmem:[%s2] sm:$0xf]
  %v111 = vlaneseq
  %v112 = vshrl.u32 %v111, 7
  %v113 = vsub.s32 1, %v112
  %v114 = vrot.slane %v55, %v113
  %v115 = vlaneseq
  %v116 = vshrl.u32 %v115, 7
  %v117 = vsub.s32 1, %v116
  %v118 = vrot.slane %v56, %v117
  %v119 = vlaneseq
  %v120 = vshrl.u32 %v119, 7
  %v121 = vsub.s32 1, %v120
  %v122 = vrot.slane %v57, %v121
  %v123 = vlaneseq
  %v124 = vshrl.u32 %v123, 7
  %v125 = vsub.s32 1, %v124
  %v126 = vrot.slane %v58, %v125
  %v131 = vcombine.low %v114, %v118
  %v132 = vcombine.low %v122, %v126
  %133 = vrot.lane.b32.xlu0 %v131, 112
  %v134 = vpop.permute.xlu0 %133
  %135 = vrot.lane.b32.xlu0 %v132, 112
  %v136 = vpop.permute.xlu0 %135
  %v137 = vrot.slane %v134, 4
  %v138 = vrot.slane %v136, 4
  %vm139 = vcmask 916480
  %v140 = vsel %vm139, %v137, %v134
  %v141 = vsel %vm101, %v137, %v138
  %v142 = vsel %vm139, %v141, %v136
  %v146 = vmul.f32 %v68, %v140
  %v147 = vmul.f32 %v69, %v142
  %v148 = vmul.f32 %v70, %v138
  %s149 = scalar_lea.vmem %s2, 4
  %v150 = vld [vmem:[%s149] sm:$0xf]
  %v154 = vcombine.high %v146, %v146
  %v155 = vcombine.high %v147, %v147
  %156 = vrot.lane.b32.xlu0 %v146, 16
  %v157 = vpop.permute.xlu0 %156
  %158 = vrot.lane.b32.xlu0 %v154, 16
  %v159 = vpop.permute.xlu0 %158
  %160 = vrot.lane.b32.xlu0 %v147, 16
  %v161 = vpop.permute.xlu0 %160
  %162 = vrot.lane.b32.xlu0 %v155, 16
  %v163 = vpop.permute.xlu0 %162
  %164 = vrot.lane.b32.xlu0 %v148, 16
  %v165 = vpop.permute.xlu0 %164
  %vm166 = vcmask 130048
  %v167 = vsel %vm166, %v157, %v159
  %v168 = vsel %vm166, %v159, %v161
  %v169 = vsel %vm166, %v161, %v163
  %v170 = vsel %vm166, %v163, %v165
  %vm171 = vcmask 31744
  %v173 = vsel %vm171, %v150, 0
  %v175 = vsel %vm101, %v167, 0
  %v177 = vsel %vm101, %v168, 0
  %v179 = vsel %vm101, %v169, 0
  %v181 = vsel %vm101, %v170, 0
  %183 = vmatprep.subr.mxu0 %v177
  %184 = vmatpush1.msra.mxu0 %v175
  %185 = vmatprep.subr.mxu0 0.0
  %186 = vmatpush1.msra.mxu0 0.0
  %187 = vmatprep.subr.mxu0 0.0
  %188 = vmatpush1.msra.mxu0 0.0
  %189 = vmatprep.subr.mxu0 0.0
  %190 = vmatpush1.msra.mxu0 0.0
  %191 = vmatprep.subr.mxu0 0.0
  %192 = vmatpush1.msra.mxu0 0.0
  %193 = vmatprep.subr.mxu0 0.0
  %194 = vmatpush1.msra.mxu0 0.0
  %195 = vmatprep.subr.mxu0 0.0
  %196 = vmatpush1.msra.mxu0 0.0
  %197 = vmatprep.subr.mxu0 0.0
  %198 = vmatpush1.msra.mxu0 0.0
  %199 = vmatprep.subr.mxu0 0.0
  %200 = vmatpush1.msra.mxu0 0.0
  %201 = vmatprep.subr.mxu0 0.0
  %202 = vmatpush1.msra.mxu0 0.0
  %203 = vmatprep.subr.mxu0 0.0
  %204 = vmatpush1.msra.mxu0 0.0
  %205 = vmatprep.subr.mxu0 0.0
  %206 = vmatpush1.msra.mxu0 0.0
  %207 = vmatprep.subr.mxu0 0.0
  %208 = vmatpush1.msra.mxu0 0.0
  %209 = vmatprep.subr.mxu0 0.0
  %210 = vmatpush1.msra.mxu0 0.0
  %211 = vmatprep.subr.mxu0 0.0
  %212 = vmatpush1.msra.mxu0 0.0
  %213 = vmatprep.subr.mxu0 0.0
  %214 = vmatpush1.msra.mxu0 0.0
  %215 = vmatprep.subr.mxu0 0.0
  %216 = vmatpush1.msra.mxu0 0.0
  %217 = vmatprep.subr.mxu0 0.0
  %218 = vmatpush1.msra.mxu0 0.0
  %219 = vmatprep.subr.mxu0 0.0
  %220 = vmatpush1.msra.mxu0 0.0
  %221 = vmatprep.subr.mxu0 0.0
  %222 = vmatpush1.msra.mxu0 0.0
  %223 = vmatprep.subr.mxu0 0.0
  %224 = vmatpush1.msra.mxu0 0.0
  %225 = vmatprep.subr.mxu0 0.0
  %226 = vmatpush1.msra.mxu0 0.0
  %227 = vmatprep.subr.mxu0 0.0
  %228 = vmatpush1.msra.mxu0 0.0
  %229 = vmatprep.subr.mxu0 0.0
  %230 = vmatpush1.msra.mxu0 0.0
  %231 = vmatprep.subr.mxu0 0.0
  %232 = vmatpush1.msra.mxu0 0.0
  %233 = vmatprep.subr.mxu0 0.0
  %234 = vmatpush1.msra.mxu0 0.0
  %235 = vmatprep.subr.mxu0 0.0
  %236 = vmatpush1.msra.mxu0 0.0
  %237 = vmatprep.subr.mxu0 0.0
  %238 = vmatpush1.msra.mxu0 0.0
  %239 = vmatprep.subr.mxu0 0.0
  %240 = vmatpush1.msra.mxu0 0.0
  %241 = vmatprep.subr.mxu0 0.0
  %242 = vmatpush1.msra.mxu0 0.0
  %243 = vmatprep.subr.mxu0 0.0
  %244 = vmatpush1.msra.mxu0 0.0
  %245 = vmatprep.subr.mxu0 0.0
  %246 = vmatpush1.msra.mxu0 0.0
  %247 = vmatprep.mubr.f32.mxu0 0.0
  %248 = vmatmul.mubr.f32.gmra.mrb[0].mxu0 %v173
  %v249 = vpop.f32.mrb[0].mxu0
  %v250 = vadd.f32 0.0, %v249
  %v251 = vpop.f32.mrb[0].mxu0
  %v252 = vadd.f32 0.0, %v251
  %253 = vdwg.mxu0
  %254 = vmatprep.subr.mxu0 %v181
  %255 = vmatpush1.msra.mxu0 %v179
  %256 = vmatprep.subr.mxu0 0.0
  %257 = vmatpush1.msra.mxu0 0.0
  %258 = vmatprep.subr.mxu0 0.0
  %259 = vmatpush1.msra.mxu0 0.0
  %260 = vmatprep.subr.mxu0 0.0
  %261 = vmatpush1.msra.mxu0 0.0
  %262 = vmatprep.subr.mxu0 0.0
  %263 = vmatpush1.msra.mxu0 0.0
  %264 = vmatprep.subr.mxu0 0.0
  %265 = vmatpush1.msra.mxu0 0.0
  %266 = vmatprep.subr.mxu0 0.0
  %267 = vmatpush1.msra.mxu0 0.0
  %268 = vmatprep.subr.mxu0 0.0
  %269 = vmatpush1.msra.mxu0 0.0
  %270 = vmatprep.subr.mxu0 0.0
  %271 = vmatpush1.msra.mxu0 0.0
  %272 = vmatprep.subr.mxu0 0.0
  %273 = vmatpush1.msra.mxu0 0.0
  %274 = vmatprep.subr.mxu0 0.0
  %275 = vmatpush1.msra.mxu0 0.0
  %276 = vmatprep.subr.mxu0 0.0
  %277 = vmatpush1.msra.mxu0 0.0
  %278 = vmatprep.subr.mxu0 0.0
  %279 = vmatpush1.msra.mxu0 0.0
  %280 = vmatprep.subr.mxu0 0.0
  %281 = vmatpush1.msra.mxu0 0.0
  %282 = vmatprep.subr.mxu0 0.0
  %283 = vmatpush1.msra.mxu0 0.0
  %284 = vmatprep.subr.mxu0 0.0
  %285 = vmatpush1.msra.mxu0 0.0
  %286 = vmatprep.subr.mxu0 0.0
  %287 = vmatpush1.msra.mxu0 0.0
  %288 = vmatprep.subr.mxu0 0.0
  %289 = vmatpush1.msra.mxu0 0.0
  %290 = vmatprep.subr.mxu0 0.0
  %291 = vmatpush1.msra.mxu0 0.0
  %292 = vmatprep.subr.mxu0 0.0
  %293 = vmatpush1.msra.mxu0 0.0
  %294 = vmatprep.subr.mxu0 0.0
  %295 = vmatpush1.msra.mxu0 0.0
  %296 = vmatprep.subr.mxu0 0.0
  %297 = vmatpush1.msra.mxu0 0.0
  %298 = vmatprep.subr.mxu0 0.0
  %299 = vmatpush1.msra.mxu0 0.0
  %300 = vmatprep.subr.mxu0 0.0
  %301 = vmatpush1.msra.mxu0 0.0
  %302 = vmatprep.subr.mxu0 0.0
  %303 = vmatpush1.msra.mxu0 0.0
  %304 = vmatprep.subr.mxu0 0.0
  %305 = vmatpush1.msra.mxu0 0.0
  %306 = vmatprep.subr.mxu0 0.0
  %307 = vmatpush1.msra.mxu0 0.0
  %308 = vmatprep.subr.mxu0 0.0
  %309 = vmatpush1.msra.mxu0 0.0
  %310 = vmatprep.subr.mxu0 0.0
  %311 = vmatpush1.msra.mxu0 0.0
  %312 = vmatprep.subr.mxu0 0.0
  %313 = vmatpush1.msra.mxu0 0.0
  %314 = vmatprep.subr.mxu0 0.0
  %315 = vmatpush1.msra.mxu0 0.0
  %316 = vmatprep.subr.mxu0 0.0
  %317 = vmatpush1.msra.mxu0 0.0
  %318 = vmatprep.mubr.f32.mxu0 0.0
  %319 = vmatmul.mubr.f32.gmra.mrb[0].mxu0 %v173
  %v320 = vpop.f32.mrb[0].mxu0
  %v321 = vadd.f32 0.0, %v320
  %v322 = vpop.f32.mrb[0].mxu0
  %v323 = vadd.f32 0.0, %v322
  %324 = vdwg.mxu0
  %v328 = vcombine.high %v107, %v107
  %v329 = vcombine.high %v108, %v108
  %330 = vrot.lane.b32.xlu0 %v107, 17
  %v331 = vpop.permute.xlu0 %330
  %332 = vrot.lane.b32.xlu0 %v328, 17
  %v333 = vpop.permute.xlu0 %332
  %334 = vrot.lane.b32.xlu0 %v108, 17
  %v335 = vpop.permute.xlu0 %334
  %336 = vrot.lane.b32.xlu0 %v329, 17
  %v337 = vpop.permute.xlu0 %336
  %338 = vrot.lane.b32.xlu0 %v109, 17
  %v339 = vpop.permute.xlu0 %338
  %vm340 = vcmask 138240
  %v341 = vsel %vm340, %v331, %v333
  %v342 = vsel %vm340, %v333, %v335
  %v343 = vsel %vm340, %v335, %v337
  %v344 = vsel %vm340, %v337, %v339
  %v346 = vsel %vm171, %v110, 0
  %v348 = vsel %vm101, %v341, 0
  %v350 = vsel %vm101, %v342, 0
  %v352 = vsel %vm101, %v343, 0
  %v354 = vsel %vm101, %v344, 0
  %356 = vmatprep.subr.mxu0 %v350
  %357 = vmatpush1.msra.mxu0 %v348
  %358 = vmatprep.subr.mxu0 0.0
  %359 = vmatpush1.msra.mxu0 0.0
  %360 = vmatprep.subr.mxu0 0.0
  %361 = vmatpush1.msra.mxu0 0.0
  %362 = vmatprep.subr.mxu0 0.0
  %363 = vmatpush1.msra.mxu0 0.0
  %364 = vmatprep.subr.mxu0 0.0
  %365 = vmatpush1.msra.mxu0 0.0
  %366 = vmatprep.subr.mxu0 0.0
  %367 = vmatpush1.msra.mxu0 0.0
  %368 = vmatprep.subr.mxu0 0.0
  %369 = vmatpush1.msra.mxu0 0.0
  %370 = vmatprep.subr.mxu0 0.0
  %371 = vmatpush1.msra.mxu0 0.0
  %372 = vmatprep.subr.mxu0 0.0
  %373 = vmatpush1.msra.mxu0 0.0
  %374 = vmatprep.subr.mxu0 0.0
  %375 = vmatpush1.msra.mxu0 0.0
  %376 = vmatprep.subr.mxu0 0.0
  %377 = vmatpush1.msra.mxu0 0.0
  %378 = vmatprep.subr.mxu0 0.0
  %379 = vmatpush1.msra.mxu0 0.0
  %380 = vmatprep.subr.mxu0 0.0
  %381 = vmatpush1.msra.mxu0 0.0
  %382 = vmatprep.subr.mxu0 0.0
  %383 = vmatpush1.msra.mxu0 0.0
  %384 = vmatprep.subr.mxu0 0.0
  %385 = vmatpush1.msra.mxu0 0.0
  %386 = vmatprep.subr.mxu0 0.0
  %387 = vmatpush1.msra.mxu0 0.0
  %388 = vmatprep.subr.mxu0 0.0
  %389 = vmatpush1.msra.mxu0 0.0
  %390 = vmatprep.subr.mxu0 0.0
  %391 = vmatpush1.msra.mxu0 0.0
  %392 = vmatprep.subr.mxu0 0.0
  %393 = vmatpush1.msra.mxu0 0.0
  %394 = vmatprep.subr.mxu0 0.0
  %395 = vmatpush1.msra.mxu0 0.0
  %396 = vmatprep.subr.mxu0 0.0
  %397 = vmatpush1.msra.mxu0 0.0
  %398 = vmatprep.subr.mxu0 0.0
  %399 = vmatpush1.msra.mxu0 0.0
  %400 = vmatprep.subr.mxu0 0.0
  %401 = vmatpush1.msra.mxu0 0.0
  %402 = vmatprep.subr.mxu0 0.0
  %403 = vmatpush1.msra.mxu0 0.0
  %404 = vmatprep.subr.mxu0 0.0
  %405 = vmatpush1.msra.mxu0 0.0
  %406 = vmatprep.subr.mxu0 0.0
  %407 = vmatpush1.msra.mxu0 0.0
  %408 = vmatprep.subr.mxu0 0.0
  %409 = vmatpush1.msra.mxu0 0.0
  %410 = vmatprep.subr.mxu0 0.0
  %411 = vmatpush1.msra.mxu0 0.0
  %412 = vmatprep.subr.mxu0 0.0
  %413 = vmatpush1.msra.mxu0 0.0
  %414 = vmatprep.subr.mxu0 0.0
  %415 = vmatpush1.msra.mxu0 0.0
  %416 = vmatprep.subr.mxu0 0.0
  %417 = vmatpush1.msra.mxu0 0.0
  %418 = vmatprep.subr.mxu0 0.0
  %419 = vmatpush1.msra.mxu0 0.0
  %420 = vmatprep.mubr.f32.mxu0 0.0
  %421 = vmatmul.mubr.f32.gmra.mrb[0].mxu0 %v346
  %v422 = vpop.f32.mrb[0].mxu0
  %v423 = vadd.f32 %v250, %v422
  %v424 = vpop.f32.mrb[0].mxu0
  %v425 = vadd.f32 %v252, %v424
  %426 = vdwg.mxu0
  %427 = vmatprep.subr.mxu0 %v354
  %428 = vmatpush1.msra.mxu0 %v352
  %429 = vmatprep.subr.mxu0 0.0
  %430 = vmatpush1.msra.mxu0 0.0
  %431 = vmatprep.subr.mxu0 0.0
  %432 = vmatpush1.msra.mxu0 0.0
  %433 = vmatprep.subr.mxu0 0.0
  %434 = vmatpush1.msra.mxu0 0.0
  %435 = vmatprep.subr.mxu0 0.0
  %436 = vmatpush1.msra.mxu0 0.0
  %437 = vmatprep.subr.mxu0 0.0
  %438 = vmatpush1.msra.mxu0 0.0
  %439 = vmatprep.subr.mxu0 0.0
  %440 = vmatpush1.msra.mxu0 0.0
  %441 = vmatprep.subr.mxu0 0.0
  %442 = vmatpush1.msra.mxu0 0.0
  %443 = vmatprep.subr.mxu0 0.0
  %444 = vmatpush1.msra.mxu0 0.0
  %445 = vmatprep.subr.mxu0 0.0
  %446 = vmatpush1.msra.mxu0 0.0
  %447 = vmatprep.subr.mxu0 0.0
  %448 = vmatpush1.msra.mxu0 0.0
  %449 = vmatprep.subr.mxu0 0.0
  %450 = vmatpush1.msra.mxu0 0.0
  %451 = vmatprep.subr.mxu0 0.0
  %452 = vmatpush1.msra.mxu0 0.0
  %453 = vmatprep.subr.mxu0 0.0
  %454 = vmatpush1.msra.mxu0 0.0
  %455 = vmatprep.subr.mxu0 0.0
  %456 = vmatpush1.msra.mxu0 0.0
  %457 = vmatprep.subr.mxu0 0.0
  %458 = vmatpush1.msra.mxu0 0.0
  %459 = vmatprep.subr.mxu0 0.0
  %460 = vmatpush1.msra.mxu0 0.0
  %461 = vmatprep.subr.mxu0 0.0
  %462 = vmatpush1.msra.mxu0 0.0
  %463 = vmatprep.subr.mxu0 0.0
  %464 = vmatpush1.msra.mxu0 0.0
  %465 = vmatprep.subr.mxu0 0.0
  %466 = vmatpush1.msra.mxu0 0.0
  %467 = vmatprep.subr.mxu0 0.0
  %468 = vmatpush1.msra.mxu0 0.0
  %469 = vmatprep.subr.mxu0 0.0
  %470 = vmatpush1.msra.mxu0 0.0
  %471 = vmatprep.subr.mxu0 0.0
  %472 = vmatpush1.msra.mxu0 0.0
  %473 = vmatprep.subr.mxu0 0.0
  %474 = vmatpush1.msra.mxu0 0.0
  %475 = vmatprep.subr.mxu0 0.0
  %476 = vmatpush1.msra.mxu0 0.0
  %477 = vmatprep.subr.mxu0 0.0
  %478 = vmatpush1.msra.mxu0 0.0
  %479 = vmatprep.subr.mxu0 0.0
  %480 = vmatpush1.msra.mxu0 0.0
  %481 = vmatprep.subr.mxu0 0.0
  %482 = vmatpush1.msra.mxu0 0.0
  %483 = vmatprep.subr.mxu0 0.0
  %484 = vmatpush1.msra.mxu0 0.0
  %485 = vmatprep.subr.mxu0 0.0
  %486 = vmatpush1.msra.mxu0 0.0
  %487 = vmatprep.subr.mxu0 0.0
  %488 = vmatpush1.msra.mxu0 0.0
  %489 = vmatprep.subr.mxu0 0.0
  %490 = vmatpush1.msra.mxu0 0.0
  %491 = vmatprep.mubr.f32.mxu0 0.0
  %492 = vmatmul.mubr.f32.gmra.mrb[0].mxu0 %v346
  %v493 = vpop.f32.mrb[0].mxu0
  %v494 = vadd.f32 %v321, %v493
  %v495 = vpop.f32.mrb[0].mxu0
  %v496 = vadd.f32 %v323, %v495
  %497 = vdwg.mxu0
  %v498 = vld [vmem:[#allocation2] sm:$0xff]
  %v499 = vld [vmem:[#allocation2 + $0x8] sm:$0xff]
  %v500 = vld [vmem:[#allocation2 + $0x10] sm:$0xf]
  %v501 = vlaneseq
  %v502 = vshrl.u32 %v501, 7
  %v503 = vsub.s32 2, %v502
  %v504 = vrot.slane %v55, %v503
  %v505 = vlaneseq
  %v506 = vshrl.u32 %v505, 7
  %v507 = vsub.s32 2, %v506
  %v508 = vrot.slane %v56, %v507
  %v509 = vlaneseq
  %v510 = vshrl.u32 %v509, 7
  %v511 = vsub.s32 2, %v510
  %v512 = vrot.slane %v57, %v511
  %v513 = vlaneseq
  %v514 = vshrl.u32 %v513, 7
  %v515 = vsub.s32 2, %v514
  %v516 = vrot.slane %v58, %v515
  %v521 = vcombine.low %v504, %v508
  %v522 = vcombine.low %v512, %v516
  %523 = vrot.lane.b32.xlu0 %v521, 113
  %v524 = vpop.permute.xlu0 %523
  %525 = vrot.lane.b32.xlu0 %v522, 113
  %v526 = vpop.permute.xlu0 %525
  %v527 = vrot.slane %v524, 4
  %v528 = vrot.slane %v526, 4
  %vm529 = vcmask 924672
  %v530 = vsel %vm529, %v527, %v524
  %v531 = vsel %vm101, %v527, %v528
  %v532 = vsel %vm529, %v531, %v526
  %v536 = vmul.f32 %v498, %v530
  %v537 = vmul.f32 %v499, %v532
  %v538 = vmul.f32 %v500, %v528
  %s539 = scalar_lea.vmem %s2, 8
  %v540 = vld [vmem:[%s539] sm:$0xf]
  %v544 = vcombine.high %v536, %v536
  %v545 = vcombine.high %v537, %v537
  %546 = vrot.lane.b32.xlu0 %v536, 15
  %v547 = vpop.permute.xlu0 %546
  %548 = vrot.lane.b32.xlu0 %v544, 15
  %v549 = vpop.permute.xlu0 %548
  %550 = vrot.lane.b32.xlu0 %v537, 15
  %v551 = vpop.permute.xlu0 %550
  %552 = vrot.lane.b32.xlu0 %v545, 15
  %v553 = vpop.permute.xlu0 %552
  %554 = vrot.lane.b32.xlu0 %v538, 15
  %v555 = vpop.permute.xlu0 %554
  %vm556 = vcmask 121856
  %v557 = vsel %vm556, %v547, %v549
  %v558 = vsel %vm556, %v549, %v551
  %v559 = vsel %vm556, %v551, %v553
  %v560 = vsel %vm556, %v553, %v555
  %v562 = vsel %vm171, %v540, 0
  %v564 = vsel %vm101, %v557, 0
  %v566 = vsel %vm101, %v558, 0
  %v568 = vsel %vm101, %v559, 0
  %v570 = vsel %vm101, %v560, 0
  %572 = vmatprep.subr.mxu0 %v566
  %573 = vmatpush1.msra.mxu0 %v564
  %574 = vmatprep.subr.mxu0 0.0
  %575 = vmatpush1.msra.mxu0 0.0
  %576 = vmatprep.subr.mxu0 0.0
  %577 = vmatpush1.msra.mxu0 0.0
  %578 = vmatprep.subr.mxu0 0.0
  %579 = vmatpush1.msra.mxu0 0.0
  %580 = vmatprep.subr.mxu0 0.0
  %581 = vmatpush1.msra.mxu0 0.0
  %582 = vmatprep.subr.mxu0 0.0
  %583 = vmatpush1.msra.mxu0 0.0
  %584 = vmatprep.subr.mxu0 0.0
  %585 = vmatpush1.msra.mxu0 0.0
  %586 = vmatprep.subr.mxu0 0.0
  %587 = vmatpush1.msra.mxu0 0.0
  %588 = vmatprep.subr.mxu0 0.0
  %589 = vmatpush1.msra.mxu0 0.0
  %590 = vmatprep.subr.mxu0 0.0
  %591 = vmatpush1.msra.mxu0 0.0
  %592 = vmatprep.subr.mxu0 0.0
  %593 = vmatpush1.msra.mxu0 0.0
  %594 = vmatprep.subr.mxu0 0.0
  %595 = vmatpush1.msra.mxu0 0.0
  %596 = vmatprep.subr.mxu0 0.0
  %597 = vmatpush1.msra.mxu0 0.0
  %598 = vmatprep.subr.mxu0 0.0
  %599 = vmatpush1.msra.mxu0 0.0
  %600 = vmatprep.subr.mxu0 0.0
  %601 = vmatpush1.msra.mxu0 0.0
  %602 = vmatprep.subr.mxu0 0.0
  %603 = vmatpush1.msra.mxu0 0.0
  %604 = vmatprep.subr.mxu0 0.0
  %605 = vmatpush1.msra.mxu0 0.0
  %606 = vmatprep.subr.mxu0 0.0
  %607 = vmatpush1.msra.mxu0 0.0
  %608 = vmatprep.subr.mxu0 0.0
  %609 = vmatpush1.msra.mxu0 0.0
  %610 = vmatprep.subr.mxu0 0.0
  %611 = vmatpush1.msra.mxu0 0.0
  %612 = vmatprep.subr.mxu0 0.0
  %613 = vmatpush1.msra.mxu0 0.0
  %614 = vmatprep.subr.mxu0 0.0
  %615 = vmatpush1.msra.mxu0 0.0
  %616 = vmatprep.subr.mxu0 0.0
  %617 = vmatpush1.msra.mxu0 0.0
  %618 = vmatprep.subr.mxu0 0.0
  %619 = vmatpush1.msra.mxu0 0.0
  %620 = vmatprep.subr.mxu0 0.0
  %621 = vmatpush1.msra.mxu0 0.0
  %622 = vmatprep.subr.mxu0 0.0
  %623 = vmatpush1.msra.mxu0 0.0
  %624 = vmatprep.subr.mxu0 0.0
  %625 = vmatpush1.msra.mxu0 0.0
  %626 = vmatprep.subr.mxu0 0.0
  %627 = vmatpush1.msra.mxu0 0.0
  %628 = vmatprep.subr.mxu0 0.0
  %629 = vmatpush1.msra.mxu0 0.0
  %630 = vmatprep.subr.mxu0 0.0
  %631 = vmatpush1.msra.mxu0 0.0
  %632 = vmatprep.subr.mxu0 0.0
  %633 = vmatpush1.msra.mxu0 0.0
  %634 = vmatprep.subr.mxu0 0.0
  %635 = vmatpush1.msra.mxu0 0.0
  %636 = vmatprep.mubr.f32.mxu0 0.0
  %637 = vmatmul.mubr.f32.gmra.mrb[0].mxu0 %v562
  %v638 = vpop.f32.mrb[0].mxu0
  %v639 = vadd.f32 0.0, %v638
  %v640 = vpop.f32.mrb[0].mxu0
  %v641 = vadd.f32 0.0, %v640
  %642 = vdwg.mxu0
  %643 = vmatprep.subr.mxu0 %v570
  %644 = vmatpush1.msra.mxu0 %v568
  %645 = vmatprep.subr.mxu0 0.0
  %646 = vmatpush1.msra.mxu0 0.0
  %647 = vmatprep.subr.mxu0 0.0
  %648 = vmatpush1.msra.mxu0 0.0
  %649 = vmatprep.subr.mxu0 0.0
  %650 = vmatpush1.msra.mxu0 0.0
  %651 = vmatprep.subr.mxu0 0.0
  %652 = vmatpush1.msra.mxu0 0.0
  %653 = vmatprep.subr.mxu0 0.0
  %654 = vmatpush1.msra.mxu0 0.0
  %655 = vmatprep.subr.mxu0 0.0
  %656 = vmatpush1.msra.mxu0 0.0
  %657 = vmatprep.subr.mxu0 0.0
  %658 = vmatpush1.msra.mxu0 0.0
  %659 = vmatprep.subr.mxu0 0.0
  %660 = vmatpush1.msra.mxu0 0.0
  %661 = vmatprep.subr.mxu0 0.0
  %662 = vmatpush1.msra.mxu0 0.0
  %663 = vmatprep.subr.mxu0 0.0
  %664 = vmatpush1.msra.mxu0 0.0
  %665 = vmatprep.subr.mxu0 0.0
  %666 = vmatpush1.msra.mxu0 0.0
  %667 = vmatprep.subr.mxu0 0.0
  %668 = vmatpush1.msra.mxu0 0.0
  %669 = vmatprep.subr.mxu0 0.0
  %670 = vmatpush1.msra.mxu0 0.0
  %671 = vmatprep.subr.mxu0 0.0
  %672 = vmatpush1.msra.mxu0 0.0
  %673 = vmatprep.subr.mxu0 0.0
  %674 = vmatpush1.msra.mxu0 0.0
  %675 = vmatprep.subr.mxu0 0.0
  %676 = vmatpush1.msra.mxu0 0.0
  %677 = vmatprep.subr.mxu0 0.0
  %678 = vmatpush1.msra.mxu0 0.0
  %679 = vmatprep.subr.mxu0 0.0
  %680 = vmatpush1.msra.mxu0 0.0
  %681 = vmatprep.subr.mxu0 0.0
  %682 = vmatpush1.msra.mxu0 0.0
  %683 = vmatprep.subr.mxu0 0.0
  %684 = vmatpush1.msra.mxu0 0.0
  %685 = vmatprep.subr.mxu0 0.0
  %686 = vmatpush1.msra.mxu0 0.0
  %687 = vmatprep.subr.mxu0 0.0
  %688 = vmatpush1.msra.mxu0 0.0
  %689 = vmatprep.subr.mxu0 0.0
  %690 = vmatpush1.msra.mxu0 0.0
  %691 = vmatprep.subr.mxu0 0.0
  %692 = vmatpush1.msra.mxu0 0.0
  %693 = vmatprep.subr.mxu0 0.0
  %694 = vmatpush1.msra.mxu0 0.0
  %695 = vmatprep.subr.mxu0 0.0
  %696 = vmatpush1.msra.mxu0 0.0
  %697 = vmatprep.subr.mxu0 0.0
  %698 = vmatpush1.msra.mxu0 0.0
  %699 = vmatprep.subr.mxu0 0.0
  %700 = vmatpush1.msra.mxu0 0.0
  %701 = vmatprep.subr.mxu0 0.0
  %702 = vmatpush1.msra.mxu0 0.0
  %703 = vmatprep.subr.mxu0 0.0
  %704 = vmatpush1.msra.mxu0 0.0
  %705 = vmatprep.subr.mxu0 0.0
  %706 = vmatpush1.msra.mxu0 0.0
  %707 = vmatprep.mubr.f32.mxu0 0.0
  %708 = vmatmul.mubr.f32.gmra.mrb[0].mxu0 %v562
  %v709 = vpop.f32.mrb[0].mxu0
  %v710 = vadd.f32 0.0, %v709
  %v711 = vpop.f32.mrb[0].mxu0
  %v712 = vadd.f32 0.0, %v711
  %713 = vdwg.mxu0
  %v714 = vadd.f32 %v423, %v639
  %v715 = vadd.f32 %v425, %v641
  %v716 = vadd.f32 %v494, %v710
  %v717 = vadd.f32 %v496, %v712
  %v718 = vld [vmem:[#allocation2] sm:$0xff]
  %v719 = vld [vmem:[#allocation2 + $0x8] sm:$0xff]
  %v720 = vld [vmem:[#allocation2 + $0x10] sm:$0xf]
  %v721 = vlaneseq
  %v722 = vshrl.u32 %v721, 7
  %v723 = vsub.s32 3, %v722
  %v724 = vrot.slane %v55, %v723
  %v725 = vlaneseq
  %v726 = vshrl.u32 %v725, 7
  %v727 = vsub.s32 3, %v726
  %v728 = vrot.slane %v56, %v727
  %v729 = vlaneseq
  %v730 = vshrl.u32 %v729, 7
  %v731 = vsub.s32 3, %v730
  %v732 = vrot.slane %v57, %v731
  %v733 = vlaneseq
  %v734 = vshrl.u32 %v733, 7
  %v735 = vsub.s32 3, %v734
  %v736 = vrot.slane %v58, %v735
  %v741 = vcombine.low %v724, %v728
  %v742 = vcombine.low %v732, %v736
  %743 = vrot.lane.b32.xlu0 %v741, 127
  %v744 = vpop.permute.xlu0 %743
  %745 = vrot.lane.b32.xlu0 %v742, 127
  %v746 = vpop.permute.xlu0 %745
  %v747 = vrot.slane %v744, 4
  %v748 = vrot.slane %v746, 4
  %vm749 = vcmask 1039360
  %v750 = vsel %vm749, %v747, %v744
  %v751 = vsel %vm101, %v747, %v748
  %v752 = vsel %vm749, %v751, %v746
  %v756 = vmul.f32 %v718, %v750
  %v757 = vmul.f32 %v719, %v752
  %v758 = vmul.f32 %v720, %v748
  %s759 = scalar_lea.vmem %s2, 12
  %v760 = vld [vmem:[%s759] sm:$0xf]
  %v764 = vcombine.high %v756, %v756
  %v765 = vcombine.high %v757, %v757
  %766 = vrot.lane.b32.xlu0 %v756, 1
  %v767 = vpop.permute.xlu0 %766
  %768 = vrot.lane.b32.xlu0 %v764, 1
  %v769 = vpop.permute.xlu0 %768
  %770 = vrot.lane.b32.xlu0 %v757, 1
  %v771 = vpop.permute.xlu0 %770
  %772 = vrot.lane.b32.xlu0 %v765, 1
  %v773 = vpop.permute.xlu0 %772
  %774 = vrot.lane.b32.xlu0 %v758, 1
  %v775 = vpop.permute.xlu0 %774
  %vm776 = vcmask 7168
  %v777 = vsel %vm776, %v767, %v769
  %v778 = vsel %vm776, %v769, %v771
  %v779 = vsel %vm776, %v771, %v773
  %v780 = vsel %vm776, %v773, %v775
  %v782 = vsel %vm171, %v760, 0
  %v784 = vsel %vm101, %v777, 0
  %v786 = vsel %vm101, %v778, 0
  %v788 = vsel %vm101, %v779, 0
  %v790 = vsel %vm101, %v780, 0
  %792 = vmatprep.subr.mxu0 %v786
  %793 = vmatpush1.msra.mxu0 %v784
  %794 = vmatprep.subr.mxu0 0.0
  %795 = vmatpush1.msra.mxu0 0.0
  %796 = vmatprep.subr.mxu0 0.0
  %797 = vmatpush1.msra.mxu0 0.0
  %798 = vmatprep.subr.mxu0 0.0
  %799 = vmatpush1.msra.mxu0 0.0
  %800 = vmatprep.subr.mxu0 0.0
  %801 = vmatpush1.msra.mxu0 0.0
  %802 = vmatprep.subr.mxu0 0.0
  %803 = vmatpush1.msra.mxu0 0.0
  %804 = vmatprep.subr.mxu0 0.0
  %805 = vmatpush1.msra.mxu0 0.0
  %806 = vmatprep.subr.mxu0 0.0
  %807 = vmatpush1.msra.mxu0 0.0
  %808 = vmatprep.subr.mxu0 0.0
  %809 = vmatpush1.msra.mxu0 0.0
  %810 = vmatprep.subr.mxu0 0.0
  %811 = vmatpush1.msra.mxu0 0.0
  %812 = vmatprep.subr.mxu0 0.0
  %813 = vmatpush1.msra.mxu0 0.0
  %814 = vmatprep.subr.mxu0 0.0
  %815 = vmatpush1.msra.mxu0 0.0
  %816 = vmatprep.subr.mxu0 0.0
  %817 = vmatpush1.msra.mxu0 0.0
  %818 = vmatprep.subr.mxu0 0.0
  %819 = vmatpush1.msra.mxu0 0.0
  %820 = vmatprep.subr.mxu0 0.0
  %821 = vmatpush1.msra.mxu0 0.0
  %822 = vmatprep.subr.mxu0 0.0
  %823 = vmatpush1.msra.mxu0 0.0
  %824 = vmatprep.subr.mxu0 0.0
  %825 = vmatpush1.msra.mxu0 0.0
  %826 = vmatprep.subr.mxu0 0.0
  %827 = vmatpush1.msra.mxu0 0.0
  %828 = vmatprep.subr.mxu0 0.0
  %829 = vmatpush1.msra.mxu0 0.0
  %830 = vmatprep.subr.mxu0 0.0
  %831 = vmatpush1.msra.mxu0 0.0
  %832 = vmatprep.subr.mxu0 0.0
  %833 = vmatpush1.msra.mxu0 0.0
  %834 = vmatprep.subr.mxu0 0.0
  %835 = vmatpush1.msra.mxu0 0.0
  %836 = vmatprep.subr.mxu0 0.0
  %837 = vmatpush1.msra.mxu0 0.0
  %838 = vmatprep.subr.mxu0 0.0
  %839 = vmatpush1.msra.mxu0 0.0
  %840 = vmatprep.subr.mxu0 0.0
  %841 = vmatpush1.msra.mxu0 0.0
  %842 = vmatprep.subr.mxu0 0.0
  %843 = vmatpush1.msra.mxu0 0.0
  %844 = vmatprep.subr.mxu0 0.0
  %845 = vmatpush1.msra.mxu0 0.0
  %846 = vmatprep.subr.mxu0 0.0
  %847 = vmatpush1.msra.mxu0 0.0
  %848 = vmatprep.subr.mxu0 0.0
  %849 = vmatpush1.msra.mxu0 0.0
  %850 = vmatprep.subr.mxu0 0.0
  %851 = vmatpush1.msra.mxu0 0.0
  %852 = vmatprep.subr.mxu0 0.0
  %853 = vmatpush1.msra.mxu0 0.0
  %854 = vmatprep.subr.mxu0 0.0
  %855 = vmatpush1.msra.mxu0 0.0
  %856 = vmatprep.mubr.f32.mxu0 0.0
  %857 = vmatmul.mubr.f32.gmra.mrb[0].mxu0 %v782
  %v858 = vpop.f32.mrb[0].mxu0
  %v859 = vadd.f32 0.0, %v858
  %v860 = vpop.f32.mrb[0].mxu0
  %v861 = vadd.f32 0.0, %v860
  %862 = vdwg.mxu0
  %863 = vmatprep.subr.mxu0 %v790
  %864 = vmatpush1.msra.mxu0 %v788
  %865 = vmatprep.subr.mxu0 0.0
  %866 = vmatpush1.msra.mxu0 0.0
  %867 = vmatprep.subr.mxu0 0.0
  %868 = vmatpush1.msra.mxu0 0.0
  %869 = vmatprep.subr.mxu0 0.0
  %870 = vmatpush1.msra.mxu0 0.0
  %871 = vmatprep.subr.mxu0 0.0
  %872 = vmatpush1.msra.mxu0 0.0
  %873 = vmatprep.subr.mxu0 0.0
  %874 = vmatpush1.msra.mxu0 0.0
  %875 = vmatprep.subr.mxu0 0.0
  %876 = vmatpush1.msra.mxu0 0.0
  %877 = vmatprep.subr.mxu0 0.0
  %878 = vmatpush1.msra.mxu0 0.0
  %879 = vmatprep.subr.mxu0 0.0
  %880 = vmatpush1.msra.mxu0 0.0
  %881 = vmatprep.subr.mxu0 0.0
  %882 = vmatpush1.msra.mxu0 0.0
  %883 = vmatprep.subr.mxu0 0.0
  %884 = vmatpush1.msra.mxu0 0.0
  %885 = vmatprep.subr.mxu0 0.0
  %886 = vmatpush1.msra.mxu0 0.0
  %887 = vmatprep.subr.mxu0 0.0
  %888 = vmatpush1.msra.mxu0 0.0
  %889 = vmatprep.subr.mxu0 0.0
  %890 = vmatpush1.msra.mxu0 0.0
  %891 = vmatprep.subr.mxu0 0.0
  %892 = vmatpush1.msra.mxu0 0.0
  %893 = vmatprep.subr.mxu0 0.0
  %894 = vmatpush1.msra.mxu0 0.0
  %895 = vmatprep.subr.mxu0 0.0
  %896 = vmatpush1.msra.mxu0 0.0
  %897 = vmatprep.subr.mxu0 0.0
  %898 = vmatpush1.msra.mxu0 0.0
  %899 = vmatprep.subr.mxu0 0.0
  %900 = vmatpush1.msra.mxu0 0.0
  %901 = vmatprep.subr.mxu0 0.0
  %902 = vmatpush1.msra.mxu0 0.0
  %903 = vmatprep.subr.mxu0 0.0
  %904 = vmatpush1.msra.mxu0 0.0
  %905 = vmatprep.subr.mxu0 0.0
  %906 = vmatpush1.msra.mxu0 0.0
  %907 = vmatprep.subr.mxu0 0.0
  %908 = vmatpush1.msra.mxu0 0.0
  %909 = vmatprep.subr.mxu0 0.0
  %910 = vmatpush1.msra.mxu0 0.0
  %911 = vmatprep.subr.mxu0 0.0
  %912 = vmatpush1.msra.mxu0 0.0
  %913 = vmatprep.subr.mxu0 0.0
  %914 = vmatpush1.msra.mxu0 0.0
  %915 = vmatprep.subr.mxu0 0.0
  %916 = vmatpush1.msra.mxu0 0.0
  %917 = vmatprep.subr.mxu0 0.0
  %918 = vmatpush1.msra.mxu0 0.0
  %919 = vmatprep.subr.mxu0 0.0
  %920 = vmatpush1.msra.mxu0 0.0
  %921 = vmatprep.subr.mxu0 0.0
  %922 = vmatpush1.msra.mxu0 0.0
  %923 = vmatprep.subr.mxu0 0.0
  %924 = vmatpush1.msra.mxu0 0.0
  %925 = vmatprep.subr.mxu0 0.0
  %926 = vmatpush1.msra.mxu0 0.0
  %927 = vmatprep.mubr.f32.mxu0 0.0
  %928 = vmatmul.mubr.f32.gmra.mrb[0].mxu0 %v782
  %v929 = vpop.f32.mrb[0].mxu0
  %v930 = vadd.f32 0.0, %v929
  %v931 = vpop.f32.mrb[0].mxu0
  %v932 = vadd.f32 0.0, %v931
  %933 = vdwg.mxu0
  %v934 = vadd.f32 %v714, %v859
  %v935 = vadd.f32 %v715, %v861
  %v936 = vadd.f32 %v716, %v930
  %v937 = vadd.f32 %v717, %v932
  %v938 = vld [vmem:[#allocation2 + $0x4] sm:$0xff]
  %v939 = vld [vmem:[#allocation2 + $0xc] sm:$0xff]
  %v940 = vlaneseq
  %v941 = vshrl.u32 %v940, 7
  %v942 = vsub.s32 4, %v941
  %v943 = vrot.slane %v55, %v942
  %v944 = vlaneseq
  %v945 = vshrl.u32 %v944, 7
  %v946 = vsub.s32 4, %v945
  %v947 = vrot.slane %v56, %v946
  %v948 = vlaneseq
  %v949 = vshrl.u32 %v948, 7
  %v950 = vsub.s32 4, %v949
  %v951 = vrot.slane %v57, %v950
  %v952 = vlaneseq
  %v953 = vshrl.u32 %v952, 7
  %v954 = vsub.s32 4, %v953
  %v955 = vrot.slane %v58, %v954
  %v960 = vcombine.low %v943, %v947
  %v961 = vcombine.low %v951, %v955
  %v964 = vmul.f32 %v938, %v960
  %v965 = vmul.f32 %v939, %v961
  %s966 = scalar_lea.vmem %s2, 16
  %v967 = vld [vmem:[%s966] sm:$0xf]
  %v970 = vcombine.high %v964, %v964
  %v971 = vcombine.high %v965, %v965
  %v973 = vsel %vm171, %v967, 0
  %v975 = vsel %vm101, %v964, 0
  %v977 = vsel %vm101, %v970, 0
  %v979 = vsel %vm101, %v965, 0
  %v981 = vsel %vm101, %v971, 0
  %983 = vmatprep.subr.mxu0 %v977
  %984 = vmatpush1.msra.mxu0 %v975
  %985 = vmatprep.subr.mxu0 0.0
  %986 = vmatpush1.msra.mxu0 0.0
  %987 = vmatprep.subr.mxu0 0.0
  %988 = vmatpush1.msra.mxu0 0.0
  %989 = vmatprep.subr.mxu0 0.0
  %990 = vmatpush1.msra.mxu0 0.0
  %991 = vmatprep.subr.mxu0 0.0
  %992 = vmatpush1.msra.mxu0 0.0
  %993 = vmatprep.subr.mxu0 0.0
  %994 = vmatpush1.msra.mxu0 0.0
  %995 = vmatprep.subr.mxu0 0.0
  %996 = vmatpush1.msra.mxu0 0.0
  %997 = vmatprep.subr.mxu0 0.0
  %998 = vmatpush1.msra.mxu0 0.0
  %999 = vmatprep.subr.mxu0 0.0
  %1000 = vmatpush1.msra.mxu0 0.0
  %1001 = vmatprep.subr.mxu0 0.0
  %1002 = vmatpush1.msra.mxu0 0.0
  %1003 = vmatprep.subr.mxu0 0.0
  %1004 = vmatpush1.msra.mxu0 0.0
  %1005 = vmatprep.subr.mxu0 0.0
  %1006 = vmatpush1.msra.mxu0 0.0
  %1007 = vmatprep.subr.mxu0 0.0
  %1008 = vmatpush1.msra.mxu0 0.0
  %1009 = vmatprep.subr.mxu0 0.0
  %1010 = vmatpush1.msra.mxu0 0.0
  %1011 = vmatprep.subr.mxu0 0.0
  %1012 = vmatpush1.msra.mxu0 0.0
  %1013 = vmatprep.subr.mxu0 0.0
  %1014 = vmatpush1.msra.mxu0 0.0
  %1015 = vmatprep.subr.mxu0 0.0
  %1016 = vmatpush1.msra.mxu0 0.0
  %1017 = vmatprep.subr.mxu0 0.0
  %1018 = vmatpush1.msra.mxu0 0.0
  %1019 = vmatprep.subr.mxu0 0.0
  %1020 = vmatpush1.msra.mxu0 0.0
  %1021 = vmatprep.subr.mxu0 0.0
  %1022 = vmatpush1.msra.mxu0 0.0
  %1023 = vmatprep.subr.mxu0 0.0
  %1024 = vmatpush1.msra.mxu0 0.0
  %1025 = vmatprep.subr.mxu0 0.0
  %1026 = vmatpush1.msra.mxu0 0.0
  %1027 = vmatprep.subr.mxu0 0.0
  %1028 = vmatpush1.msra.mxu0 0.0
  %1029 = vmatprep.subr.mxu0 0.0
  %1030 = vmatpush1.msra.mxu0 0.0
  %1031 = vmatprep.subr.mxu0 0.0
  %1032 = vmatpush1.msra.mxu0 0.0
  %1033 = vmatprep.subr.mxu0 0.0
  %1034 = vmatpush1.msra.mxu0 0.0
  %1035 = vmatprep.subr.mxu0 0.0
  %1036 = vmatpush1.msra.mxu0 0.0
  %1037 = vmatprep.subr.mxu0 0.0
  %1038 = vmatpush1.msra.mxu0 0.0
  %1039 = vmatprep.subr.mxu0 0.0
  %1040 = vmatpush1.msra.mxu0 0.0
  %1041 = vmatprep.subr.mxu0 0.0
  %1042 = vmatpush1.msra.mxu0 0.0
  %1043 = vmatprep.subr.mxu0 0.0
  %1044 = vmatpush1.msra.mxu0 0.0
  %1045 = vmatprep.subr.mxu0 0.0
  %1046 = vmatpush1.msra.mxu0 0.0
  %1047 = vmatprep.mubr.f32.mxu0 0.0
  %1048 = vmatmul.mubr.f32.gmra.mrb[0].mxu0 %v973
  %v1049 = vpop.f32.mrb[0].mxu0
  %v1050 = vadd.f32 0.0, %v1049
  %v1051 = vpop.f32.mrb[0].mxu0
  %v1052 = vadd.f32 0.0, %v1051
  %1053 = vdwg.mxu0
  %1054 = vmatprep.subr.mxu0 %v981
  %1055 = vmatpush1.msra.mxu0 %v979
  %1056 = vmatprep.subr.mxu0 0.0
  %1057 = vmatpush1.msra.mxu0 0.0
  %1058 = vmatprep.subr.mxu0 0.0
  %1059 = vmatpush1.msra.mxu0 0.0
  %1060 = vmatprep.subr.mxu0 0.0
  %1061 = vmatpush1.msra.mxu0 0.0
  %1062 = vmatprep.subr.mxu0 0.0
  %1063 = vmatpush1.msra.mxu0 0.0
  %1064 = vmatprep.subr.mxu0 0.0
  %1065 = vmatpush1.msra.mxu0 0.0
  %1066 = vmatprep.subr.mxu0 0.0
  %1067 = vmatpush1.msra.mxu0 0.0
  %1068 = vmatprep.subr.mxu0 0.0
  %1069 = vmatpush1.msra.mxu0 0.0
  %1070 = vmatprep.subr.mxu0 0.0
  %1071 = vmatpush1.msra.mxu0 0.0
  %1072 = vmatprep.subr.mxu0 0.0
  %1073 = vmatpush1.msra.mxu0 0.0
  %1074 = vmatprep.subr.mxu0 0.0
  %1075 = vmatpush1.msra.mxu0 0.0
  %1076 = vmatprep.subr.mxu0 0.0
  %1077 = vmatpush1.msra.mxu0 0.0
  %1078 = vmatprep.subr.mxu0 0.0
  %1079 = vmatpush1.msra.mxu0 0.0
  %1080 = vmatprep.subr.mxu0 0.0
  %1081 = vmatpush1.msra.mxu0 0.0
  %1082 = vmatprep.subr.mxu0 0.0
  %1083 = vmatpush1.msra.mxu0 0.0
  %1084 = vmatprep.subr.mxu0 0.0
  %1085 = vmatpush1.msra.mxu0 0.0
  %1086 = vmatprep.subr.mxu0 0.0
  %1087 = vmatpush1.msra.mxu0 0.0
  %1088 = vmatprep.subr.mxu0 0.0
  %1089 = vmatpush1.msra.mxu0 0.0
  %1090 = vmatprep.subr.mxu0 0.0
  %1091 = vmatpush1.msra.mxu0 0.0
  %1092 = vmatprep.subr.mxu0 0.0
  %1093 = vmatpush1.msra.mxu0 0.0
  %1094 = vmatprep.subr.mxu0 0.0
  %1095 = vmatpush1.msra.mxu0 0.0
  %1096 = vmatprep.subr.mxu0 0.0
  %1097 = vmatpush1.msra.mxu0 0.0
  %1098 = vmatprep.subr.mxu0 0.0
  %1099 = vmatpush1.msra.mxu0 0.0
  %1100 = vmatprep.subr.mxu0 0.0
  %1101 = vmatpush1.msra.mxu0 0.0
  %1102 = vmatprep.subr.mxu0 0.0
  %1103 = vmatpush1.msra.mxu0 0.0
  %1104 = vmatprep.subr.mxu0 0.0
  %1105 = vmatpush1.msra.mxu0 0.0
  %1106 = vmatprep.subr.mxu0 0.0
  %1107 = vmatpush1.msra.mxu0 0.0
  %1108 = vmatprep.subr.mxu0 0.0
  %1109 = vmatpush1.msra.mxu0 0.0
  %1110 = vmatprep.subr.mxu0 0.0
  %1111 = vmatpush1.msra.mxu0 0.0
  %1112 = vmatprep.subr.mxu0 0.0
  %1113 = vmatpush1.msra.mxu0 0.0
  %1114 = vmatprep.subr.mxu0 0.0
  %1115 = vmatpush1.msra.mxu0 0.0
  %1116 = vmatprep.subr.mxu0 0.0
  %1117 = vmatpush1.msra.mxu0 0.0
  %1118 = vmatprep.mubr.f32.mxu0 0.0
  %1119 = vmatmul.mubr.f32.gmra.mrb[0].mxu0 %v973
  %v1120 = vpop.f32.mrb[0].mxu0
  %v1121 = vadd.f32 0.0, %v1120
  %v1122 = vpop.f32.mrb[0].mxu0
  %v1123 = vadd.f32 0.0, %v1122
  %1124 = vdwg.mxu0
  %v1125 = vadd.f32 %v934, %v1050
  %v1126 = vadd.f32 %v935, %v1052
  %v1127 = vadd.f32 %v936, %v1121
  %v1128 = vadd.f32 %v937, %v1123
  %v1129 = vld [vmem:[#allocation2 + $0x4] sm:$0xff]
  %v1130 = vld [vmem:[#allocation2 + $0xc] sm:$0xff]
  %v1131 = vld [vmem:[#allocation2 + $0x14] sm:$0xf]
  %v1132 = vlaneseq
  %v1133 = vshrl.u32 %v1132, 7
  %v1134 = vsub.s32 5, %v1133
  %v1135 = vrot.slane %v55, %v1134
  %v1136 = vlaneseq
  %v1137 = vshrl.u32 %v1136, 7
  %v1138 = vsub.s32 5, %v1137
  %v1139 = vrot.slane %v56, %v1138
  %v1140 = vlaneseq
  %v1141 = vshrl.u32 %v1140, 7
  %v1142 = vsub.s32 5, %v1141
  %v1143 = vrot.slane %v57, %v1142
  %v1144 = vlaneseq
  %v1145 = vshrl.u32 %v1144, 7
  %v1146 = vsub.s32 5, %v1145
  %v1147 = vrot.slane %v58, %v1146
  %v1152 = vcombine.low %v1135, %v1139
  %v1153 = vcombine.low %v1143, %v1147
  %1154 = vrot.lane.b32.xlu0 %v1152, 1
  %v1155 = vpop.permute.xlu0 %1154
  %1156 = vrot.lane.b32.xlu0 %v1153, 1
  %v1157 = vpop.permute.xlu0 %1156
  %v1158 = vrot.slane %v1155, 4
  %v1159 = vrot.slane %v1157, 4
  %v1160 = vsel %vm776, %v1158, %v1155
  %v1161 = vsel %vm101, %v1158, %v1159
  %v1162 = vsel %vm776, %v1161, %v1157
  %v1166 = vmul.f32 %v1129, %v1160
  %v1167 = vmul.f32 %v1130, %v1162
  %v1168 = vmul.f32 %v1131, %v1159
  %s1169 = scalar_lea.vmem %s2, 20
  %v1170 = vld [vmem:[%s1169] sm:$0xf]
  %v1174 = vcombine.high %v1166, %v1166
  %v1175 = vcombine.high %v1167, %v1167
  %1176 = vrot.lane.b32.xlu0 %v1166, 127
  %v1177 = vpop.permute.xlu0 %1176
  %1178 = vrot.lane.b32.xlu0 %v1174, 127
  %v1179 = vpop.permute.xlu0 %1178
  %1180 = vrot.lane.b32.xlu0 %v1167, 127
  %v1181 = vpop.permute.xlu0 %1180
  %1182 = vrot.lane.b32.xlu0 %v1175, 127
  %v1183 = vpop.permute.xlu0 %1182
  %1184 = vrot.lane.b32.xlu0 %v1168, 127
  %v1185 = vpop.permute.xlu0 %1184
  %v1186 = vsel %vm749, %v1177, %v1179
  %v1187 = vsel %vm749, %v1179, %v1181
  %v1188 = vsel %vm749, %v1181, %v1183
  %v1189 = vsel %vm749, %v1183, %v1185
  %v1191 = vsel %vm171, %v1170, 0
  %v1193 = vsel %vm101, %v1186, 0
  %v1195 = vsel %vm101, %v1187, 0
  %v1197 = vsel %vm101, %v1188, 0
  %v1199 = vsel %vm101, %v1189, 0
  %1201 = vmatprep.subr.mxu0 %v1195
  %1202 = vmatpush1.msra.mxu0 %v1193
  %1203 = vmatprep.subr.mxu0 0.0
  %1204 = vmatpush1.msra.mxu0 0.0
  %1205 = vmatprep.subr.mxu0 0.0
  %1206 = vmatpush1.msra.mxu0 0.0
  %1207 = vmatprep.subr.mxu0 0.0
  %1208 = vmatpush1.msra.mxu0 0.0
  %1209 = vmatprep.subr.mxu0 0.0
  %1210 = vmatpush1.msra.mxu0 0.0
  %1211 = vmatprep.subr.mxu0 0.0
  %1212 = vmatpush1.msra.mxu0 0.0
  %1213 = vmatprep.subr.mxu0 0.0
  %1214 = vmatpush1.msra.mxu0 0.0
  %1215 = vmatprep.subr.mxu0 0.0
  %1216 = vmatpush1.msra.mxu0 0.0
  %1217 = vmatprep.subr.mxu0 0.0
  %1218 = vmatpush1.msra.mxu0 0.0
  %1219 = vmatprep.subr.mxu0 0.0
  %1220 = vmatpush1.msra.mxu0 0.0
  %1221 = vmatprep.subr.mxu0 0.0
  %1222 = vmatpush1.msra.mxu0 0.0
  %1223 = vmatprep.subr.mxu0 0.0
  %1224 = vmatpush1.msra.mxu0 0.0
  %1225 = vmatprep.subr.mxu0 0.0
  %1226 = vmatpush1.msra.mxu0 0.0
  %1227 = vmatprep.subr.mxu0 0.0
  %1228 = vmatpush1.msra.mxu0 0.0
  %1229 = vmatprep.subr.mxu0 0.0
  %1230 = vmatpush1.msra.mxu0 0.0
  %1231 = vmatprep.subr.mxu0 0.0
  %1232 = vmatpush1.msra.mxu0 0.0
  %1233 = vmatprep.subr.mxu0 0.0
  %1234 = vmatpush1.msra.mxu0 0.0
  %1235 = vmatprep.subr.mxu0 0.0
  %1236 = vmatpush1.msra.mxu0 0.0
  %1237 = vmatprep.subr.mxu0 0.0
  %1238 = vmatpush1.msra.mxu0 0.0
  %1239 = vmatprep.subr.mxu0 0.0
  %1240 = vmatpush1.msra.mxu0 0.0
  %1241 = vmatprep.subr.mxu0 0.0
  %1242 = vmatpush1.msra.mxu0 0.0
  %1243 = vmatprep.subr.mxu0 0.0
  %1244 = vmatpush1.msra.mxu0 0.0
  %1245 = vmatprep.subr.mxu0 0.0
  %1246 = vmatpush1.msra.mxu0 0.0
  %1247 = vmatprep.subr.mxu0 0.0
  %1248 = vmatpush1.msra.mxu0 0.0
  %1249 = vmatprep.subr.mxu0 0.0
  %1250 = vmatpush1.msra.mxu0 0.0
  %1251 = vmatprep.subr.mxu0 0.0
  %1252 = vmatpush1.msra.mxu0 0.0
  %1253 = vmatprep.subr.mxu0 0.0
  %1254 = vmatpush1.msra.mxu0 0.0
  %1255 = vmatprep.subr.mxu0 0.0
  %1256 = vmatpush1.msra.mxu0 0.0
  %1257 = vmatprep.subr.mxu0 0.0
  %1258 = vmatpush1.msra.mxu0 0.0
  %1259 = vmatprep.subr.mxu0 0.0
  %1260 = vmatpush1.msra.mxu0 0.0
  %1261 = vmatprep.subr.mxu0 0.0
  %1262 = vmatpush1.msra.mxu0 0.0
  %1263 = vmatprep.subr.mxu0 0.0
  %1264 = vmatpush1.msra.mxu0 0.0
  %1265 = vmatprep.mubr.f32.mxu0 0.0
  %1266 = vmatmul.mubr.f32.gmra.mrb[0].mxu0 %v1191
  %v1267 = vpop.f32.mrb[0].mxu0
  %v1268 = vadd.f32 0.0, %v1267
  %v1269 = vpop.f32.mrb[0].mxu0
  %v1270 = vadd.f32 0.0, %v1269
  %1271 = vdwg.mxu0
  %1272 = vmatprep.subr.mxu0 %v1199
  %1273 = vmatpush1.msra.mxu0 %v1197
  %1274 = vmatprep.subr.mxu0 0.0
  %1275 = vmatpush1.msra.mxu0 0.0
  %1276 = vmatprep.subr.mxu0 0.0
  %1277 = vmatpush1.msra.mxu0 0.0
  %1278 = vmatprep.subr.mxu0 0.0
  %1279 = vmatpush1.msra.mxu0 0.0
  %1280 = vmatprep.subr.mxu0 0.0
  %1281 = vmatpush1.msra.mxu0 0.0
  %1282 = vmatprep.subr.mxu0 0.0
  %1283 = vmatpush1.msra.mxu0 0.0
  %1284 = vmatprep.subr.mxu0 0.0
  %1285 = vmatpush1.msra.mxu0 0.0
  %1286 = vmatprep.subr.mxu0 0.0
  %1287 = vmatpush1.msra.mxu0 0.0
  %1288 = vmatprep.subr.mxu0 0.0
  %1289 = vmatpush1.msra.mxu0 0.0
  %1290 = vmatprep.subr.mxu0 0.0
  %1291 = vmatpush1.msra.mxu0 0.0
  %1292 = vmatprep.subr.mxu0 0.0
  %1293 = vmatpush1.msra.mxu0 0.0
  %1294 = vmatprep.subr.mxu0 0.0
  %1295 = vmatpush1.msra.mxu0 0.0
  %1296 = vmatprep.subr.mxu0 0.0
  %1297 = vmatpush1.msra.mxu0 0.0
  %1298 = vmatprep.subr.mxu0 0.0
  %1299 = vmatpush1.msra.mxu0 0.0
  %1300 = vmatprep.subr.mxu0 0.0
  %1301 = vmatpush1.msra.mxu0 0.0
  %1302 = vmatprep.subr.mxu0 0.0
  %1303 = vmatpush1.msra.mxu0 0.0
  %1304 = vmatprep.subr.mxu0 0.0
  %1305 = vmatpush1.msra.mxu0 0.0
  %1306 = vmatprep.subr.mxu0 0.0
  %1307 = vmatpush1.msra.mxu0 0.0
  %1308 = vmatprep.subr.mxu0 0.0
  %1309 = vmatpush1.msra.mxu0 0.0
  %1310 = vmatprep.subr.mxu0 0.0
  %1311 = vmatpush1.msra.mxu0 0.0
  %1312 = vmatprep.subr.mxu0 0.0
  %1313 = vmatpush1.msra.mxu0 0.0
  %1314 = vmatprep.subr.mxu0 0.0
  %1315 = vmatpush1.msra.mxu0 0.0
  %1316 = vmatprep.subr.mxu0 0.0
  %1317 = vmatpush1.msra.mxu0 0.0
  %1318 = vmatprep.subr.mxu0 0.0
  %1319 = vmatpush1.msra.mxu0 0.0
  %1320 = vmatprep.subr.mxu0 0.0
  %1321 = vmatpush1.msra.mxu0 0.0
  %1322 = vmatprep.subr.mxu0 0.0
  %1323 = vmatpush1.msra.mxu0 0.0
  %1324 = vmatprep.subr.mxu0 0.0
  %1325 = vmatpush1.msra.mxu0 0.0
  %1326 = vmatprep.subr.mxu0 0.0
  %1327 = vmatpush1.msra.mxu0 0.0
  %1328 = vmatprep.subr.mxu0 0.0
  %1329 = vmatpush1.msra.mxu0 0.0
  %1330 = vmatprep.subr.mxu0 0.0
  %1331 = vmatpush1.msra.mxu0 0.0
  %1332 = vmatprep.subr.mxu0 0.0
  %1333 = vmatpush1.msra.mxu0 0.0
  %1334 = vmatprep.subr.mxu0 0.0
  %1335 = vmatpush1.msra.mxu0 0.0
  %1336 = vmatprep.mubr.f32.mxu0 0.0
  %1337 = vmatmul.mubr.f32.gmra.mrb[0].mxu0 %v1191
  %v1338 = vpop.f32.mrb[0].mxu0
  %v1339 = vadd.f32 0.0, %v1338
  %v1340 = vpop.f32.mrb[0].mxu0
  %v1341 = vadd.f32 0.0, %v1340
  %1342 = vdwg.mxu0
  %v1343 = vadd.f32 %v1125, %v1268
  %v1344 = vadd.f32 %v1126, %v1270
  %v1345 = vadd.f32 %v1127, %v1339
  %v1346 = vadd.f32 %v1128, %v1341
  %v1347 = vld [vmem:[#allocation2 + $0x4] sm:$0xff]
  %v1348 = vld [vmem:[#allocation2 + $0xc] sm:$0xff]
  %v1349 = vld [vmem:[#allocation2 + $0x14] sm:$0xf]
  %v1350 = vlaneseq
  %v1351 = vshrl.u32 %v1350, 7
  %v1352 = vsub.s32 6, %v1351
  %v1353 = vrot.slane %v55, %v1352
  %v1354 = vlaneseq
  %v1355 = vshrl.u32 %v1354, 7
  %v1356 = vsub.s32 6, %v1355
  %v1357 = vrot.slane %v56, %v1356
  %v1358 = vlaneseq
  %v1359 = vshrl.u32 %v1358, 7
  %v1360 = vsub.s32 6, %v1359
  %v1361 = vrot.slane %v57, %v1360
  %v1362 = vlaneseq
  %v1363 = vshrl.u32 %v1362, 7
  %v1364 = vsub.s32 6, %v1363
  %v1365 = vrot.slane %v58, %v1364
  %v1370 = vcombine.low %v1353, %v1357
  %v1371 = vcombine.low %v1361, %v1365
  %1372 = vrot.lane.b32.xlu0 %v1370, 15
  %v1373 = vpop.permute.xlu0 %1372
  %1374 = vrot.lane.b32.xlu0 %v1371, 15
  %v1375 = vpop.permute.xlu0 %1374
  %v1376 = vrot.slane %v1373, 4
  %v1377 = vrot.slane %v1375, 4
  %v1378 = vsel %vm556, %v1376, %v1373
  %v1379 = vsel %vm101, %v1376, %v1377
  %v1380 = vsel %vm556, %v1379, %v1375
  %v1384 = vmul.f32 %v1347, %v1378
  %v1385 = vmul.f32 %v1348, %v1380
  %v1386 = vmul.f32 %v1349, %v1377
  %s1387 = scalar_lea.vmem %s2, 24
  %v1388 = vld [vmem:[%s1387] sm:$0xf]
  %v1392 = vcombine.high %v1384, %v1384
  %v1393 = vcombine.high %v1385, %v1385
  %1394 = vrot.lane.b32.xlu0 %v1384, 113
  %v1395 = vpop.permute.xlu0 %1394
  %1396 = vrot.lane.b32.xlu0 %v1392, 113
  %v1397 = vpop.permute.xlu0 %1396
  %1398 = vrot.lane.b32.xlu0 %v1385, 113
  %v1399 = vpop.permute.xlu0 %1398
  %1400 = vrot.lane.b32.xlu0 %v1393, 113
  %v1401 = vpop.permute.xlu0 %1400
  %1402 = vrot.lane.b32.xlu0 %v1386, 113
  %v1403 = vpop.permute.xlu0 %1402
  %v1404 = vsel %vm529, %v1395, %v1397
  %v1405 = vsel %vm529, %v1397, %v1399
  %v1406 = vsel %vm529, %v1399, %v1401
  %v1407 = vsel %vm529, %v1401, %v1403
  %v1409 = vsel %vm171, %v1388, 0
  %v1411 = vsel %vm101, %v1404, 0
  %v1413 = vsel %vm101, %v1405, 0
  %v1415 = vsel %vm101, %v1406, 0
  %v1417 = vsel %vm101, %v1407, 0
  %1419 = vmatprep.subr.mxu0 %v1413
  %1420 = vmatpush1.msra.mxu0 %v1411
  %1421 = vmatprep.subr.mxu0 0.0
  %1422 = vmatpush1.msra.mxu0 0.0
  %1423 = vmatprep.subr.mxu0 0.0
  %1424 = vmatpush1.msra.mxu0 0.0
  %1425 = vmatprep.subr.mxu0 0.0
  %1426 = vmatpush1.msra.mxu0 0.0
  %1427 = vmatprep.subr.mxu0 0.0
  %1428 = vmatpush1.msra.mxu0 0.0
  %1429 = vmatprep.subr.mxu0 0.0
  %1430 = vmatpush1.msra.mxu0 0.0
  %1431 = vmatprep.subr.mxu0 0.0
  %1432 = vmatpush1.msra.mxu0 0.0
  %1433 = vmatprep.subr.mxu0 0.0
  %1434 = vmatpush1.msra.mxu0 0.0
  %1435 = vmatprep.subr.mxu0 0.0
  %1436 = vmatpush1.msra.mxu0 0.0
  %1437 = vmatprep.subr.mxu0 0.0
  %1438 = vmatpush1.msra.mxu0 0.0
  %1439 = vmatprep.subr.mxu0 0.0
  %1440 = vmatpush1.msra.mxu0 0.0
  %1441 = vmatprep.subr.mxu0 0.0
  %1442 = vmatpush1.msra.mxu0 0.0
  %1443 = vmatprep.subr.mxu0 0.0
  %1444 = vmatpush1.msra.mxu0 0.0
  %1445 = vmatprep.subr.mxu0 0.0
  %1446 = vmatpush1.msra.mxu0 0.0
  %1447 = vmatprep.subr.mxu0 0.0
  %1448 = vmatpush1.msra.mxu0 0.0
  %1449 = vmatprep.subr.mxu0 0.0
  %1450 = vmatpush1.msra.mxu0 0.0
  %1451 = vmatprep.subr.mxu0 0.0
  %1452 = vmatpush1.msra.mxu0 0.0
  %1453 = vmatprep.subr.mxu0 0.0
  %1454 = vmatpush1.msra.mxu0 0.0
  %1455 = vmatprep.subr.mxu0 0.0
  %1456 = vmatpush1.msra.mxu0 0.0
  %1457 = vmatprep.subr.mxu0 0.0
  %1458 = vmatpush1.msra.mxu0 0.0
  %1459 = vmatprep.subr.mxu0 0.0
  %1460 = vmatpush1.msra.mxu0 0.0
  %1461 = vmatprep.subr.mxu0 0.0
  %1462 = vmatpush1.msra.mxu0 0.0
  %1463 = vmatprep.subr.mxu0 0.0
  %1464 = vmatpush1.msra.mxu0 0.0
  %1465 = vmatprep.subr.mxu0 0.0
  %1466 = vmatpush1.msra.mxu0 0.0
  %1467 = vmatprep.subr.mxu0 0.0
  %1468 = vmatpush1.msra.mxu0 0.0
  %1469 = vmatprep.subr.mxu0 0.0
  %1470 = vmatpush1.msra.mxu0 0.0
  %1471 = vmatprep.subr.mxu0 0.0
  %1472 = vmatpush1.msra.mxu0 0.0
  %1473 = vmatprep.subr.mxu0 0.0
  %1474 = vmatpush1.msra.mxu0 0.0
  %1475 = vmatprep.subr.mxu0 0.0
  %1476 = vmatpush1.msra.mxu0 0.0
  %1477 = vmatprep.subr.mxu0 0.0
  %1478 = vmatpush1.msra.mxu0 0.0
  %1479 = vmatprep.subr.mxu0 0.0
  %1480 = vmatpush1.msra.mxu0 0.0
  %1481 = vmatprep.subr.mxu0 0.0
  %1482 = vmatpush1.msra.mxu0 0.0
  %1483 = vmatprep.mubr.f32.mxu0 0.0
  %1484 = vmatmul.mubr.f32.gmra.mrb[0].mxu0 %v1409
  %v1485 = vpop.f32.mrb[0].mxu0
  %v1486 = vadd.f32 0.0, %v1485
  %v1487 = vpop.f32.mrb[0].mxu0
  %v1488 = vadd.f32 0.0, %v1487
  %1489 = vdwg.mxu0
  %1490 = vmatprep.subr.mxu0 %v1417
  %1491 = vmatpush1.msra.mxu0 %v1415
  %1492 = vmatprep.subr.mxu0 0.0
  %1493 = vmatpush1.msra.mxu0 0.0
  %1494 = vmatprep.subr.mxu0 0.0
  %1495 = vmatpush1.msra.mxu0 0.0
  %1496 = vmatprep.subr.mxu0 0.0
  %1497 = vmatpush1.msra.mxu0 0.0
  %1498 = vmatprep.subr.mxu0 0.0
  %1499 = vmatpush1.msra.mxu0 0.0
  %1500 = vmatprep.subr.mxu0 0.0
  %1501 = vmatpush1.msra.mxu0 0.0
  %1502 = vmatprep.subr.mxu0 0.0
  %1503 = vmatpush1.msra.mxu0 0.0
  %1504 = vmatprep.subr.mxu0 0.0
  %1505 = vmatpush1.msra.mxu0 0.0
  %1506 = vmatprep.subr.mxu0 0.0
  %1507 = vmatpush1.msra.mxu0 0.0
  %1508 = vmatprep.subr.mxu0 0.0
  %1509 = vmatpush1.msra.mxu0 0.0
  %1510 = vmatprep.subr.mxu0 0.0
  %1511 = vmatpush1.msra.mxu0 0.0
  %1512 = vmatprep.subr.mxu0 0.0
  %1513 = vmatpush1.msra.mxu0 0.0
  %1514 = vmatprep.subr.mxu0 0.0
  %1515 = vmatpush1.msra.mxu0 0.0
  %1516 = vmatprep.subr.mxu0 0.0
  %1517 = vmatpush1.msra.mxu0 0.0
  %1518 = vmatprep.subr.mxu0 0.0
  %1519 = vmatpush1.msra.mxu0 0.0
  %1520 = vmatprep.subr.mxu0 0.0
  %1521 = vmatpush1.msra.mxu0 0.0
  %1522 = vmatprep.subr.mxu0 0.0
  %1523 = vmatpush1.msra.mxu0 0.0
  %1524 = vmatprep.subr.mxu0 0.0
  %1525 = vmatpush1.msra.mxu0 0.0
  %1526 = vmatprep.subr.mxu0 0.0
  %1527 = vmatpush1.msra.mxu0 0.0
  %1528 = vmatprep.subr.mxu0 0.0
  %1529 = vmatpush1.msra.mxu0 0.0
  %1530 = vmatprep.subr.mxu0 0.0
  %1531 = vmatpush1.msra.mxu0 0.0
  %1532 = vmatprep.subr.mxu0 0.0
  %1533 = vmatpush1.msra.mxu0 0.0
  %1534 = vmatprep.subr.mxu0 0.0
  %1535 = vmatpush1.msra.mxu0 0.0
  %1536 = vmatprep.subr.mxu0 0.0
  %1537 = vmatpush1.msra.mxu0 0.0
  %1538 = vmatprep.subr.mxu0 0.0
  %1539 = vmatpush1.msra.mxu0 0.0
  %1540 = vmatprep.subr.mxu0 0.0
  %1541 = vmatpush1.msra.mxu0 0.0
  %1542 = vmatprep.subr.mxu0 0.0
  %1543 = vmatpush1.msra.mxu0 0.0
  %1544 = vmatprep.subr.mxu0 0.0
  %1545 = vmatpush1.msra.mxu0 0.0
  %1546 = vmatprep.subr.mxu0 0.0
  %1547 = vmatpush1.msra.mxu0 0.0
  %1548 = vmatprep.subr.mxu0 0.0
  %1549 = vmatpush1.msra.mxu0 0.0
  %1550 = vmatprep.subr.mxu0 0.0
  %1551 = vmatpush1.msra.mxu0 0.0
  %1552 = vmatprep.subr.mxu0 0.0
  %1553 = vmatpush1.msra.mxu0 0.0
  %1554 = vmatprep.mubr.f32.mxu0 0.0
  %1555 = vmatmul.mubr.f32.gmra.mrb[0].mxu0 %v1409
  %v1556 = vpop.f32.mrb[0].mxu0
  %v1557 = vadd.f32 0.0, %v1556
  %v1558 = vpop.f32.mrb[0].mxu0
  %v1559 = vadd.f32 0.0, %v1558
  %1560 = vdwg.mxu0
  %v1561 = vadd.f32 %v1343, %v1486
  %v1562 = vadd.f32 %v1344, %v1488
  %v1563 = vadd.f32 %v1345, %v1557
  %v1564 = vadd.f32 %v1346, %v1559
  %v1565 = vld [vmem:[#allocation2 + $0x4] sm:$0xff]
  %v1566 = vld [vmem:[#allocation2 + $0xc] sm:$0xff]
  %v1567 = vld [vmem:[#allocation2 + $0x14] sm:$0xf]
  %v1568 = vlaneseq
  %v1569 = vshrl.u32 %v1568, 7
  %v1570 = vsub.s32 7, %v1569
  %v1571 = vrot.slane %v55, %v1570
  %v1572 = vlaneseq
  %v1573 = vshrl.u32 %v1572, 7
  %v1574 = vsub.s32 7, %v1573
  %v1575 = vrot.slane %v56, %v1574
  %v1576 = vlaneseq
  %v1577 = vshrl.u32 %v1576, 7
  %v1578 = vsub.s32 7, %v1577
  %v1579 = vrot.slane %v57, %v1578
  %v1580 = vlaneseq
  %v1581 = vshrl.u32 %v1580, 7
  %v1582 = vsub.s32 7, %v1581
  %v1583 = vrot.slane %v58, %v1582
  %v1588 = vcombine.low %v1571, %v1575
  %v1589 = vcombine.low %v1579, %v1583
  %1590 = vrot.lane.b32.xlu0 %v1588, 16
  %v1591 = vpop.permute.xlu0 %1590
  %1592 = vrot.lane.b32.xlu0 %v1589, 16
  %v1593 = vpop.permute.xlu0 %1592
  %v1594 = vrot.slane %v1591, 4
  %v1595 = vrot.slane %v1593, 4
  %v1596 = vsel %vm166, %v1594, %v1591
  %v1597 = vsel %vm101, %v1594, %v1595
  %v1598 = vsel %vm166, %v1597, %v1593
  %v1602 = vmul.f32 %v1565, %v1596
  %v1603 = vmul.f32 %v1566, %v1598
  %v1604 = vmul.f32 %v1567, %v1595
  %s1605 = scalar_lea.vmem %s2, 28
  %v1606 = vld [vmem:[%s1605] sm:$0xf]
  %v1610 = vcombine.high %v1602, %v1602
  %v1611 = vcombine.high %v1603, %v1603
  %1612 = vrot.lane.b32.xlu0 %v1602, 112
  %v1613 = vpop.permute.xlu0 %1612
  %1614 = vrot.lane.b32.xlu0 %v1610, 112
  %v1615 = vpop.permute.xlu0 %1614
  %1616 = vrot.lane.b32.xlu0 %v1603, 112
  %v1617 = vpop.permute.xlu0 %1616
  %1618 = vrot.lane.b32.xlu0 %v1611, 112
  %v1619 = vpop.permute.xlu0 %1618
  %1620 = vrot.lane.b32.xlu0 %v1604, 112
  %v1621 = vpop.permute.xlu0 %1620
  %v1622 = vsel %vm139, %v1613, %v1615
  %v1623 = vsel %vm139, %v1615, %v1617
  %v1624 = vsel %vm139, %v1617, %v1619
  %v1625 = vsel %vm139, %v1619, %v1621
  %v1627 = vsel %vm171, %v1606, 0
  %v1629 = vsel %vm101, %v1622, 0
  %v1631 = vsel %vm101, %v1623, 0
  %v1633 = vsel %vm101, %v1624, 0
  %v1635 = vsel %vm101, %v1625, 0
  %1637 = vmatprep.subr.mxu0 %v1631
  %1638 = vmatpush1.msra.mxu0 %v1629
  %1639 = vmatprep.subr.mxu0 0.0
  %1640 = vmatpush1.msra.mxu0 0.0
  %1641 = vmatprep.subr.mxu0 0.0
  %1642 = vmatpush1.msra.mxu0 0.0
  %1643 = vmatprep.subr.mxu0 0.0
  %1644 = vmatpush1.msra.mxu0 0.0
  %1645 = vmatprep.subr.mxu0 0.0
  %1646 = vmatpush1.msra.mxu0 0.0
  %1647 = vmatprep.subr.mxu0 0.0
  %1648 = vmatpush1.msra.mxu0 0.0
  %1649 = vmatprep.subr.mxu0 0.0
  %1650 = vmatpush1.msra.mxu0 0.0
  %1651 = vmatprep.subr.mxu0 0.0
  %1652 = vmatpush1.msra.mxu0 0.0
  %1653 = vmatprep.subr.mxu0 0.0
  %1654 = vmatpush1.msra.mxu0 0.0
  %1655 = vmatprep.subr.mxu0 0.0
  %1656 = vmatpush1.msra.mxu0 0.0
  %1657 = vmatprep.subr.mxu0 0.0
  %1658 = vmatpush1.msra.mxu0 0.0
  %1659 = vmatprep.subr.mxu0 0.0
  %1660 = vmatpush1.msra.mxu0 0.0
  %1661 = vmatprep.subr.mxu0 0.0
  %1662 = vmatpush1.msra.mxu0 0.0
  %1663 = vmatprep.subr.mxu0 0.0
  %1664 = vmatpush1.msra.mxu0 0.0
  %1665 = vmatprep.subr.mxu0 0.0
  %1666 = vmatpush1.msra.mxu0 0.0
  %1667 = vmatprep.subr.mxu0 0.0
  %1668 = vmatpush1.msra.mxu0 0.0
  %1669 = vmatprep.subr.mxu0 0.0
  %1670 = vmatpush1.msra.mxu0 0.0
  %1671 = vmatprep.subr.mxu0 0.0
  %1672 = vmatpush1.msra.mxu0 0.0
  %1673 = vmatprep.subr.mxu0 0.0
  %1674 = vmatpush1.msra.mxu0 0.0
  %1675 = vmatprep.subr.mxu0 0.0
  %1676 = vmatpush1.msra.mxu0 0.0
  %1677 = vmatprep.subr.mxu0 0.0
  %1678 = vmatpush1.msra.mxu0 0.0
  %1679 = vmatprep.subr.mxu0 0.0
  %1680 = vmatpush1.msra.mxu0 0.0
  %1681 = vmatprep.subr.mxu0 0.0
  %1682 = vmatpush1.msra.mxu0 0.0
  %1683 = vmatprep.subr.mxu0 0.0
  %1684 = vmatpush1.msra.mxu0 0.0
  %1685 = vmatprep.subr.mxu0 0.0
  %1686 = vmatpush1.msra.mxu0 0.0
  %1687 = vmatprep.subr.mxu0 0.0
  %1688 = vmatpush1.msra.mxu0 0.0
  %1689 = vmatprep.subr.mxu0 0.0
  %1690 = vmatpush1.msra.mxu0 0.0
  %1691 = vmatprep.subr.mxu0 0.0
  %1692 = vmatpush1.msra.mxu0 0.0
  %1693 = vmatprep.subr.mxu0 0.0
  %1694 = vmatpush1.msra.mxu0 0.0
  %1695 = vmatprep.subr.mxu0 0.0
  %1696 = vmatpush1.msra.mxu0 0.0
  %1697 = vmatprep.subr.mxu0 0.0
  %1698 = vmatpush1.msra.mxu0 0.0
  %1699 = vmatprep.subr.mxu0 0.0
  %1700 = vmatpush1.msra.mxu0 0.0
  %1701 = vmatprep.mubr.f32.mxu0 0.0
  %1702 = vmatmul.mubr.f32.gmra.mrb[0].mxu0 %v1627
  %v1703 = vpop.f32.mrb[0].mxu0
  %v1704 = vadd.f32 0.0, %v1703
  %v1705 = vpop.f32.mrb[0].mxu0
  %v1706 = vadd.f32 0.0, %v1705
  %1707 = vdwg.mxu0
  %1708 = vmatprep.subr.mxu0 %v1635
  %1709 = vmatpush1.msra.mxu0 %v1633
  %1710 = vmatprep.subr.mxu0 0.0
  %1711 = vmatpush1.msra.mxu0 0.0
  %1712 = vmatprep.subr.mxu0 0.0
  %1713 = vmatpush1.msra.mxu0 0.0
  %1714 = vmatprep.subr.mxu0 0.0
  %1715 = vmatpush1.msra.mxu0 0.0
  %1716 = vmatprep.subr.mxu0 0.0
  %1717 = vmatpush1.msra.mxu0 0.0
  %1718 = vmatprep.subr.mxu0 0.0
  %1719 = vmatpush1.msra.mxu0 0.0
  %1720 = vmatprep.subr.mxu0 0.0
  %1721 = vmatpush1.msra.mxu0 0.0
  %1722 = vmatprep.subr.mxu0 0.0
  %1723 = vmatpush1.msra.mxu0 0.0
  %1724 = vmatprep.subr.mxu0 0.0
  %1725 = vmatpush1.msra.mxu0 0.0
  %1726 = vmatprep.subr.mxu0 0.0
  %1727 = vmatpush1.msra.mxu0 0.0
  %1728 = vmatprep.subr.mxu0 0.0
  %1729 = vmatpush1.msra.mxu0 0.0
  %1730 = vmatprep.subr.mxu0 0.0
  %1731 = vmatpush1.msra.mxu0 0.0
  %1732 = vmatprep.subr.mxu0 0.0
  %1733 = vmatpush1.msra.mxu0 0.0
  %1734 = vmatprep.subr.mxu0 0.0
  %1735 = vmatpush1.msra.mxu0 0.0
  %1736 = vmatprep.subr.mxu0 0.0
  %1737 = vmatpush1.msra.mxu0 0.0
  %1738 = vmatprep.subr.mxu0 0.0
  %1739 = vmatpush1.msra.mxu0 0.0
  %1740 = vmatprep.subr.mxu0 0.0
  %1741 = vmatpush1.msra.mxu0 0.0
  %1742 = vmatprep.subr.mxu0 0.0
  %1743 = vmatpush1.msra.mxu0 0.0
  %1744 = vmatprep.subr.mxu0 0.0
  %1745 = vmatpush1.msra.mxu0 0.0
  %1746 = vmatprep.subr.mxu0 0.0
  %1747 = vmatpush1.msra.mxu0 0.0
  %1748 = vmatprep.subr.mxu0 0.0
  %1749 = vmatpush1.msra.mxu0 0.0
  %1750 = vmatprep.subr.mxu0 0.0
  %1751 = vmatpush1.msra.mxu0 0.0
  %1752 = vmatprep.subr.mxu0 0.0
  %1753 = vmatpush1.msra.mxu0 0.0
  %1754 = vmatprep.subr.mxu0 0.0
  %1755 = vmatpush1.msra.mxu0 0.0
  %1756 = vmatprep.subr.mxu0 0.0
  %1757 = vmatpush1.msra.mxu0 0.0
  %1758 = vmatprep.subr.mxu0 0.0
  %1759 = vmatpush1.msra.mxu0 0.0
  %1760 = vmatprep.subr.mxu0 0.0
  %1761 = vmatpush1.msra.mxu0 0.0
  %1762 = vmatprep.subr.mxu0 0.0
  %1763 = vmatpush1.msra.mxu0 0.0
  %1764 = vmatprep.subr.mxu0 0.0
  %1765 = vmatpush1.msra.mxu0 0.0
  %1766 = vmatprep.subr.mxu0 0.0
  %1767 = vmatpush1.msra.mxu0 0.0
  %1768 = vmatprep.subr.mxu0 0.0
  %1769 = vmatpush1.msra.mxu0 0.0
  %1770 = vmatprep.subr.mxu0 0.0
  %1771 = vmatpush1.msra.mxu0 0.0
  %1772 = vmatprep.mubr.f32.mxu0 0.0
  %1773 = vmatmul.mubr.f32.gmra.mrb[0].mxu0 %v1627
  %v1774 = vpop.f32.mrb[0].mxu0
  %v1775 = vadd.f32 0.0, %v1774
  %v1776 = vpop.f32.mrb[0].mxu0
  %v1777 = vadd.f32 0.0, %v1776
  %1778 = vdwg.mxu0
  %v1779 = vadd.f32 %v1561, %v1704
  %v1780 = vadd.f32 %v1562, %v1706
  %v1781 = vadd.f32 %v1563, %v1775
  %v1782 = vadd.f32 %v1564, %v1777
  %v1783 = vld [vmem:[#allocation2 + $0x4] sm:$0xff]
  %v1784 = vld [vmem:[#allocation2 + $0xc] sm:$0xff]
  %v1785 = vld [vmem:[#allocation2 + $0x14] sm:$0xf]
  %v1786 = vlaneseq
  %v1787 = vshrl.u32 %v1786, 7
  %v1788 = vsub.s32 0, %v1787
  %v1789 = vrot.slane %v59, %v1788
  %v1790 = vlaneseq
  %v1791 = vshrl.u32 %v1790, 7
  %v1792 = vsub.s32 0, %v1791
  %v1793 = vrot.slane %v60, %v1792
  %v1794 = vlaneseq
  %v1795 = vshrl.u32 %v1794, 7
  %v1796 = vsub.s32 0, %v1795
  %v1797 = vrot.slane %v61, %v1796
  %v1798 = vlaneseq
  %v1799 = vshrl.u32 %v1798, 7
  %v1800 = vsub.s32 0, %v1799
  %v1801 = vrot.slane %v62, %v1800
  %v1806 = vcombine.low %v1789, %v1793
  %v1807 = vcombine.low %v1797, %v1801
  %1808 = vrot.lane.b32.xlu0 %v1806, 17
  %v1809 = vpop.permute.xlu0 %1808
  %1810 = vrot.lane.b32.xlu0 %v1807, 17
  %v1811 = vpop.permute.xlu0 %1810
  %v1812 = vrot.slane %v1809, 4
  %v1813 = vrot.slane %v1811, 4
  %v1814 = vsel %vm340, %v1812, %v1809
  %v1815 = vsel %vm101, %v1812, %v1813
  %v1816 = vsel %vm340, %v1815, %v1811
  %v1820 = vmul.f32 %v1783, %v1814
  %v1821 = vmul.f32 %v1784, %v1816
  %v1822 = vmul.f32 %v1785, %v1813
  %s1823 = scalar_lea.vmem %s2, 32
  %v1824 = vld [vmem:[%s1823] sm:$0xf]
  %v1828 = vcombine.high %v1820, %v1820
  %v1829 = vcombine.high %v1821, %v1821
  %1830 = vrot.lane.b32.xlu0 %v1820, 111
  %v1831 = vpop.permute.xlu0 %1830
  %1832 = vrot.lane.b32.xlu0 %v1828, 111
  %v1833 = vpop.permute.xlu0 %1832
  %1834 = vrot.lane.b32.xlu0 %v1821, 111
  %v1835 = vpop.permute.xlu0 %1834
  %1836 = vrot.lane.b32.xlu0 %v1829, 111
  %v1837 = vpop.permute.xlu0 %1836
  %1838 = vrot.lane.b32.xlu0 %v1822, 111
  %v1839 = vpop.permute.xlu0 %1838
  %v1840 = vsel %vm99, %v1831, %v1833
  %v1841 = vsel %vm99, %v1833, %v1835
  %v1842 = vsel %vm99, %v1835, %v1837
  %v1843 = vsel %vm99, %v1837, %v1839
  %v1845 = vsel %vm171, %v1824, 0
  %v1847 = vsel %vm101, %v1840, 0
  %v1849 = vsel %vm101, %v1841, 0
  %v1851 = vsel %vm101, %v1842, 0
  %v1853 = vsel %vm101, %v1843, 0
  %1855 = vmatprep.subr.mxu0 %v1849
  %1856 = vmatpush1.msra.mxu0 %v1847
  %1857 = vmatprep.subr.mxu0 0.0
  %1858 = vmatpush1.msra.mxu0 0.0
  %1859 = vmatprep.subr.mxu0 0.0
  %1860 = vmatpush1.msra.mxu0 0.0
  %1861 = vmatprep.subr.mxu0 0.0
  %1862 = vmatpush1.msra.mxu0 0.0
  %1863 = vmatprep.subr.mxu0 0.0
  %1864 = vmatpush1.msra.mxu0 0.0
  %1865 = vmatprep.subr.mxu0 0.0
  %1866 = vmatpush1.msra.mxu0 0.0
  %1867 = vmatprep.subr.mxu0 0.0
  %1868 = vmatpush1.msra.mxu0 0.0
  %1869 = vmatprep.subr.mxu0 0.0
  %1870 = vmatpush1.msra.mxu0 0.0
  %1871 = vmatprep.subr.mxu0 0.0
  %1872 = vmatpush1.msra.mxu0 0.0
  %1873 = vmatprep.subr.mxu0 0.0
  %1874 = vmatpush1.msra.mxu0 0.0
  %1875 = vmatprep.subr.mxu0 0.0
  %1876 = vmatpush1.msra.mxu0 0.0
  %1877 = vmatprep.subr.mxu0 0.0
  %1878 = vmatpush1.msra.mxu0 0.0
  %1879 = vmatprep.subr.mxu0 0.0
  %1880 = vmatpush1.msra.mxu0 0.0
  %1881 = vmatprep.subr.mxu0 0.0
  %1882 = vmatpush1.msra.mxu0 0.0
  %1883 = vmatprep.subr.mxu0 0.0
  %1884 = vmatpush1.msra.mxu0 0.0
  %1885 = vmatprep.subr.mxu0 0.0
  %1886 = vmatpush1.msra.mxu0 0.0
  %1887 = vmatprep.subr.mxu0 0.0
  %1888 = vmatpush1.msra.mxu0 0.0
  %1889 = vmatprep.subr.mxu0 0.0
  %1890 = vmatpush1.msra.mxu0 0.0
  %1891 = vmatprep.subr.mxu0 0.0
  %1892 = vmatpush1.msra.mxu0 0.0
  %1893 = vmatprep.subr.mxu0 0.0
  %1894 = vmatpush1.msra.mxu0 0.0
  %1895 = vmatprep.subr.mxu0 0.0
  %1896 = vmatpush1.msra.mxu0 0.0
  %1897 = vmatprep.subr.mxu0 0.0
  %1898 = vmatpush1.msra.mxu0 0.0
  %1899 = vmatprep.subr.mxu0 0.0
  %1900 = vmatpush1.msra.mxu0 0.0
  %1901 = vmatprep.subr.mxu0 0.0
  %1902 = vmatpush1.msra.mxu0 0.0
  %1903 = vmatprep.subr.mxu0 0.0
  %1904 = vmatpush1.msra.mxu0 0.0
  %1905 = vmatprep.subr.mxu0 0.0
  %1906 = vmatpush1.msra.mxu0 0.0
  %1907 = vmatprep.subr.mxu0 0.0
  %1908 = vmatpush1.msra.mxu0 0.0
  %1909 = vmatprep.subr.mxu0 0.0
  %1910 = vmatpush1.msra.mxu0 0.0
  %1911 = vmatprep.subr.mxu0 0.0
  %1912 = vmatpush1.msra.mxu0 0.0
  %1913 = vmatprep.subr.mxu0 0.0
  %1914 = vmatpush1.msra.mxu0 0.0
  %1915 = vmatprep.subr.mxu0 0.0
  %1916 = vmatpush1.msra.mxu0 0.0
  %1917 = vmatprep.subr.mxu0 0.0
  %1918 = vmatpush1.msra.mxu0 0.0
  %1919 = vmatprep.mubr.f32.mxu0 0.0
  %1920 = vmatmul.mubr.f32.gmra.mrb[0].mxu0 %v1845
  %v1921 = vpop.f32.mrb[0].mxu0
  %v1922 = vadd.f32 0.0, %v1921
  %v1923 = vpop.f32.mrb[0].mxu0
  %v1924 = vadd.f32 0.0, %v1923
  %1925 = vdwg.mxu0
  %1926 = vmatprep.subr.mxu0 %v1853
  %1927 = vmatpush1.msra.mxu0 %v1851
  %1928 = vmatprep.subr.mxu0 0.0
  %1929 = vmatpush1.msra.mxu0 0.0
  %1930 = vmatprep.subr.mxu0 0.0
  %1931 = vmatpush1.msra.mxu0 0.0
  %1932 = vmatprep.subr.mxu0 0.0
  %1933 = vmatpush1.msra.mxu0 0.0
  %1934 = vmatprep.subr.mxu0 0.0
  %1935 = vmatpush1.msra.mxu0 0.0
  %1936 = vmatprep.subr.mxu0 0.0
  %1937 = vmatpush1.msra.mxu0 0.0
  %1938 = vmatprep.subr.mxu0 0.0
  %1939 = vmatpush1.msra.mxu0 0.0
  %1940 = vmatprep.subr.mxu0 0.0
  %1941 = vmatpush1.msra.mxu0 0.0
  %1942 = vmatprep.subr.mxu0 0.0
  %1943 = vmatpush1.msra.mxu0 0.0
  %1944 = vmatprep.subr.mxu0 0.0
  %1945 = vmatpush1.msra.mxu0 0.0
  %1946 = vmatprep.subr.mxu0 0.0
  %1947 = vmatpush1.msra.mxu0 0.0
  %1948 = vmatprep.subr.mxu0 0.0
  %1949 = vmatpush1.msra.mxu0 0.0
  %1950 = vmatprep.subr.mxu0 0.0
  %1951 = vmatpush1.msra.mxu0 0.0
  %1952 = vmatprep.subr.mxu0 0.0
  %1953 = vmatpush1.msra.mxu0 0.0
  %1954 = vmatprep.subr.mxu0 0.0
  %1955 = vmatpush1.msra.mxu0 0.0
  %1956 = vmatprep.subr.mxu0 0.0
  %1957 = vmatpush1.msra.mxu0 0.0
  %1958 = vmatprep.subr.mxu0 0.0
  %1959 = vmatpush1.msra.mxu0 0.0
  %1960 = vmatprep.subr.mxu0 0.0
  %1961 = vmatpush1.msra.mxu0 0.0
  %1962 = vmatprep.subr.mxu0 0.0
  %1963 = vmatpush1.msra.mxu0 0.0
  %1964 = vmatprep.subr.mxu0 0.0
  %1965 = vmatpush1.msra.mxu0 0.0
  %1966 = vmatprep.subr.mxu0 0.0
  %1967 = vmatpush1.msra.mxu0 0.0
  %1968 = vmatprep.subr.mxu0 0.0
  %1969 = vmatpush1.msra.mxu0 0.0
  %1970 = vmatprep.subr.mxu0 0.0
  %1971 = vmatpush1.msra.mxu0 0.0
  %1972 = vmatprep.subr.mxu0 0.0
  %1973 = vmatpush1.msra.mxu0 0.0
  %1974 = vmatprep.subr.mxu0 0.0
  %1975 = vmatpush1.msra.mxu0 0.0
  %1976 = vmatprep.subr.mxu0 0.0
  %1977 = vmatpush1.msra.mxu0 0.0
  %1978 = vmatprep.subr.mxu0 0.0
  %1979 = vmatpush1.msra.mxu0 0.0
  %1980 = vmatprep.subr.mxu0 0.0
  %1981 = vmatpush1.msra.mxu0 0.0
  %1982 = vmatprep.subr.mxu0 0.0
  %1983 = vmatpush1.msra.mxu0 0.0
  %1984 = vmatprep.subr.mxu0 0.0
  %1985 = vmatpush1.msra.mxu0 0.0
  %1986 = vmatprep.subr.mxu0 0.0
  %1987 = vmatpush1.msra.mxu0 0.0
  %1988 = vmatprep.subr.mxu0 0.0
  %1989 = vmatpush1.msra.mxu0 0.0
  %1990 = vmatprep.mubr.f32.mxu0 0.0
  %1991 = vmatmul.mubr.f32.gmra.mrb[0].mxu0 %v1845
  %v1992 = vpop.f32.mrb[0].mxu0
  %v1993 = vadd.f32 0.0, %v1992
  %v1994 = vpop.f32.mrb[0].mxu0
  %v1995 = vadd.f32 0.0, %v1994
  %1996 = vdwg.mxu0
  %v1997 = vadd.f32 %v1779, %v1922
  %v1998 = vadd.f32 %v1780, %v1924
  %v1999 = vadd.f32 %v1781, %v1993
  %v2000 = vadd.f32 %v1782, %v1995
  %v2001 = vld [vmem:[%s3] sm:$0xf]
  %2003 = vset.pattern.permute.xlu0 0
  %2004 = vperm.xlu0 %2003, %v2001
  %v2005 = vpop.permute.xlu0 %2004
  %v2007 = vadd.f32 %v1997, %v2005
  %v2008 = vadd.f32 %v1998, %v2005
  %v2009 = vadd.f32 %v1999, %v2005
  %v2010 = vadd.f32 %v2000, %v2005
  %v2011 = vmax.f32 %v2007, 0.0
  %v2012 = vmax.f32 %v2008, 0.0
  %v2013 = vmax.f32 %v2009, 0.0
  %v2014 = vmax.f32 %v2010, 0.0
  %v2019 = vcombine.low %v2011, %v2012
  %v2020 = vcombine.low %v2013, %v2014
  %2023 = vst [vmem:[#allocation2 + $0x4] sm:$0xff] %v2019
  %2024 = vst [vmem:[#allocation2 + $0xc] sm:$0xff] %v2020
  %v2025 = vld [vmem:[#allocation2] sm:$0xff]
  %v2026 = vld [vmem:[#allocation2 + $0x8] sm:$0xff]
  %v2027 = vld [vmem:[#allocation2 + $0x10] sm:$0xf]
  %v2028 = vmul.f32 %v2025, %v100
  %v2029 = vmul.f32 %v2026, %v103
  %v2030 = vmul.f32 %v2027, %v98
  %v2031 = vld [vmem:[%s4] sm:$0xf]
  %v2032 = vmul.f32 %v2025, %v140
  %v2033 = vmul.f32 %v2026, %v142
  %v2034 = vmul.f32 %v2027, %v138
  %s2035 = scalar_lea.vmem %s4, 4
  %v2036 = vld [vmem:[%s2035] sm:$0xf]
  %v2040 = vcombine.high %v2032, %v2032
  %v2041 = vcombine.high %v2033, %v2033
  %2042 = vrot.lane.b32.xlu0 %v2032, 16
  %v2043 = vpop.permute.xlu0 %2042
  %2044 = vrot.lane.b32.xlu0 %v2040, 16
  %v2045 = vpop.permute.xlu0 %2044
  %2046 = vrot.lane.b32.xlu0 %v2033, 16
  %v2047 = vpop.permute.xlu0 %2046
  %2048 = vrot.lane.b32.xlu0 %v2041, 16
  %v2049 = vpop.permute.xlu0 %2048
  %2050 = vrot.lane.b32.xlu0 %v2034, 16
  %v2051 = vpop.permute.xlu0 %2050
  %v2052 = vsel %vm166, %v2043, %v2045
  %v2053 = vsel %vm166, %v2045, %v2047
  %v2054 = vsel %vm166, %v2047, %v2049
  %v2055 = vsel %vm166, %v2049, %v2051
  %v2057 = vsel %vm171, %v2036, 0
  %v2059 = vsel %vm101, %v2052, 0
  %v2061 = vsel %vm101, %v2053, 0
  %v2063 = vsel %vm101, %v2054, 0
  %v2065 = vsel %vm101, %v2055, 0
  %2067 = vmatprep.subr.mxu0 %v2061
  %2068 = vmatpush1.msra.mxu0 %v2059
  %2069 = vmatprep.subr.mxu0 0.0
  %2070 = vmatpush1.msra.mxu0 0.0
  %2071 = vmatprep.subr.mxu0 0.0
  %2072 = vmatpush1.msra.mxu0 0.0
  %2073 = vmatprep.subr.mxu0 0.0
  %2074 = vmatpush1.msra.mxu0 0.0
  %2075 = vmatprep.subr.mxu0 0.0
  %2076 = vmatpush1.msra.mxu0 0.0
  %2077 = vmatprep.subr.mxu0 0.0
  %2078 = vmatpush1.msra.mxu0 0.0
  %2079 = vmatprep.subr.mxu0 0.0
  %2080 = vmatpush1.msra.mxu0 0.0
  %2081 = vmatprep.subr.mxu0 0.0
  %2082 = vmatpush1.msra.mxu0 0.0
  %2083 = vmatprep.subr.mxu0 0.0
  %2084 = vmatpush1.msra.mxu0 0.0
  %2085 = vmatprep.subr.mxu0 0.0
  %2086 = vmatpush1.msra.mxu0 0.0
  %2087 = vmatprep.subr.mxu0 0.0
  %2088 = vmatpush1.msra.mxu0 0.0
  %2089 = vmatprep.subr.mxu0 0.0
  %2090 = vmatpush1.msra.mxu0 0.0
  %2091 = vmatprep.subr.mxu0 0.0
  %2092 = vmatpush1.msra.mxu0 0.0
  %2093 = vmatprep.subr.mxu0 0.0
  %2094 = vmatpush1.msra.mxu0 0.0
  %2095 = vmatprep.subr.mxu0 0.0
  %2096 = vmatpush1.msra.mxu0 0.0
  %2097 = vmatprep.subr.mxu0 0.0
  %2098 = vmatpush1.msra.mxu0 0.0
  %2099 = vmatprep.subr.mxu0 0.0
  %2100 = vmatpush1.msra.mxu0 0.0
  %2101 = vmatprep.subr.mxu0 0.0
  %2102 = vmatpush1.msra.mxu0 0.0
  %2103 = vmatprep.subr.mxu0 0.0
  %2104 = vmatpush1.msra.mxu0 0.0
  %2105 = vmatprep.subr.mxu0 0.0
  %2106 = vmatpush1.msra.mxu0 0.0
  %2107 = vmatprep.subr.mxu0 0.0
  %2108 = vmatpush1.msra.mxu0 0.0
  %2109 = vmatprep.subr.mxu0 0.0
  %2110 = vmatpush1.msra.mxu0 0.0
  %2111 = vmatprep.subr.mxu0 0.0
  %2112 = vmatpush1.msra.mxu0 0.0
  %2113 = vmatprep.subr.mxu0 0.0
  %2114 = vmatpush1.msra.mxu0 0.0
  %2115 = vmatprep.subr.mxu0 0.0
  %2116 = vmatpush1.msra.mxu0 0.0
  %2117 = vmatprep.subr.mxu0 0.0
  %2118 = vmatpush1.msra.mxu0 0.0
  %2119 = vmatprep.subr.mxu0 0.0
  %2120 = vmatpush1.msra.mxu0 0.0
  %2121 = vmatprep.subr.mxu0 0.0
  %2122 = vmatpush1.msra.mxu0 0.0
  %2123 = vmatprep.subr.mxu0 0.0
  %2124 = vmatpush1.msra.mxu0 0.0
  %2125 = vmatprep.subr.mxu0 0.0
  %2126 = vmatpush1.msra.mxu0 0.0
  %2127 = vmatprep.subr.mxu0 0.0
  %2128 = vmatpush1.msra.mxu0 0.0
  %2129 = vmatprep.subr.mxu0 0.0
  %2130 = vmatpush1.msra.mxu0 0.0
  %2131 = vmatprep.mubr.f32.mxu0 0.0
  %2132 = vmatmul.mubr.f32.gmra.mrb[0].mxu0 %v2057
  %v2133 = vpop.f32.mrb[0].mxu0
  %v2134 = vadd.f32 0.0, %v2133
  %v2135 = vpop.f32.mrb[0].mxu0
  %v2136 = vadd.f32 0.0, %v2135
  %2137 = vdwg.mxu0
  %2138 = vmatprep.subr.mxu0 %v2065
  %2139 = vmatpush1.msra.mxu0 %v2063
  %2140 = vmatprep.subr.mxu0 0.0
  %2141 = vmatpush1.msra.mxu0 0.0
  %2142 = vmatprep.subr.mxu0 0.0
  %2143 = vmatpush1.msra.mxu0 0.0
  %2144 = vmatprep.subr.mxu0 0.0
  %2145 = vmatpush1.msra.mxu0 0.0
  %2146 = vmatprep.subr.mxu0 0.0
  %2147 = vmatpush1.msra.mxu0 0.0
  %2148 = vmatprep.subr.mxu0 0.0
  %2149 = vmatpush1.msra.mxu0 0.0
  %2150 = vmatprep.subr.mxu0 0.0
  %2151 = vmatpush1.msra.mxu0 0.0
  %2152 = vmatprep.subr.mxu0 0.0
  %2153 = vmatpush1.msra.mxu0 0.0
  %2154 = vmatprep.subr.mxu0 0.0
  %2155 = vmatpush1.msra.mxu0 0.0
  %2156 = vmatprep.subr.mxu0 0.0
  %2157 = vmatpush1.msra.mxu0 0.0
  %2158 = vmatprep.subr.mxu0 0.0
  %2159 = vmatpush1.msra.mxu0 0.0
  %2160 = vmatprep.subr.mxu0 0.0
  %2161 = vmatpush1.msra.mxu0 0.0
  %2162 = vmatprep.subr.mxu0 0.0
  %2163 = vmatpush1.msra.mxu0 0.0
  %2164 = vmatprep.subr.mxu0 0.0
  %2165 = vmatpush1.msra.mxu0 0.0
  %2166 = vmatprep.subr.mxu0 0.0
  %2167 = vmatpush1.msra.mxu0 0.0
  %2168 = vmatprep.subr.mxu0 0.0
  %2169 = vmatpush1.msra.mxu0 0.0
  %2170 = vmatprep.subr.mxu0 0.0
  %2171 = vmatpush1.msra.mxu0 0.0
  %2172 = vmatprep.subr.mxu0 0.0
  %2173 = vmatpush1.msra.mxu0 0.0
  %2174 = vmatprep.subr.mxu0 0.0
  %2175 = vmatpush1.msra.mxu0 0.0
  %2176 = vmatprep.subr.mxu0 0.0
  %2177 = vmatpush1.msra.mxu0 0.0
  %2178 = vmatprep.subr.mxu0 0.0
  %2179 = vmatpush1.msra.mxu0 0.0
  %2180 = vmatprep.subr.mxu0 0.0
  %2181 = vmatpush1.msra.mxu0 0.0
  %2182 = vmatprep.subr.mxu0 0.0
  %2183 = vmatpush1.msra.mxu0 0.0
  %2184 = vmatprep.subr.mxu0 0.0
  %2185 = vmatpush1.msra.mxu0 0.0
  %2186 = vmatprep.subr.mxu0 0.0
  %2187 = vmatpush1.msra.mxu0 0.0
  %2188 = vmatprep.subr.mxu0 0.0
  %2189 = vmatpush1.msra.mxu0 0.0
  %2190 = vmatprep.subr.mxu0 0.0
  %2191 = vmatpush1.msra.mxu0 0.0
  %2192 = vmatprep.subr.mxu0 0.0
  %2193 = vmatpush1.msra.mxu0 0.0
  %2194 = vmatprep.subr.mxu0 0.0
  %2195 = vmatpush1.msra.mxu0 0.0
  %2196 = vmatprep.subr.mxu0 0.0
  %2197 = vmatpush1.msra.mxu0 0.0
  %2198 = vmatprep.subr.mxu0 0.0
  %2199 = vmatpush1.msra.mxu0 0.0
  %2200 = vmatprep.subr.mxu0 0.0
  %2201 = vmatpush1.msra.mxu0 0.0
  %2202 = vmatprep.mubr.f32.mxu0 0.0
  %2203 = vmatmul.mubr.f32.gmra.mrb[0].mxu0 %v2057
  %v2204 = vpop.f32.mrb[0].mxu0
  %v2205 = vadd.f32 0.0, %v2204
  %v2206 = vpop.f32.mrb[0].mxu0
  %v2207 = vadd.f32 0.0, %v2206
  %2208 = vdwg.mxu0
  %v2212 = vcombine.high %v2028, %v2028
  %v2213 = vcombine.high %v2029, %v2029
  %2214 = vrot.lane.b32.xlu0 %v2028, 17
  %v2215 = vpop.permute.xlu0 %2214
  %2216 = vrot.lane.b32.xlu0 %v2212, 17
  %v2217 = vpop.permute.xlu0 %2216
  %2218 = vrot.lane.b32.xlu0 %v2029, 17
  %v2219 = vpop.permute.xlu0 %2218
  %2220 = vrot.lane.b32.xlu0 %v2213, 17
  %v2221 = vpop.permute.xlu0 %2220
  %2222 = vrot.lane.b32.xlu0 %v2030, 17
  %v2223 = vpop.permute.xlu0 %2222
  %v2224 = vsel %vm340, %v2215, %v2217
  %v2225 = vsel %vm340, %v2217, %v2219
  %v2226 = vsel %vm340, %v2219, %v2221
  %v2227 = vsel %vm340, %v2221, %v2223
  %v2229 = vsel %vm171, %v2031, 0
  %v2231 = vsel %vm101, %v2224, 0
  %v2233 = vsel %vm101, %v2225, 0
  %v2235 = vsel %vm101, %v2226, 0
  %v2237 = vsel %vm101, %v2227, 0
  %2239 = vmatprep.subr.mxu0 %v2233
  %2240 = vmatpush1.msra.mxu0 %v2231
  %2241 = vmatprep.subr.mxu0 0.0
  %2242 = vmatpush1.msra.mxu0 0.0
  %2243 = vmatprep.subr.mxu0 0.0
  %2244 = vmatpush1.msra.mxu0 0.0
  %2245 = vmatprep.subr.mxu0 0.0
  %2246 = vmatpush1.msra.mxu0 0.0
  %2247 = vmatprep.subr.mxu0 0.0
  %2248 = vmatpush1.msra.mxu0 0.0
  %2249 = vmatprep.subr.mxu0 0.0
  %2250 = vmatpush1.msra.mxu0 0.0
  %2251 = vmatprep.subr.mxu0 0.0
  %2252 = vmatpush1.msra.mxu0 0.0
  %2253 = vmatprep.subr.mxu0 0.0
  %2254 = vmatpush1.msra.mxu0 0.0
  %2255 = vmatprep.subr.mxu0 0.0
  %2256 = vmatpush1.msra.mxu0 0.0
  %2257 = vmatprep.subr.mxu0 0.0
  %2258 = vmatpush1.msra.mxu0 0.0
  %2259 = vmatprep.subr.mxu0 0.0
  %2260 = vmatpush1.msra.mxu0 0.0
  %2261 = vmatprep.subr.mxu0 0.0
  %2262 = vmatpush1.msra.mxu0 0.0
  %2263 = vmatprep.subr.mxu0 0.0
  %2264 = vmatpush1.msra.mxu0 0.0
  %2265 = vmatprep.subr.mxu0 0.0
  %2266 = vmatpush1.msra.mxu0 0.0
  %2267 = vmatprep.subr.mxu0 0.0
  %2268 = vmatpush1.msra.mxu0 0.0
  %2269 = vmatprep.subr.mxu0 0.0
  %2270 = vmatpush1.msra.mxu0 0.0
  %2271 = vmatprep.subr.mxu0 0.0
  %2272 = vmatpush1.msra.mxu0 0.0
  %2273 = vmatprep.subr.mxu0 0.0
  %2274 = vmatpush1.msra.mxu0 0.0
  %2275 = vmatprep.subr.mxu0 0.0
  %2276 = vmatpush1.msra.mxu0 0.0
  %2277 = vmatprep.subr.mxu0 0.0
  %2278 = vmatpush1.msra.mxu0 0.0
  %2279 = vmatprep.subr.mxu0 0.0
  %2280 = vmatpush1.msra.mxu0 0.0
  %2281 = vmatprep.subr.mxu0 0.0
  %2282 = vmatpush1.msra.mxu0 0.0
  %2283 = vmatprep.subr.mxu0 0.0
  %2284 = vmatpush1.msra.mxu0 0.0
  %2285 = vmatprep.subr.mxu0 0.0
  %2286 = vmatpush1.msra.mxu0 0.0
  %2287 = vmatprep.subr.mxu0 0.0
  %2288 = vmatpush1.msra.mxu0 0.0
  %2289 = vmatprep.subr.mxu0 0.0
  %2290 = vmatpush1.msra.mxu0 0.0
  %2291 = vmatprep.subr.mxu0 0.0
  %2292 = vmatpush1.msra.mxu0 0.0
  %2293 = vmatprep.subr.mxu0 0.0
  %2294 = vmatpush1.msra.mxu0 0.0
  %2295 = vmatprep.subr.mxu0 0.0
  %2296 = vmatpush1.msra.mxu0 0.0
  %2297 = vmatprep.subr.mxu0 0.0
  %2298 = vmatpush1.msra.mxu0 0.0
  %2299 = vmatprep.subr.mxu0 0.0
  %2300 = vmatpush1.msra.mxu0 0.0
  %2301 = vmatprep.subr.mxu0 0.0
  %2302 = vmatpush1.msra.mxu0 0.0
  %2303 = vmatprep.mubr.f32.mxu0 0.0
  %2304 = vmatmul.mubr.f32.gmra.mrb[0].mxu0 %v2229
  %v2305 = vpop.f32.mrb[0].mxu0
  %v2306 = vadd.f32 %v2134, %v2305
  %v2307 = vpop.f32.mrb[0].mxu0
  %v2308 = vadd.f32 %v2136, %v2307
  %2309 = vdwg.mxu0
  %2310 = vmatprep.subr.mxu0 %v2237
  %2311 = vmatpush1.msra.mxu0 %v2235
  %2312 = vmatprep.subr.mxu0 0.0
  %2313 = vmatpush1.msra.mxu0 0.0
  %2314 = vmatprep.subr.mxu0 0.0
  %2315 = vmatpush1.msra.mxu0 0.0
  %2316 = vmatprep.subr.mxu0 0.0
  %2317 = vmatpush1.msra.mxu0 0.0
  %2318 = vmatprep.subr.mxu0 0.0
  %2319 = vmatpush1.msra.mxu0 0.0
  %2320 = vmatprep.subr.mxu0 0.0
  %2321 = vmatpush1.msra.mxu0 0.0
  %2322 = vmatprep.subr.mxu0 0.0
  %2323 = vmatpush1.msra.mxu0 0.0
  %2324 = vmatprep.subr.mxu0 0.0
  %2325 = vmatpush1.msra.mxu0 0.0
  %2326 = vmatprep.subr.mxu0 0.0
  %2327 = vmatpush1.msra.mxu0 0.0
  %2328 = vmatprep.subr.mxu0 0.0
  %2329 = vmatpush1.msra.mxu0 0.0
  %2330 = vmatprep.subr.mxu0 0.0
  %2331 = vmatpush1.msra.mxu0 0.0
  %2332 = vmatprep.subr.mxu0 0.0
  %2333 = vmatpush1.msra.mxu0 0.0
  %2334 = vmatprep.subr.mxu0 0.0
  %2335 = vmatpush1.msra.mxu0 0.0
  %2336 = vmatprep.subr.mxu0 0.0
  %2337 = vmatpush1.msra.mxu0 0.0
  %2338 = vmatprep.subr.mxu0 0.0
  %2339 = vmatpush1.msra.mxu0 0.0
  %2340 = vmatprep.subr.mxu0 0.0
  %2341 = vmatpush1.msra.mxu0 0.0
  %2342 = vmatprep.subr.mxu0 0.0
  %2343 = vmatpush1.msra.mxu0 0.0
  %2344 = vmatprep.subr.mxu0 0.0
  %2345 = vmatpush1.msra.mxu0 0.0
  %2346 = vmatprep.subr.mxu0 0.0
  %2347 = vmatpush1.msra.mxu0 0.0
  %2348 = vmatprep.subr.mxu0 0.0
  %2349 = vmatpush1.msra.mxu0 0.0
  %2350 = vmatprep.subr.mxu0 0.0
  %2351 = vmatpush1.msra.mxu0 0.0
  %2352 = vmatprep.subr.mxu0 0.0
  %2353 = vmatpush1.msra.mxu0 0.0
  %2354 = vmatprep.subr.mxu0 0.0
  %2355 = vmatpush1.msra.mxu0 0.0
  %2356 = vmatprep.subr.mxu0 0.0
  %2357 = vmatpush1.msra.mxu0 0.0
  %2358 = vmatprep.subr.mxu0 0.0
  %2359 = vmatpush1.msra.mxu0 0.0
  %2360 = vmatprep.subr.mxu0 0.0
  %2361 = vmatpush1.msra.mxu0 0.0
  %2362 = vmatprep.subr.mxu0 0.0
  %2363 = vmatpush1.msra.mxu0 0.0
  %2364 = vmatprep.subr.mxu0 0.0
  %2365 = vmatpush1.msra.mxu0 0.0
  %2366 = vmatprep.subr.mxu0 0.0
  %2367 = vmatpush1.msra.mxu0 0.0
  %2368 = vmatprep.subr.mxu0 0.0
  %2369 = vmatpush1.msra.mxu0 0.0
  %2370 = vmatprep.subr.mxu0 0.0
  %2371 = vmatpush1.msra.mxu0 0.0
  %2372 = vmatprep.subr.mxu0 0.0
  %2373 = vmatpush1.msra.mxu0 0.0
  %2374 = vmatprep.mubr.f32.mxu0 0.0
  %2375 = vmatmul.mubr.f32.gmra.mrb[0].mxu0 %v2229
  %v2376 = vpop.f32.mrb[0].mxu0
  %v2377 = vadd.f32 %v2205, %v2376
  %v2378 = vpop.f32.mrb[0].mxu0
  %v2379 = vadd.f32 %v2207, %v2378
  %2380 = vdwg.mxu0
  %v2381 = vld [vmem:[#allocation2] sm:$0xff]
  %v2382 = vld [vmem:[#allocation2 + $0x8] sm:$0xff]
  %v2383 = vld [vmem:[#allocation2 + $0x10] sm:$0xf]
  %v2384 = vmul.f32 %v2381, %v530
  %v2385 = vmul.f32 %v2382, %v532
  %v2386 = vmul.f32 %v2383, %v528
  %s2387 = scalar_lea.vmem %s4, 8
  %v2388 = vld [vmem:[%s2387] sm:$0xf]
  %v2392 = vcombine.high %v2384, %v2384
  %v2393 = vcombine.high %v2385, %v2385
  %2394 = vrot.lane.b32.xlu0 %v2384, 15
  %v2395 = vpop.permute.xlu0 %2394
  %2396 = vrot.lane.b32.xlu0 %v2392, 15
  %v2397 = vpop.permute.xlu0 %2396
  %2398 = vrot.lane.b32.xlu0 %v2385, 15
  %v2399 = vpop.permute.xlu0 %2398
  %2400 = vrot.lane.b32.xlu0 %v2393, 15
  %v2401 = vpop.permute.xlu0 %2400
  %2402 = vrot.lane.b32.xlu0 %v2386, 15
  %v2403 = vpop.permute.xlu0 %2402
  %v2404 = vsel %vm556, %v2395, %v2397
  %v2405 = vsel %vm556, %v2397, %v2399
  %v2406 = vsel %vm556, %v2399, %v2401
  %v2407 = vsel %vm556, %v2401, %v2403
  %v2409 = vsel %vm171, %v2388, 0
  %v2411 = vsel %vm101, %v2404, 0
  %v2413 = vsel %vm101, %v2405, 0
  %v2415 = vsel %vm101, %v2406, 0
  %v2417 = vsel %vm101, %v2407, 0
  %2419 = vmatprep.subr.mxu0 %v2413
  %2420 = vmatpush1.msra.mxu0 %v2411
  %2421 = vmatprep.subr.mxu0 0.0
  %2422 = vmatpush1.msra.mxu0 0.0
  %2423 = vmatprep.subr.mxu0 0.0
  %2424 = vmatpush1.msra.mxu0 0.0
  %2425 = vmatprep.subr.mxu0 0.0
  %2426 = vmatpush1.msra.mxu0 0.0
  %2427 = vmatprep.subr.mxu0 0.0
  %2428 = vmatpush1.msra.mxu0 0.0
  %2429 = vmatprep.subr.mxu0 0.0
  %2430 = vmatpush1.msra.mxu0 0.0
  %2431 = vmatprep.subr.mxu0 0.0
  %2432 = vmatpush1.msra.mxu0 0.0
  %2433 = vmatprep.subr.mxu0 0.0
  %2434 = vmatpush1.msra.mxu0 0.0
  %2435 = vmatprep.subr.mxu0 0.0
  %2436 = vmatpush1.msra.mxu0 0.0
  %2437 = vmatprep.subr.mxu0 0.0
  %2438 = vmatpush1.msra.mxu0 0.0
  %2439 = vmatprep.subr.mxu0 0.0
  %2440 = vmatpush1.msra.mxu0 0.0
  %2441 = vmatprep.subr.mxu0 0.0
  %2442 = vmatpush1.msra.mxu0 0.0
  %2443 = vmatprep.subr.mxu0 0.0
  %2444 = vmatpush1.msra.mxu0 0.0
  %2445 = vmatprep.subr.mxu0 0.0
  %2446 = vmatpush1.msra.mxu0 0.0
  %2447 = vmatprep.subr.mxu0 0.0
  %2448 = vmatpush1.msra.mxu0 0.0
  %2449 = vmatprep.subr.mxu0 0.0
  %2450 = vmatpush1.msra.mxu0 0.0
  %2451 = vmatprep.subr.mxu0 0.0
  %2452 = vmatpush1.msra.mxu0 0.0
  %2453 = vmatprep.subr.mxu0 0.0
  %2454 = vmatpush1.msra.mxu0 0.0
  %2455 = vmatprep.subr.mxu0 0.0
  %2456 = vmatpush1.msra.mxu0 0.0
  %2457 = vmatprep.subr.mxu0 0.0
  %2458 = vmatpush1.msra.mxu0 0.0
  %2459 = vmatprep.subr.mxu0 0.0
  %2460 = vmatpush1.msra.mxu0 0.0
  %2461 = vmatprep.subr.mxu0 0.0
  %2462 = vmatpush1.msra.mxu0 0.0
  %2463 = vmatprep.subr.mxu0 0.0
  %2464 = vmatpush1.msra.mxu0 0.0
  %2465 = vmatprep.subr.mxu0 0.0
  %2466 = vmatpush1.msra.mxu0 0.0
  %2467 = vmatprep.subr.mxu0 0.0
  %2468 = vmatpush1.msra.mxu0 0.0
  %2469 = vmatprep.subr.mxu0 0.0
  %2470 = vmatpush1.msra.mxu0 0.0
  %2471 = vmatprep.subr.mxu0 0.0
  %2472 = vmatpush1.msra.mxu0 0.0
  %2473 = vmatprep.subr.mxu0 0.0
  %2474 = vmatpush1.msra.mxu0 0.0
  %2475 = vmatprep.subr.mxu0 0.0
  %2476 = vmatpush1.msra.mxu0 0.0
  %2477 = vmatprep.subr.mxu0 0.0
  %2478 = vmatpush1.msra.mxu0 0.0
  %2479 = vmatprep.subr.mxu0 0.0
  %2480 = vmatpush1.msra.mxu0 0.0
  %2481 = vmatprep.subr.mxu0 0.0
  %2482 = vmatpush1.msra.mxu0 0.0
  %2483 = vmatprep.mubr.f32.mxu0 0.0
  %2484 = vmatmul.mubr.f32.gmra.mrb[0].mxu0 %v2409
  %v2485 = vpop.f32.mrb[0].mxu0
  %v2486 = vadd.f32 0.0, %v2485
  %v2487 = vpop.f32.mrb[0].mxu0
  %v2488 = vadd.f32 0.0, %v2487
  %2489 = vdwg.mxu0
  %2490 = vmatprep.subr.mxu0 %v2417
  %2491 = vmatpush1.msra.mxu0 %v2415
  %2492 = vmatprep.subr.mxu0 0.0
  %2493 = vmatpush1.msra.mxu0 0.0
  %2494 = vmatprep.subr.mxu0 0.0
  %2495 = vmatpush1.msra.mxu0 0.0
  %2496 = vmatprep.subr.mxu0 0.0
  %2497 = vmatpush1.msra.mxu0 0.0
  %2498 = vmatprep.subr.mxu0 0.0
  %2499 = vmatpush1.msra.mxu0 0.0
  %2500 = vmatprep.subr.mxu0 0.0
  %2501 = vmatpush1.msra.mxu0 0.0
  %2502 = vmatprep.subr.mxu0 0.0
  %2503 = vmatpush1.msra.mxu0 0.0
  %2504 = vmatprep.subr.mxu0 0.0
  %2505 = vmatpush1.msra.mxu0 0.0
  %2506 = vmatprep.subr.mxu0 0.0
  %2507 = vmatpush1.msra.mxu0 0.0
  %2508 = vmatprep.subr.mxu0 0.0
  %2509 = vmatpush1.msra.mxu0 0.0
  %2510 = vmatprep.subr.mxu0 0.0
  %2511 = vmatpush1.msra.mxu0 0.0
  %2512 = vmatprep.subr.mxu0 0.0
  %2513 = vmatpush1.msra.mxu0 0.0
  %2514 = vmatprep.subr.mxu0 0.0
  %2515 = vmatpush1.msra.mxu0 0.0
  %2516 = vmatprep.subr.mxu0 0.0
  %2517 = vmatpush1.msra.mxu0 0.0
  %2518 = vmatprep.subr.mxu0 0.0
  %2519 = vmatpush1.msra.mxu0 0.0
  %2520 = vmatprep.subr.mxu0 0.0
  %2521 = vmatpush1.msra.mxu0 0.0
  %2522 = vmatprep.subr.mxu0 0.0
  %2523 = vmatpush1.msra.mxu0 0.0
  %2524 = vmatprep.subr.mxu0 0.0
  %2525 = vmatpush1.msra.mxu0 0.0
  %2526 = vmatprep.subr.mxu0 0.0
  %2527 = vmatpush1.msra.mxu0 0.0
  %2528 = vmatprep.subr.mxu0 0.0
  %2529 = vmatpush1.msra.mxu0 0.0
  %2530 = vmatprep.subr.mxu0 0.0
  %2531 = vmatpush1.msra.mxu0 0.0
  %2532 = vmatprep.subr.mxu0 0.0
  %2533 = vmatpush1.msra.mxu0 0.0
  %2534 = vmatprep.subr.mxu0 0.0
  %2535 = vmatpush1.msra.mxu0 0.0
  %2536 = vmatprep.subr.mxu0 0.0
  %2537 = vmatpush1.msra.mxu0 0.0
  %2538 = vmatprep.subr.mxu0 0.0
  %2539 = vmatpush1.msra.mxu0 0.0
  %2540 = vmatprep.subr.mxu0 0.0
  %2541 = vmatpush1.msra.mxu0 0.0
  %2542 = vmatprep.subr.mxu0 0.0
  %2543 = vmatpush1.msra.mxu0 0.0
  %2544 = vmatprep.subr.mxu0 0.0
  %2545 = vmatpush1.msra.mxu0 0.0
  %2546 = vmatprep.subr.mxu0 0.0
  %2547 = vmatpush1.msra.mxu0 0.0
  %2548 = vmatprep.subr.mxu0 0.0
  %2549 = vmatpush1.msra.mxu0 0.0
  %2550 = vmatprep.subr.mxu0 0.0
  %2551 = vmatpush1.msra.mxu0 0.0
  %2552 = vmatprep.subr.mxu0 0.0
  %2553 = vmatpush1.msra.mxu0 0.0
  %2554 = vmatprep.mubr.f32.mxu0 0.0
  %2555 = vmatmul.mubr.f32.gmra.mrb[0].mxu0 %v2409
  %v2556 = vpop.f32.mrb[0].mxu0
  %v2557 = vadd.f32 0.0, %v2556
  %v2558 = vpop.f32.mrb[0].mxu0
  %v2559 = vadd.f32 0.0, %v2558
  %2560 = vdwg.mxu0
  %v2561 = vadd.f32 %v2306, %v2486
  %v2562 = vadd.f32 %v2308, %v2488
  %v2563 = vadd.f32 %v2377, %v2557
  %v2564 = vadd.f32 %v2379, %v2559
  %v2565 = vld [vmem:[#allocation2] sm:$0xff]
  %v2566 = vld [vmem:[#allocation2 + $0x8] sm:$0xff]
  %v2567 = vld [vmem:[#allocation2 + $0x10] sm:$0xf]
  %v2568 = vmul.f32 %v2565, %v750
  %v2569 = vmul.f32 %v2566, %v752
  %v2570 = vmul.f32 %v2567, %v748
  %s2571 = scalar_lea.vmem %s4, 12
  %v2572 = vld [vmem:[%s2571] sm:$0xf]
  %v2576 = vcombine.high %v2568, %v2568
  %v2577 = vcombine.high %v2569, %v2569
  %2578 = vrot.lane.b32.xlu0 %v2568, 1
  %v2579 = vpop.permute.xlu0 %2578
  %2580 = vrot.lane.b32.xlu0 %v2576, 1
  %v2581 = vpop.permute.xlu0 %2580
  %2582 = vrot.lane.b32.xlu0 %v2569, 1
  %v2583 = vpop.permute.xlu0 %2582
  %2584 = vrot.lane.b32.xlu0 %v2577, 1
  %v2585 = vpop.permute.xlu0 %2584
  %2586 = vrot.lane.b32.xlu0 %v2570, 1
  %v2587 = vpop.permute.xlu0 %2586
  %v2588 = vsel %vm776, %v2579, %v2581
  %v2589 = vsel %vm776, %v2581, %v2583
  %v2590 = vsel %vm776, %v2583, %v2585
  %v2591 = vsel %vm776, %v2585, %v2587
  %v2593 = vsel %vm171, %v2572, 0
  %v2595 = vsel %vm101, %v2588, 0
  %v2597 = vsel %vm101, %v2589, 0
  %v2599 = vsel %vm101, %v2590, 0
  %v2601 = vsel %vm101, %v2591, 0
  %2603 = vmatprep.subr.mxu0 %v2597
  %2604 = vmatpush1.msra.mxu0 %v2595
  %2605 = vmatprep.subr.mxu0 0.0
  %2606 = vmatpush1.msra.mxu0 0.0
  %2607 = vmatprep.subr.mxu0 0.0
  %2608 = vmatpush1.msra.mxu0 0.0
  %2609 = vmatprep.subr.mxu0 0.0
  %2610 = vmatpush1.msra.mxu0 0.0
  %2611 = vmatprep.subr.mxu0 0.0
  %2612 = vmatpush1.msra.mxu0 0.0
  %2613 = vmatprep.subr.mxu0 0.0
  %2614 = vmatpush1.msra.mxu0 0.0
  %2615 = vmatprep.subr.mxu0 0.0
  %2616 = vmatpush1.msra.mxu0 0.0
  %2617 = vmatprep.subr.mxu0 0.0
  %2618 = vmatpush1.msra.mxu0 0.0
  %2619 = vmatprep.subr.mxu0 0.0
  %2620 = vmatpush1.msra.mxu0 0.0
  %2621 = vmatprep.subr.mxu0 0.0
  %2622 = vmatpush1.msra.mxu0 0.0
  %2623 = vmatprep.subr.mxu0 0.0
  %2624 = vmatpush1.msra.mxu0 0.0
  %2625 = vmatprep.subr.mxu0 0.0
  %2626 = vmatpush1.msra.mxu0 0.0
  %2627 = vmatprep.subr.mxu0 0.0
  %2628 = vmatpush1.msra.mxu0 0.0
  %2629 = vmatprep.subr.mxu0 0.0
  %2630 = vmatpush1.msra.mxu0 0.0
  %2631 = vmatprep.subr.mxu0 0.0
  %2632 = vmatpush1.msra.mxu0 0.0
  %2633 = vmatprep.subr.mxu0 0.0
  %2634 = vmatpush1.msra.mxu0 0.0
  %2635 = vmatprep.subr.mxu0 0.0
  %2636 = vmatpush1.msra.mxu0 0.0
  %2637 = vmatprep.subr.mxu0 0.0
  %2638 = vmatpush1.msra.mxu0 0.0
  %2639 = vmatprep.subr.mxu0 0.0
  %2640 = vmatpush1.msra.mxu0 0.0
  %2641 = vmatprep.subr.mxu0 0.0
  %2642 = vmatpush1.msra.mxu0 0.0
  %2643 = vmatprep.subr.mxu0 0.0
  %2644 = vmatpush1.msra.mxu0 0.0
  %2645 = vmatprep.subr.mxu0 0.0
  %2646 = vmatpush1.msra.mxu0 0.0
  %2647 = vmatprep.subr.mxu0 0.0
  %2648 = vmatpush1.msra.mxu0 0.0
  %2649 = vmatprep.subr.mxu0 0.0
  %2650 = vmatpush1.msra.mxu0 0.0
  %2651 = vmatprep.subr.mxu0 0.0
  %2652 = vmatpush1.msra.mxu0 0.0
  %2653 = vmatprep.subr.mxu0 0.0
  %2654 = vmatpush1.msra.mxu0 0.0
  %2655 = vmatprep.subr.mxu0 0.0
  %2656 = vmatpush1.msra.mxu0 0.0
  %2657 = vmatprep.subr.mxu0 0.0
  %2658 = vmatpush1.msra.mxu0 0.0
  %2659 = vmatprep.subr.mxu0 0.0
  %2660 = vmatpush1.msra.mxu0 0.0
  %2661 = vmatprep.subr.mxu0 0.0
  %2662 = vmatpush1.msra.mxu0 0.0
  %2663 = vmatprep.subr.mxu0 0.0
  %2664 = vmatpush1.msra.mxu0 0.0
  %2665 = vmatprep.subr.mxu0 0.0
  %2666 = vmatpush1.msra.mxu0 0.0
  %2667 = vmatprep.mubr.f32.mxu0 0.0
  %2668 = vmatmul.mubr.f32.gmra.mrb[0].mxu0 %v2593
  %v2669 = vpop.f32.mrb[0].mxu0
  %v2670 = vadd.f32 0.0, %v2669
  %v2671 = vpop.f32.mrb[0].mxu0
  %v2672 = vadd.f32 0.0, %v2671
  %2673 = vdwg.mxu0
  %2674 = vmatprep.subr.mxu0 %v2601
  %2675 = vmatpush1.msra.mxu0 %v2599
  %2676 = vmatprep.subr.mxu0 0.0
  %2677 = vmatpush1.msra.mxu0 0.0
  %2678 = vmatprep.subr.mxu0 0.0
  %2679 = vmatpush1.msra.mxu0 0.0
  %2680 = vmatprep.subr.mxu0 0.0
  %2681 = vmatpush1.msra.mxu0 0.0
  %2682 = vmatprep.subr.mxu0 0.0
  %2683 = vmatpush1.msra.mxu0 0.0
  %2684 = vmatprep.subr.mxu0 0.0
  %2685 = vmatpush1.msra.mxu0 0.0
  %2686 = vmatprep.subr.mxu0 0.0
  %2687 = vmatpush1.msra.mxu0 0.0
  %2688 = vmatprep.subr.mxu0 0.0
  %2689 = vmatpush1.msra.mxu0 0.0
  %2690 = vmatprep.subr.mxu0 0.0
  %2691 = vmatpush1.msra.mxu0 0.0
  %2692 = vmatprep.subr.mxu0 0.0
  %2693 = vmatpush1.msra.mxu0 0.0
  %2694 = vmatprep.subr.mxu0 0.0
  %2695 = vmatpush1.msra.mxu0 0.0
  %2696 = vmatprep.subr.mxu0 0.0
  %2697 = vmatpush1.msra.mxu0 0.0
  %2698 = vmatprep.subr.mxu0 0.0
  %2699 = vmatpush1.msra.mxu0 0.0
  %2700 = vmatprep.subr.mxu0 0.0
  %2701 = vmatpush1.msra.mxu0 0.0
  %2702 = vmatprep.subr.mxu0 0.0
  %2703 = vmatpush1.msra.mxu0 0.0
  %2704 = vmatprep.subr.mxu0 0.0
  %2705 = vmatpush1.msra.mxu0 0.0
  %2706 = vmatprep.subr.mxu0 0.0
  %2707 = vmatpush1.msra.mxu0 0.0
  %2708 = vmatprep.subr.mxu0 0.0
  %2709 = vmatpush1.msra.mxu0 0.0
  %2710 = vmatprep.subr.mxu0 0.0
  %2711 = vmatpush1.msra.mxu0 0.0
  %2712 = vmatprep.subr.mxu0 0.0
  %2713 = vmatpush1.msra.mxu0 0.0
  %2714 = vmatprep.subr.mxu0 0.0
  %2715 = vmatpush1.msra.mxu0 0.0
  %2716 = vmatprep.subr.mxu0 0.0
  %2717 = vmatpush1.msra.mxu0 0.0
  %2718 = vmatprep.subr.mxu0 0.0
  %2719 = vmatpush1.msra.mxu0 0.0
  %2720 = vmatprep.subr.mxu0 0.0
  %2721 = vmatpush1.msra.mxu0 0.0
  %2722 = vmatprep.subr.mxu0 0.0
  %2723 = vmatpush1.msra.mxu0 0.0
  %2724 = vmatprep.subr.mxu0 0.0
  %2725 = vmatpush1.msra.mxu0 0.0
  %2726 = vmatprep.subr.mxu0 0.0
  %2727 = vmatpush1.msra.mxu0 0.0
  %2728 = vmatprep.subr.mxu0 0.0
  %2729 = vmatpush1.msra.mxu0 0.0
  %2730 = vmatprep.subr.mxu0 0.0
  %2731 = vmatpush1.msra.mxu0 0.0
  %2732 = vmatprep.subr.mxu0 0.0
  %2733 = vmatpush1.msra.mxu0 0.0
  %2734 = vmatprep.subr.mxu0 0.0
  %2735 = vmatpush1.msra.mxu0 0.0
  %2736 = vmatprep.subr.mxu0 0.0
  %2737 = vmatpush1.msra.mxu0 0.0
  %2738 = vmatprep.mubr.f32.mxu0 0.0
  %2739 = vmatmul.mubr.f32.gmra.mrb[0].mxu0 %v2593
  %v2740 = vpop.f32.mrb[0].mxu0
  %v2741 = vadd.f32 0.0, %v2740
  %v2742 = vpop.f32.mrb[0].mxu0
  %v2743 = vadd.f32 0.0, %v2742
  %2744 = vdwg.mxu0
  %v2745 = vadd.f32 %v2561, %v2670
  %v2746 = vadd.f32 %v2562, %v2672
  %v2747 = vadd.f32 %v2563, %v2741
  %v2748 = vadd.f32 %v2564, %v2743
  %v2749 = vld [vmem:[#allocation2 + $0x4] sm:$0xff]
  %v2750 = vld [vmem:[#allocation2 + $0xc] sm:$0xff]
  %v2751 = vmul.f32 %v2749, %v960
  %v2752 = vmul.f32 %v2750, %v961
  %s2753 = scalar_lea.vmem %s4, 16
  %v2754 = vld [vmem:[%s2753] sm:$0xf]
  %v2757 = vcombine.high %v2751, %v2751
  %v2758 = vcombine.high %v2752, %v2752
  %v2760 = vsel %vm171, %v2754, 0
  %v2762 = vsel %vm101, %v2751, 0
  %v2764 = vsel %vm101, %v2757, 0
  %v2766 = vsel %vm101, %v2752, 0
  %v2768 = vsel %vm101, %v2758, 0
  %2770 = vmatprep.subr.mxu0 %v2764
  %2771 = vmatpush1.msra.mxu0 %v2762
  %2772 = vmatprep.subr.mxu0 0.0
  %2773 = vmatpush1.msra.mxu0 0.0
  %2774 = vmatprep.subr.mxu0 0.0
  %2775 = vmatpush1.msra.mxu0 0.0
  %2776 = vmatprep.subr.mxu0 0.0
  %2777 = vmatpush1.msra.mxu0 0.0
  %2778 = vmatprep.subr.mxu0 0.0
  %2779 = vmatpush1.msra.mxu0 0.0
  %2780 = vmatprep.subr.mxu0 0.0
  %2781 = vmatpush1.msra.mxu0 0.0
  %2782 = vmatprep.subr.mxu0 0.0
  %2783 = vmatpush1.msra.mxu0 0.0
  %2784 = vmatprep.subr.mxu0 0.0
  %2785 = vmatpush1.msra.mxu0 0.0
  %2786 = vmatprep.subr.mxu0 0.0
  %2787 = vmatpush1.msra.mxu0 0.0
  %2788 = vmatprep.subr.mxu0 0.0
  %2789 = vmatpush1.msra.mxu0 0.0
  %2790 = vmatprep.subr.mxu0 0.0
  %2791 = vmatpush1.msra.mxu0 0.0
  %2792 = vmatprep.subr.mxu0 0.0
  %2793 = vmatpush1.msra.mxu0 0.0
  %2794 = vmatprep.subr.mxu0 0.0
  %2795 = vmatpush1.msra.mxu0 0.0
  %2796 = vmatprep.subr.mxu0 0.0
  %2797 = vmatpush1.msra.mxu0 0.0
  %2798 = vmatprep.subr.mxu0 0.0
  %2799 = vmatpush1.msra.mxu0 0.0
  %2800 = vmatprep.subr.mxu0 0.0
  %2801 = vmatpush1.msra.mxu0 0.0
  %2802 = vmatprep.subr.mxu0 0.0
  %2803 = vmatpush1.msra.mxu0 0.0
  %2804 = vmatprep.subr.mxu0 0.0
  %2805 = vmatpush1.msra.mxu0 0.0
  %2806 = vmatprep.subr.mxu0 0.0
  %2807 = vmatpush1.msra.mxu0 0.0
  %2808 = vmatprep.subr.mxu0 0.0
  %2809 = vmatpush1.msra.mxu0 0.0
  %2810 = vmatprep.subr.mxu0 0.0
  %2811 = vmatpush1.msra.mxu0 0.0
  %2812 = vmatprep.subr.mxu0 0.0
  %2813 = vmatpush1.msra.mxu0 0.0
  %2814 = vmatprep.subr.mxu0 0.0
  %2815 = vmatpush1.msra.mxu0 0.0
  %2816 = vmatprep.subr.mxu0 0.0
  %2817 = vmatpush1.msra.mxu0 0.0
  %2818 = vmatprep.subr.mxu0 0.0
  %2819 = vmatpush1.msra.mxu0 0.0
  %2820 = vmatprep.subr.mxu0 0.0
  %2821 = vmatpush1.msra.mxu0 0.0
  %2822 = vmatprep.subr.mxu0 0.0
  %2823 = vmatpush1.msra.mxu0 0.0
  %2824 = vmatprep.subr.mxu0 0.0
  %2825 = vmatpush1.msra.mxu0 0.0
  %2826 = vmatprep.subr.mxu0 0.0
  %2827 = vmatpush1.msra.mxu0 0.0
  %2828 = vmatprep.subr.mxu0 0.0
  %2829 = vmatpush1.msra.mxu0 0.0
  %2830 = vmatprep.subr.mxu0 0.0
  %2831 = vmatpush1.msra.mxu0 0.0
  %2832 = vmatprep.subr.mxu0 0.0
  %2833 = vmatpush1.msra.mxu0 0.0
  %2834 = vmatprep.mubr.f32.mxu0 0.0
  %2835 = vmatmul.mubr.f32.gmra.mrb[0].mxu0 %v2760
  %v2836 = vpop.f32.mrb[0].mxu0
  %v2837 = vadd.f32 0.0, %v2836
  %v2838 = vpop.f32.mrb[0].mxu0
  %v2839 = vadd.f32 0.0, %v2838
  %2840 = vdwg.mxu0
  %2841 = vmatprep.subr.mxu0 %v2768
  %2842 = vmatpush1.msra.mxu0 %v2766
  %2843 = vmatprep.subr.mxu0 0.0
  %2844 = vmatpush1.msra.mxu0 0.0
  %2845 = vmatprep.subr.mxu0 0.0
  %2846 = vmatpush1.msra.mxu0 0.0
  %2847 = vmatprep.subr.mxu0 0.0
  %2848 = vmatpush1.msra.mxu0 0.0
  %2849 = vmatprep.subr.mxu0 0.0
  %2850 = vmatpush1.msra.mxu0 0.0
  %2851 = vmatprep.subr.mxu0 0.0
  %2852 = vmatpush1.msra.mxu0 0.0
  %2853 = vmatprep.subr.mxu0 0.0
  %2854 = vmatpush1.msra.mxu0 0.0
  %2855 = vmatprep.subr.mxu0 0.0
  %2856 = vmatpush1.msra.mxu0 0.0
  %2857 = vmatprep.subr.mxu0 0.0
  %2858 = vmatpush1.msra.mxu0 0.0
  %2859 = vmatprep.subr.mxu0 0.0
  %2860 = vmatpush1.msra.mxu0 0.0
  %2861 = vmatprep.subr.mxu0 0.0
  %2862 = vmatpush1.msra.mxu0 0.0
  %2863 = vmatprep.subr.mxu0 0.0
  %2864 = vmatpush1.msra.mxu0 0.0
  %2865 = vmatprep.subr.mxu0 0.0
  %2866 = vmatpush1.msra.mxu0 0.0
  %2867 = vmatprep.subr.mxu0 0.0
  %2868 = vmatpush1.msra.mxu0 0.0
  %2869 = vmatprep.subr.mxu0 0.0
  %2870 = vmatpush1.msra.mxu0 0.0
  %2871 = vmatprep.subr.mxu0 0.0
  %2872 = vmatpush1.msra.mxu0 0.0
  %2873 = vmatprep.subr.mxu0 0.0
  %2874 = vmatpush1.msra.mxu0 0.0
  %2875 = vmatprep.subr.mxu0 0.0
  %2876 = vmatpush1.msra.mxu0 0.0
  %2877 = vmatprep.subr.mxu0 0.0
  %2878 = vmatpush1.msra.mxu0 0.0
  %2879 = vmatprep.subr.mxu0 0.0
  %2880 = vmatpush1.msra.mxu0 0.0
  %2881 = vmatprep.subr.mxu0 0.0
  %2882 = vmatpush1.msra.mxu0 0.0
  %2883 = vmatprep.subr.mxu0 0.0
  %2884 = vmatpush1.msra.mxu0 0.0
  %2885 = vmatprep.subr.mxu0 0.0
  %2886 = vmatpush1.msra.mxu0 0.0
  %2887 = vmatprep.subr.mxu0 0.0
  %2888 = vmatpush1.msra.mxu0 0.0
  %2889 = vmatprep.subr.mxu0 0.0
  %2890 = vmatpush1.msra.mxu0 0.0
  %2891 = vmatprep.subr.mxu0 0.0
  %2892 = vmatpush1.msra.mxu0 0.0
  %2893 = vmatprep.subr.mxu0 0.0
  %2894 = vmatpush1.msra.mxu0 0.0
  %2895 = vmatprep.subr.mxu0 0.0
  %2896 = vmatpush1.msra.mxu0 0.0
  %2897 = vmatprep.subr.mxu0 0.0
  %2898 = vmatpush1.msra.mxu0 0.0
  %2899 = vmatprep.subr.mxu0 0.0
  %2900 = vmatpush1.msra.mxu0 0.0
  %2901 = vmatprep.subr.mxu0 0.0
  %2902 = vmatpush1.msra.mxu0 0.0
  %2903 = vmatprep.subr.mxu0 0.0
  %2904 = vmatpush1.msra.mxu0 0.0
  %2905 = vmatprep.mubr.f32.mxu0 0.0
  %2906 = vmatmul.mubr.f32.gmra.mrb[0].mxu0 %v2760
  %v2907 = vpop.f32.mrb[0].mxu0
  %v2908 = vadd.f32 0.0, %v2907
  %v2909 = vpop.f32.mrb[0].mxu0
  %v2910 = vadd.f32 0.0, %v2909
  %2911 = vdwg.mxu0
  %v2912 = vadd.f32 %v2745, %v2837
  %v2913 = vadd.f32 %v2746, %v2839
  %v2914 = vadd.f32 %v2747, %v2908
  %v2915 = vadd.f32 %v2748, %v2910
  %v2916 = vld [vmem:[#allocation2 + $0x4] sm:$0xff]
  %v2917 = vld [vmem:[#allocation2 + $0xc] sm:$0xff]
  %v2918 = vld [vmem:[#allocation2 + $0x14] sm:$0xf]
  %v2919 = vmul.f32 %v2916, %v1160
  %v2920 = vmul.f32 %v2917, %v1162
  %v2921 = vmul.f32 %v2918, %v1159
  %s2922 = scalar_lea.vmem %s4, 20
  %v2923 = vld [vmem:[%s2922] sm:$0xf]
  %v2927 = vcombine.high %v2919, %v2919
  %v2928 = vcombine.high %v2920, %v2920
  %2929 = vrot.lane.b32.xlu0 %v2919, 127
  %v2930 = vpop.permute.xlu0 %2929
  %2931 = vrot.lane.b32.xlu0 %v2927, 127
  %v2932 = vpop.permute.xlu0 %2931
  %2933 = vrot.lane.b32.xlu0 %v2920, 127
  %v2934 = vpop.permute.xlu0 %2933
  %2935 = vrot.lane.b32.xlu0 %v2928, 127
  %v2936 = vpop.permute.xlu0 %2935
  %2937 = vrot.lane.b32.xlu0 %v2921, 127
  %v2938 = vpop.permute.xlu0 %2937
  %v2939 = vsel %vm749, %v2930, %v2932
  %v2940 = vsel %vm749, %v2932, %v2934
  %v2941 = vsel %vm749, %v2934, %v2936
  %v2942 = vsel %vm749, %v2936, %v2938
  %v2944 = vsel %vm171, %v2923, 0
  %v2946 = vsel %vm101, %v2939, 0
  %v2948 = vsel %vm101, %v2940, 0
  %v2950 = vsel %vm101, %v2941, 0
  %v2952 = vsel %vm101, %v2942, 0
  %2954 = vmatprep.subr.mxu0 %v2948
  %2955 = vmatpush1.msra.mxu0 %v2946
  %2956 = vmatprep.subr.mxu0 0.0
  %2957 = vmatpush1.msra.mxu0 0.0
  %2958 = vmatprep.subr.mxu0 0.0
  %2959 = vmatpush1.msra.mxu0 0.0
  %2960 = vmatprep.subr.mxu0 0.0
  %2961 = vmatpush1.msra.mxu0 0.0
  %2962 = vmatprep.subr.mxu0 0.0
  %2963 = vmatpush1.msra.mxu0 0.0
  %2964 = vmatprep.subr.mxu0 0.0
  %2965 = vmatpush1.msra.mxu0 0.0
  %2966 = vmatprep.subr.mxu0 0.0
  %2967 = vmatpush1.msra.mxu0 0.0
  %2968 = vmatprep.subr.mxu0 0.0
  %2969 = vmatpush1.msra.mxu0 0.0
  %2970 = vmatprep.subr.mxu0 0.0
  %2971 = vmatpush1.msra.mxu0 0.0
  %2972 = vmatprep.subr.mxu0 0.0
  %2973 = vmatpush1.msra.mxu0 0.0
  %2974 = vmatprep.subr.mxu0 0.0
  %2975 = vmatpush1.msra.mxu0 0.0
  %2976 = vmatprep.subr.mxu0 0.0
  %2977 = vmatpush1.msra.mxu0 0.0
  %2978 = vmatprep.subr.mxu0 0.0
  %2979 = vmatpush1.msra.mxu0 0.0
  %2980 = vmatprep.subr.mxu0 0.0
  %2981 = vmatpush1.msra.mxu0 0.0
  %2982 = vmatprep.subr.mxu0 0.0
  %2983 = vmatpush1.msra.mxu0 0.0
  %2984 = vmatprep.subr.mxu0 0.0
  %2985 = vmatpush1.msra.mxu0 0.0
  %2986 = vmatprep.subr.mxu0 0.0
  %2987 = vmatpush1.msra.mxu0 0.0
  %2988 = vmatprep.subr.mxu0 0.0
  %2989 = vmatpush1.msra.mxu0 0.0
  %2990 = vmatprep.subr.mxu0 0.0
  %2991 = vmatpush1.msra.mxu0 0.0
  %2992 = vmatprep.subr.mxu0 0.0
  %2993 = vmatpush1.msra.mxu0 0.0
  %2994 = vmatprep.subr.mxu0 0.0
  %2995 = vmatpush1.msra.mxu0 0.0
  %2996 = vmatprep.subr.mxu0 0.0
  %2997 = vmatpush1.msra.mxu0 0.0
  %2998 = vmatprep.subr.mxu0 0.0
  %2999 = vmatpush1.msra.mxu0 0.0
  %3000 = vmatprep.subr.mxu0 0.0
  %3001 = vmatpush1.msra.mxu0 0.0
  %3002 = vmatprep.subr.mxu0 0.0
  %3003 = vmatpush1.msra.mxu0 0.0
  %3004 = vmatprep.subr.mxu0 0.0
  %3005 = vmatpush1.msra.mxu0 0.0
  %3006 = vmatprep.subr.mxu0 0.0
  %3007 = vmatpush1.msra.mxu0 0.0
  %3008 = vmatprep.subr.mxu0 0.0
  %3009 = vmatpush1.msra.mxu0 0.0
  %3010 = vmatprep.subr.mxu0 0.0
  %3011 = vmatpush1.msra.mxu0 0.0
  %3012 = vmatprep.subr.mxu0 0.0
  %3013 = vmatpush1.msra.mxu0 0.0
  %3014 = vmatprep.subr.mxu0 0.0
  %3015 = vmatpush1.msra.mxu0 0.0
  %3016 = vmatprep.subr.mxu0 0.0
  %3017 = vmatpush1.msra.mxu0 0.0
  %3018 = vmatprep.mubr.f32.mxu0 0.0
  %3019 = vmatmul.mubr.f32.gmra.mrb[0].mxu0 %v2944
  %v3020 = vpop.f32.mrb[0].mxu0
  %v3021 = vadd.f32 0.0, %v3020
  %v3022 = vpop.f32.mrb[0].mxu0
  %v3023 = vadd.f32 0.0, %v3022
  %3024 = vdwg.mxu0
  %3025 = vmatprep.subr.mxu0 %v2952
  %3026 = vmatpush1.msra.mxu0 %v2950
  %3027 = vmatprep.subr.mxu0 0.0
  %3028 = vmatpush1.msra.mxu0 0.0
  %3029 = vmatprep.subr.mxu0 0.0
  %3030 = vmatpush1.msra.mxu0 0.0
  %3031 = vmatprep.subr.mxu0 0.0
  %3032 = vmatpush1.msra.mxu0 0.0
  %3033 = vmatprep.subr.mxu0 0.0
  %3034 = vmatpush1.msra.mxu0 0.0
  %3035 = vmatprep.subr.mxu0 0.0
  %3036 = vmatpush1.msra.mxu0 0.0
  %3037 = vmatprep.subr.mxu0 0.0
  %3038 = vmatpush1.msra.mxu0 0.0
  %3039 = vmatprep.subr.mxu0 0.0
  %3040 = vmatpush1.msra.mxu0 0.0
  %3041 = vmatprep.subr.mxu0 0.0
  %3042 = vmatpush1.msra.mxu0 0.0
  %3043 = vmatprep.subr.mxu0 0.0
  %3044 = vmatpush1.msra.mxu0 0.0
  %3045 = vmatprep.subr.mxu0 0.0
  %3046 = vmatpush1.msra.mxu0 0.0
  %3047 = vmatprep.subr.mxu0 0.0
  %3048 = vmatpush1.msra.mxu0 0.0
  %3049 = vmatprep.subr.mxu0 0.0
  %3050 = vmatpush1.msra.mxu0 0.0
  %3051 = vmatprep.subr.mxu0 0.0
  %3052 = vmatpush1.msra.mxu0 0.0
  %3053 = vmatprep.subr.mxu0 0.0
  %3054 = vmatpush1.msra.mxu0 0.0
  %3055 = vmatprep.subr.mxu0 0.0
  %3056 = vmatpush1.msra.mxu0 0.0
  %3057 = vmatprep.subr.mxu0 0.0
  %3058 = vmatpush1.msra.mxu0 0.0
  %3059 = vmatprep.subr.mxu0 0.0
  %3060 = vmatpush1.msra.mxu0 0.0
  %3061 = vmatprep.subr.mxu0 0.0
  %3062 = vmatpush1.msra.mxu0 0.0
  %3063 = vmatprep.subr.mxu0 0.0
  %3064 = vmatpush1.msra.mxu0 0.0
  %3065 = vmatprep.subr.mxu0 0.0
  %3066 = vmatpush1.msra.mxu0 0.0
  %3067 = vmatprep.subr.mxu0 0.0
  %3068 = vmatpush1.msra.mxu0 0.0
  %3069 = vmatprep.subr.mxu0 0.0
  %3070 = vmatpush1.msra.mxu0 0.0
  %3071 = vmatprep.subr.mxu0 0.0
  %3072 = vmatpush1.msra.mxu0 0.0
  %3073 = vmatprep.subr.mxu0 0.0
  %3074 = vmatpush1.msra.mxu0 0.0
  %3075 = vmatprep.subr.mxu0 0.0
  %3076 = vmatpush1.msra.mxu0 0.0
  %3077 = vmatprep.subr.mxu0 0.0
  %3078 = vmatpush1.msra.mxu0 0.0
  %3079 = vmatprep.subr.mxu0 0.0
  %3080 = vmatpush1.msra.mxu0 0.0
  %3081 = vmatprep.subr.mxu0 0.0
  %3082 = vmatpush1.msra.mxu0 0.0
  %3083 = vmatprep.subr.mxu0 0.0
  %3084 = vmatpush1.msra.mxu0 0.0
  %3085 = vmatprep.subr.mxu0 0.0
  %3086 = vmatpush1.msra.mxu0 0.0
  %3087 = vmatprep.subr.mxu0 0.0
  %3088 = vmatpush1.msra.mxu0 0.0
  %3089 = vmatprep.mubr.f32.mxu0 0.0
  %3090 = vmatmul.mubr.f32.gmra.mrb[0].mxu0 %v2944
  %v3091 = vpop.f32.mrb[0].mxu0
  %v3092 = vadd.f32 0.0, %v3091
  %v3093 = vpop.f32.mrb[0].mxu0
  %v3094 = vadd.f32 0.0, %v3093
  %3095 = vdwg.mxu0
  %v3096 = vadd.f32 %v2912, %v3021
  %v3097 = vadd.f32 %v2913, %v3023
  %v3098 = vadd.f32 %v2914, %v3092
  %v3099 = vadd.f32 %v2915, %v3094
  %v3100 = vld [vmem:[#allocation2 + $0x4] sm:$0xff]
  %v3101 = vld [vmem:[#allocation2 + $0xc] sm:$0xff]
  %v3102 = vld [vmem:[#allocation2 + $0x14] sm:$0xf]
  %v3103 = vmul.f32 %v3100, %v1378
  %v3104 = vmul.f32 %v3101, %v1380
  %v3105 = vmul.f32 %v3102, %v1377
  %s3106 = scalar_lea.vmem %s4, 24
  %v3107 = vld [vmem:[%s3106] sm:$0xf]
  %v3111 = vcombine.high %v3103, %v3103
  %v3112 = vcombine.high %v3104, %v3104
  %3113 = vrot.lane.b32.xlu0 %v3103, 113
  %v3114 = vpop.permute.xlu0 %3113
  %3115 = vrot.lane.b32.xlu0 %v3111, 113
  %v3116 = vpop.permute.xlu0 %3115
  %3117 = vrot.lane.b32.xlu0 %v3104, 113
  %v3118 = vpop.permute.xlu0 %3117
  %3119 = vrot.lane.b32.xlu0 %v3112, 113
  %v3120 = vpop.permute.xlu0 %3119
  %3121 = vrot.lane.b32.xlu0 %v3105, 113
  %v3122 = vpop.permute.xlu0 %3121
  %v3123 = vsel %vm529, %v3114, %v3116
  %v3124 = vsel %vm529, %v3116, %v3118
  %v3125 = vsel %vm529, %v3118, %v3120
  %v3126 = vsel %vm529, %v3120, %v3122
  %v3128 = vsel %vm171, %v3107, 0
  %v3130 = vsel %vm101, %v3123, 0
  %v3132 = vsel %vm101, %v3124, 0
  %v3134 = vsel %vm101, %v3125, 0
  %v3136 = vsel %vm101, %v3126, 0
  %3138 = vmatprep.subr.mxu0 %v3132
  %3139 = vmatpush1.msra.mxu0 %v3130
  %3140 = vmatprep.subr.mxu0 0.0
  %3141 = vmatpush1.msra.mxu0 0.0
  %3142 = vmatprep.subr.mxu0 0.0
  %3143 = vmatpush1.msra.mxu0 0.0
  %3144 = vmatprep.subr.mxu0 0.0
  %3145 = vmatpush1.msra.mxu0 0.0
  %3146 = vmatprep.subr.mxu0 0.0
  %3147 = vmatpush1.msra.mxu0 0.0
  %3148 = vmatprep.subr.mxu0 0.0
  %3149 = vmatpush1.msra.mxu0 0.0
  %3150 = vmatprep.subr.mxu0 0.0
  %3151 = vmatpush1.msra.mxu0 0.0
  %3152 = vmatprep.subr.mxu0 0.0
  %3153 = vmatpush1.msra.mxu0 0.0
  %3154 = vmatprep.subr.mxu0 0.0
  %3155 = vmatpush1.msra.mxu0 0.0
  %3156 = vmatprep.subr.mxu0 0.0
  %3157 = vmatpush1.msra.mxu0 0.0
  %3158 = vmatprep.subr.mxu0 0.0
  %3159 = vmatpush1.msra.mxu0 0.0
  %3160 = vmatprep.subr.mxu0 0.0
  %3161 = vmatpush1.msra.mxu0 0.0
  %3162 = vmatprep.subr.mxu0 0.0
  %3163 = vmatpush1.msra.mxu0 0.0
  %3164 = vmatprep.subr.mxu0 0.0
  %3165 = vmatpush1.msra.mxu0 0.0
  %3166 = vmatprep.subr.mxu0 0.0
  %3167 = vmatpush1.msra.mxu0 0.0
  %3168 = vmatprep.subr.mxu0 0.0
  %3169 = vmatpush1.msra.mxu0 0.0
  %3170 = vmatprep.subr.mxu0 0.0
  %3171 = vmatpush1.msra.mxu0 0.0
  %3172 = vmatprep.subr.mxu0 0.0
  %3173 = vmatpush1.msra.mxu0 0.0
  %3174 = vmatprep.subr.mxu0 0.0
  %3175 = vmatpush1.msra.mxu0 0.0
  %3176 = vmatprep.subr.mxu0 0.0
  %3177 = vmatpush1.msra.mxu0 0.0
  %3178 = vmatprep.subr.mxu0 0.0
  %3179 = vmatpush1.msra.mxu0 0.0
  %3180 = vmatprep.subr.mxu0 0.0
  %3181 = vmatpush1.msra.mxu0 0.0
  %3182 = vmatprep.subr.mxu0 0.0
  %3183 = vmatpush1.msra.mxu0 0.0
  %3184 = vmatprep.subr.mxu0 0.0
  %3185 = vmatpush1.msra.mxu0 0.0
  %3186 = vmatprep.subr.mxu0 0.0
  %3187 = vmatpush1.msra.mxu0 0.0
  %3188 = vmatprep.subr.mxu0 0.0
  %3189 = vmatpush1.msra.mxu0 0.0
  %3190 = vmatprep.subr.mxu0 0.0
  %3191 = vmatpush1.msra.mxu0 0.0
  %3192 = vmatprep.subr.mxu0 0.0
  %3193 = vmatpush1.msra.mxu0 0.0
  %3194 = vmatprep.subr.mxu0 0.0
  %3195 = vmatpush1.msra.mxu0 0.0
  %3196 = vmatprep.subr.mxu0 0.0
  %3197 = vmatpush1.msra.mxu0 0.0
  %3198 = vmatprep.subr.mxu0 0.0
  %3199 = vmatpush1.msra.mxu0 0.0
  %3200 = vmatprep.subr.mxu0 0.0
  %3201 = vmatpush1.msra.mxu0 0.0
  %3202 = vmatprep.mubr.f32.mxu0 0.0
  %3203 = vmatmul.mubr.f32.gmra.mrb[0].mxu0 %v3128
  %v3204 = vpop.f32.mrb[0].mxu0
  %v3205 = vadd.f32 0.0, %v3204
  %v3206 = vpop.f32.mrb[0].mxu0
  %v3207 = vadd.f32 0.0, %v3206
  %3208 = vdwg.mxu0
  %3209 = vmatprep.subr.mxu0 %v3136
  %3210 = vmatpush1.msra.mxu0 %v3134
  %3211 = vmatprep.subr.mxu0 0.0
  %3212 = vmatpush1.msra.mxu0 0.0
  %3213 = vmatprep.subr.mxu0 0.0
  %3214 = vmatpush1.msra.mxu0 0.0
  %3215 = vmatprep.subr.mxu0 0.0
  %3216 = vmatpush1.msra.mxu0 0.0
  %3217 = vmatprep.subr.mxu0 0.0
  %3218 = vmatpush1.msra.mxu0 0.0
  %3219 = vmatprep.subr.mxu0 0.0
  %3220 = vmatpush1.msra.mxu0 0.0
  %3221 = vmatprep.subr.mxu0 0.0
  %3222 = vmatpush1.msra.mxu0 0.0
  %3223 = vmatprep.subr.mxu0 0.0
  %3224 = vmatpush1.msra.mxu0 0.0
  %3225 = vmatprep.subr.mxu0 0.0
  %3226 = vmatpush1.msra.mxu0 0.0
  %3227 = vmatprep.subr.mxu0 0.0
  %3228 = vmatpush1.msra.mxu0 0.0
  %3229 = vmatprep.subr.mxu0 0.0
  %3230 = vmatpush1.msra.mxu0 0.0
  %3231 = vmatprep.subr.mxu0 0.0
  %3232 = vmatpush1.msra.mxu0 0.0
  %3233 = vmatprep.subr.mxu0 0.0
  %3234 = vmatpush1.msra.mxu0 0.0
  %3235 = vmatprep.subr.mxu0 0.0
  %3236 = vmatpush1.msra.mxu0 0.0
  %3237 = vmatprep.subr.mxu0 0.0
  %3238 = vmatpush1.msra.mxu0 0.0
  %3239 = vmatprep.subr.mxu0 0.0
  %3240 = vmatpush1.msra.mxu0 0.0
  %3241 = vmatprep.subr.mxu0 0.0
  %3242 = vmatpush1.msra.mxu0 0.0
  %3243 = vmatprep.subr.mxu0 0.0
  %3244 = vmatpush1.msra.mxu0 0.0
  %3245 = vmatprep.subr.mxu0 0.0
  %3246 = vmatpush1.msra.mxu0 0.0
  %3247 = vmatprep.subr.mxu0 0.0
  %3248 = vmatpush1.msra.mxu0 0.0
  %3249 = vmatprep.subr.mxu0 0.0
  %3250 = vmatpush1.msra.mxu0 0.0
  %3251 = vmatprep.subr.mxu0 0.0
  %3252 = vmatpush1.msra.mxu0 0.0
  %3253 = vmatprep.subr.mxu0 0.0
  %3254 = vmatpush1.msra.mxu0 0.0
  %3255 = vmatprep.subr.mxu0 0.0
  %3256 = vmatpush1.msra.mxu0 0.0
  %3257 = vmatprep.subr.mxu0 0.0
  %3258 = vmatpush1.msra.mxu0 0.0
  %3259 = vmatprep.subr.mxu0 0.0
  %3260 = vmatpush1.msra.mxu0 0.0
  %3261 = vmatprep.subr.mxu0 0.0
  %3262 = vmatpush1.msra.mxu0 0.0
  %3263 = vmatprep.subr.mxu0 0.0
  %3264 = vmatpush1.msra.mxu0 0.0
  %3265 = vmatprep.subr.mxu0 0.0
  %3266 = vmatpush1.msra.mxu0 0.0
  %3267 = vmatprep.subr.mxu0 0.0
  %3268 = vmatpush1.msra.mxu0 0.0
  %3269 = vmatprep.subr.mxu0 0.0
  %3270 = vmatpush1.msra.mxu0 0.0
  %3271 = vmatprep.subr.mxu0 0.0
  %3272 = vmatpush1.msra.mxu0 0.0
  %3273 = vmatprep.mubr.f32.mxu0 0.0
  %3274 = vmatmul.mubr.f32.gmra.mrb[0].mxu0 %v3128
  %v3275 = vpop.f32.mrb[0].mxu0
  %v3276 = vadd.f32 0.0, %v3275
  %v3277 = vpop.f32.mrb[0].mxu0
  %v3278 = vadd.f32 0.0, %v3277
  %3279 = vdwg.mxu0
  %v3280 = vadd.f32 %v3096, %v3205
  %v3281 = vadd.f32 %v3097, %v3207
  %v3282 = vadd.f32 %v3098, %v3276
  %v3283 = vadd.f32 %v3099, %v3278
  %v3284 = vld [vmem:[#allocation2 + $0x4] sm:$0xff]
  %v3285 = vld [vmem:[#allocation2 + $0xc] sm:$0xff]
  %v3286 = vld [vmem:[#allocation2 + $0x14] sm:$0xf]
  %v3287 = vmul.f32 %v3284, %v1596
  %v3288 = vmul.f32 %v3285, %v1598
  %v3289 = vmul.f32 %v3286, %v1595
  %s3290 = scalar_lea.vmem %s4, 28
  %v3291 = vld [vmem:[%s3290] sm:$0xf]
  %v3295 = vcombine.high %v3287, %v3287
  %v3296 = vcombine.high %v3288, %v3288
  %3297 = vrot.lane.b32.xlu0 %v3287, 112
  %v3298 = vpop.permute.xlu0 %3297
  %3299 = vrot.lane.b32.xlu0 %v3295, 112
  %v3300 = vpop.permute.xlu0 %3299
  %3301 = vrot.lane.b32.xlu0 %v3288, 112
  %v3302 = vpop.permute.xlu0 %3301
  %3303 = vrot.lane.b32.xlu0 %v3296, 112
  %v3304 = vpop.permute.xlu0 %3303
  %3305 = vrot.lane.b32.xlu0 %v3289, 112
  %v3306 = vpop.permute.xlu0 %3305
  %v3307 = vsel %vm139, %v3298, %v3300
  %v3308 = vsel %vm139, %v3300, %v3302
  %v3309 = vsel %vm139, %v3302, %v3304
  %v3310 = vsel %vm139, %v3304, %v3306
  %v3312 = vsel %vm171, %v3291, 0
  %v3314 = vsel %vm101, %v3307, 0
  %v3316 = vsel %vm101, %v3308, 0
  %v3318 = vsel %vm101, %v3309, 0
  %v3320 = vsel %vm101, %v3310, 0
  %3322 = vmatprep.subr.mxu0 %v3316
  %3323 = vmatpush1.msra.mxu0 %v3314
  %3324 = vmatprep.subr.mxu0 0.0
  %3325 = vmatpush1.msra.mxu0 0.0
  %3326 = vmatprep.subr.mxu0 0.0
  %3327 = vmatpush1.msra.mxu0 0.0
  %3328 = vmatprep.subr.mxu0 0.0
  %3329 = vmatpush1.msra.mxu0 0.0
  %3330 = vmatprep.subr.mxu0 0.0
  %3331 = vmatpush1.msra.mxu0 0.0
  %3332 = vmatprep.subr.mxu0 0.0
  %3333 = vmatpush1.msra.mxu0 0.0
  %3334 = vmatprep.subr.mxu0 0.0
  %3335 = vmatpush1.msra.mxu0 0.0
  %3336 = vmatprep.subr.mxu0 0.0
  %3337 = vmatpush1.msra.mxu0 0.0
  %3338 = vmatprep.subr.mxu0 0.0
  %3339 = vmatpush1.msra.mxu0 0.0
  %3340 = vmatprep.subr.mxu0 0.0
  %3341 = vmatpush1.msra.mxu0 0.0
  %3342 = vmatprep.subr.mxu0 0.0
  %3343 = vmatpush1.msra.mxu0 0.0
  %3344 = vmatprep.subr.mxu0 0.0
  %3345 = vmatpush1.msra.mxu0 0.0
  %3346 = vmatprep.subr.mxu0 0.0
  %3347 = vmatpush1.msra.mxu0 0.0
  %3348 = vmatprep.subr.mxu0 0.0
  %3349 = vmatpush1.msra.mxu0 0.0
  %3350 = vmatprep.subr.mxu0 0.0
  %3351 = vmatpush1.msra.mxu0 0.0
  %3352 = vmatprep.subr.mxu0 0.0
  %3353 = vmatpush1.msra.mxu0 0.0
  %3354 = vmatprep.subr.mxu0 0.0
  %3355 = vmatpush1.msra.mxu0 0.0
  %3356 = vmatprep.subr.mxu0 0.0
  %3357 = vmatpush1.msra.mxu0 0.0
  %3358 = vmatprep.subr.mxu0 0.0
  %3359 = vmatpush1.msra.mxu0 0.0
  %3360 = vmatprep.subr.mxu0 0.0
  %3361 = vmatpush1.msra.mxu0 0.0
  %3362 = vmatprep.subr.mxu0 0.0
  %3363 = vmatpush1.msra.mxu0 0.0
  %3364 = vmatprep.subr.mxu0 0.0
  %3365 = vmatpush1.msra.mxu0 0.0
  %3366 = vmatprep.subr.mxu0 0.0
  %3367 = vmatpush1.msra.mxu0 0.0
  %3368 = vmatprep.subr.mxu0 0.0
  %3369 = vmatpush1.msra.mxu0 0.0
  %3370 = vmatprep.subr.mxu0 0.0
  %3371 = vmatpush1.msra.mxu0 0.0
  %3372 = vmatprep.subr.mxu0 0.0
  %3373 = vmatpush1.msra.mxu0 0.0
  %3374 = vmatprep.subr.mxu0 0.0
  %3375 = vmatpush1.msra.mxu0 0.0
  %3376 = vmatprep.subr.mxu0 0.0
  %3377 = vmatpush1.msra.mxu0 0.0
  %3378 = vmatprep.subr.mxu0 0.0
  %3379 = vmatpush1.msra.mxu0 0.0
  %3380 = vmatprep.subr.mxu0 0.0
  %3381 = vmatpush1.msra.mxu0 0.0
  %3382 = vmatprep.subr.mxu0 0.0
  %3383 = vmatpush1.msra.mxu0 0.0
  %3384 = vmatprep.subr.mxu0 0.0
  %3385 = vmatpush1.msra.mxu0 0.0
  %3386 = vmatprep.mubr.f32.mxu0 0.0
  %3387 = vmatmul.mubr.f32.gmra.mrb[0].mxu0 %v3312
  %v3388 = vpop.f32.mrb[0].mxu0
  %v3389 = vadd.f32 0.0, %v3388
  %v3390 = vpop.f32.mrb[0].mxu0
  %v3391 = vadd.f32 0.0, %v3390
  %3392 = vdwg.mxu0
  %3393 = vmatprep.subr.mxu0 %v3320
  %3394 = vmatpush1.msra.mxu0 %v3318
  %3395 = vmatprep.subr.mxu0 0.0
  %3396 = vmatpush1.msra.mxu0 0.0
  %3397 = vmatprep.subr.mxu0 0.0
  %3398 = vmatpush1.msra.mxu0 0.0
  %3399 = vmatprep.subr.mxu0 0.0
  %3400 = vmatpush1.msra.mxu0 0.0
  %3401 = vmatprep.subr.mxu0 0.0
  %3402 = vmatpush1.msra.mxu0 0.0
  %3403 = vmatprep.subr.mxu0 0.0
  %3404 = vmatpush1.msra.mxu0 0.0
  %3405 = vmatprep.subr.mxu0 0.0
  %3406 = vmatpush1.msra.mxu0 0.0
  %3407 = vmatprep.subr.mxu0 0.0
  %3408 = vmatpush1.msra.mxu0 0.0
  %3409 = vmatprep.subr.mxu0 0.0
  %3410 = vmatpush1.msra.mxu0 0.0
  %3411 = vmatprep.subr.mxu0 0.0
  %3412 = vmatpush1.msra.mxu0 0.0
  %3413 = vmatprep.subr.mxu0 0.0
  %3414 = vmatpush1.msra.mxu0 0.0
  %3415 = vmatprep.subr.mxu0 0.0
  %3416 = vmatpush1.msra.mxu0 0.0
  %3417 = vmatprep.subr.mxu0 0.0
  %3418 = vmatpush1.msra.mxu0 0.0
  %3419 = vmatprep.subr.mxu0 0.0
  %3420 = vmatpush1.msra.mxu0 0.0
  %3421 = vmatprep.subr.mxu0 0.0
  %3422 = vmatpush1.msra.mxu0 0.0
  %3423 = vmatprep.subr.mxu0 0.0
  %3424 = vmatpush1.msra.mxu0 0.0
  %3425 = vmatprep.subr.mxu0 0.0
  %3426 = vmatpush1.msra.mxu0 0.0
  %3427 = vmatprep.subr.mxu0 0.0
  %3428 = vmatpush1.msra.mxu0 0.0
  %3429 = vmatprep.subr.mxu0 0.0
  %3430 = vmatpush1.msra.mxu0 0.0
  %3431 = vmatprep.subr.mxu0 0.0
  %3432 = vmatpush1.msra.mxu0 0.0
  %3433 = vmatprep.subr.mxu0 0.0
  %3434 = vmatpush1.msra.mxu0 0.0
  %3435 = vmatprep.subr.mxu0 0.0
  %3436 = vmatpush1.msra.mxu0 0.0
  %3437 = vmatprep.subr.mxu0 0.0
  %3438 = vmatpush1.msra.mxu0 0.0
  %3439 = vmatprep.subr.mxu0 0.0
  %3440 = vmatpush1.msra.mxu0 0.0
  %3441 = vmatprep.subr.mxu0 0.0
  %3442 = vmatpush1.msra.mxu0 0.0
  %3443 = vmatprep.subr.mxu0 0.0
  %3444 = vmatpush1.msra.mxu0 0.0
  %3445 = vmatprep.subr.mxu0 0.0
  %3446 = vmatpush1.msra.mxu0 0.0
  %3447 = vmatprep.subr.mxu0 0.0
  %3448 = vmatpush1.msra.mxu0 0.0
  %3449 = vmatprep.subr.mxu0 0.0
  %3450 = vmatpush1.msra.mxu0 0.0
  %3451 = vmatprep.subr.mxu0 0.0
  %3452 = vmatpush1.msra.mxu0 0.0
  %3453 = vmatprep.subr.mxu0 0.0
  %3454 = vmatpush1.msra.mxu0 0.0
  %3455 = vmatprep.subr.mxu0 0.0
  %3456 = vmatpush1.msra.mxu0 0.0
  %3457 = vmatprep.mubr.f32.mxu0 0.0
  %3458 = vmatmul.mubr.f32.gmra.mrb[0].mxu0 %v3312
  %v3459 = vpop.f32.mrb[0].mxu0
  %v3460 = vadd.f32 0.0, %v3459
  %v3461 = vpop.f32.mrb[0].mxu0
  %v3462 = vadd.f32 0.0, %v3461
  %3463 = vdwg.mxu0
  %v3464 = vadd.f32 %v3280, %v3389
  %v3465 = vadd.f32 %v3281, %v3391
  %v3466 = vadd.f32 %v3282, %v3460
  %v3467 = vadd.f32 %v3283, %v3462
  %v3468 = vld [vmem:[#allocation2 + $0x4] sm:$0xff]
  %v3469 = vld [vmem:[#allocation2 + $0xc] sm:$0xff]
  %v3470 = vld [vmem:[#allocation2 + $0x14] sm:$0xf]
  %v3471 = vmul.f32 %v3468, %v1814
  %v3472 = vmul.f32 %v3469, %v1816
  %v3473 = vmul.f32 %v3470, %v1813
  %s3474 = scalar_lea.vmem %s4, 32
  %v3475 = vld [vmem:[%s3474] sm:$0xf]
  %v3479 = vcombine.high %v3471, %v3471
  %v3480 = vcombine.high %v3472, %v3472
  %3481 = vrot.lane.b32.xlu0 %v3471, 111
  %v3482 = vpop.permute.xlu0 %3481
  %3483 = vrot.lane.b32.xlu0 %v3479, 111
  %v3484 = vpop.permute.xlu0 %3483
  %3485 = vrot.lane.b32.xlu0 %v3472, 111
  %v3486 = vpop.permute.xlu0 %3485
  %3487 = vrot.lane.b32.xlu0 %v3480, 111
  %v3488 = vpop.permute.xlu0 %3487
  %3489 = vrot.lane.b32.xlu0 %v3473, 111
  %v3490 = vpop.permute.xlu0 %3489
  %v3491 = vsel %vm99, %v3482, %v3484
  %v3492 = vsel %vm99, %v3484, %v3486
  %v3493 = vsel %vm99, %v3486, %v3488
  %v3494 = vsel %vm99, %v3488, %v3490
  %v3496 = vsel %vm171, %v3475, 0
  %v3498 = vsel %vm101, %v3491, 0
  %v3500 = vsel %vm101, %v3492, 0
  %v3502 = vsel %vm101, %v3493, 0
  %v3504 = vsel %vm101, %v3494, 0
  %3506 = vmatprep.subr.mxu0 %v3500
  %3507 = vmatpush1.msra.mxu0 %v3498
  %3508 = vmatprep.subr.mxu0 0.0
  %3509 = vmatpush1.msra.mxu0 0.0
  %3510 = vmatprep.subr.mxu0 0.0
  %3511 = vmatpush1.msra.mxu0 0.0
  %3512 = vmatprep.subr.mxu0 0.0
  %3513 = vmatpush1.msra.mxu0 0.0
  %3514 = vmatprep.subr.mxu0 0.0
  %3515 = vmatpush1.msra.mxu0 0.0
  %3516 = vmatprep.subr.mxu0 0.0
  %3517 = vmatpush1.msra.mxu0 0.0
  %3518 = vmatprep.subr.mxu0 0.0
  %3519 = vmatpush1.msra.mxu0 0.0
  %3520 = vmatprep.subr.mxu0 0.0
  %3521 = vmatpush1.msra.mxu0 0.0
  %3522 = vmatprep.subr.mxu0 0.0
  %3523 = vmatpush1.msra.mxu0 0.0
  %3524 = vmatprep.subr.mxu0 0.0
  %3525 = vmatpush1.msra.mxu0 0.0
  %3526 = vmatprep.subr.mxu0 0.0
  %3527 = vmatpush1.msra.mxu0 0.0
  %3528 = vmatprep.subr.mxu0 0.0
  %3529 = vmatpush1.msra.mxu0 0.0
  %3530 = vmatprep.subr.mxu0 0.0
  %3531 = vmatpush1.msra.mxu0 0.0
  %3532 = vmatprep.subr.mxu0 0.0
  %3533 = vmatpush1.msra.mxu0 0.0
  %3534 = vmatprep.subr.mxu0 0.0
  %3535 = vmatpush1.msra.mxu0 0.0
  %3536 = vmatprep.subr.mxu0 0.0
  %3537 = vmatpush1.msra.mxu0 0.0
  %3538 = vmatprep.subr.mxu0 0.0
  %3539 = vmatpush1.msra.mxu0 0.0
  %3540 = vmatprep.subr.mxu0 0.0
  %3541 = vmatpush1.msra.mxu0 0.0
  %3542 = vmatprep.subr.mxu0 0.0
  %3543 = vmatpush1.msra.mxu0 0.0
  %3544 = vmatprep.subr.mxu0 0.0
  %3545 = vmatpush1.msra.mxu0 0.0
  %3546 = vmatprep.subr.mxu0 0.0
  %3547 = vmatpush1.msra.mxu0 0.0
  %3548 = vmatprep.subr.mxu0 0.0
  %3549 = vmatpush1.msra.mxu0 0.0
  %3550 = vmatprep.subr.mxu0 0.0
  %3551 = vmatpush1.msra.mxu0 0.0
  %3552 = vmatprep.subr.mxu0 0.0
  %3553 = vmatpush1.msra.mxu0 0.0
  %3554 = vmatprep.subr.mxu0 0.0
  %3555 = vmatpush1.msra.mxu0 0.0
  %3556 = vmatprep.subr.mxu0 0.0
  %3557 = vmatpush1.msra.mxu0 0.0
  %3558 = vmatprep.subr.mxu0 0.0
  %3559 = vmatpush1.msra.mxu0 0.0
  %3560 = vmatprep.subr.mxu0 0.0
  %3561 = vmatpush1.msra.mxu0 0.0
  %3562 = vmatprep.subr.mxu0 0.0
  %3563 = vmatpush1.msra.mxu0 0.0
  %3564 = vmatprep.subr.mxu0 0.0
  %3565 = vmatpush1.msra.mxu0 0.0
  %3566 = vmatprep.subr.mxu0 0.0
  %3567 = vmatpush1.msra.mxu0 0.0
  %3568 = vmatprep.subr.mxu0 0.0
  %3569 = vmatpush1.msra.mxu0 0.0
  %3570 = vmatprep.mubr.f32.mxu0 0.0
  %3571 = vmatmul.mubr.f32.gmra.mrb[0].mxu0 %v3496
  %v3572 = vpop.f32.mrb[0].mxu0
  %v3573 = vadd.f32 0.0, %v3572
  %v3574 = vpop.f32.mrb[0].mxu0
  %v3575 = vadd.f32 0.0, %v3574
  %3576 = vdwg.mxu0
  %3577 = vmatprep.subr.mxu0 %v3504
  %3578 = vmatpush1.msra.mxu0 %v3502
  %3579 = vmatprep.subr.mxu0 0.0
  %3580 = vmatpush1.msra.mxu0 0.0
  %3581 = vmatprep.subr.mxu0 0.0
  %3582 = vmatpush1.msra.mxu0 0.0
  %3583 = vmatprep.subr.mxu0 0.0
  %3584 = vmatpush1.msra.mxu0 0.0
  %3585 = vmatprep.subr.mxu0 0.0
  %3586 = vmatpush1.msra.mxu0 0.0
  %3587 = vmatprep.subr.mxu0 0.0
  %3588 = vmatpush1.msra.mxu0 0.0
  %3589 = vmatprep.subr.mxu0 0.0
  %3590 = vmatpush1.msra.mxu0 0.0
  %3591 = vmatprep.subr.mxu0 0.0
  %3592 = vmatpush1.msra.mxu0 0.0
  %3593 = vmatprep.subr.mxu0 0.0
  %3594 = vmatpush1.msra.mxu0 0.0
  %3595 = vmatprep.subr.mxu0 0.0
  %3596 = vmatpush1.msra.mxu0 0.0
  %3597 = vmatprep.subr.mxu0 0.0
  %3598 = vmatpush1.msra.mxu0 0.0
  %3599 = vmatprep.subr.mxu0 0.0
  %3600 = vmatpush1.msra.mxu0 0.0
  %3601 = vmatprep.subr.mxu0 0.0
  %3602 = vmatpush1.msra.mxu0 0.0
  %3603 = vmatprep.subr.mxu0 0.0
  %3604 = vmatpush1.msra.mxu0 0.0
  %3605 = vmatprep.subr.mxu0 0.0
  %3606 = vmatpush1.msra.mxu0 0.0
  %3607 = vmatprep.subr.mxu0 0.0
  %3608 = vmatpush1.msra.mxu0 0.0
  %3609 = vmatprep.subr.mxu0 0.0
  %3610 = vmatpush1.msra.mxu0 0.0
  %3611 = vmatprep.subr.mxu0 0.0
  %3612 = vmatpush1.msra.mxu0 0.0
  %3613 = vmatprep.subr.mxu0 0.0
  %3614 = vmatpush1.msra.mxu0 0.0
  %3615 = vmatprep.subr.mxu0 0.0
  %3616 = vmatpush1.msra.mxu0 0.0
  %3617 = vmatprep.subr.mxu0 0.0
  %3618 = vmatpush1.msra.mxu0 0.0
  %3619 = vmatprep.subr.mxu0 0.0
  %3620 = vmatpush1.msra.mxu0 0.0
  %3621 = vmatprep.subr.mxu0 0.0
  %3622 = vmatpush1.msra.mxu0 0.0
  %3623 = vmatprep.subr.mxu0 0.0
  %3624 = vmatpush1.msra.mxu0 0.0
  %3625 = vmatprep.subr.mxu0 0.0
  %3626 = vmatpush1.msra.mxu0 0.0
  %3627 = vmatprep.subr.mxu0 0.0
  %3628 = vmatpush1.msra.mxu0 0.0
  %3629 = vmatprep.subr.mxu0 0.0
  %3630 = vmatpush1.msra.mxu0 0.0
  %3631 = vmatprep.subr.mxu0 0.0
  %3632 = vmatpush1.msra.mxu0 0.0
  %3633 = vmatprep.subr.mxu0 0.0
  %3634 = vmatpush1.msra.mxu0 0.0
  %3635 = vmatprep.subr.mxu0 0.0
  %3636 = vmatpush1.msra.mxu0 0.0
  %3637 = vmatprep.subr.mxu0 0.0
  %3638 = vmatpush1.msra.mxu0 0.0
  %3639 = vmatprep.subr.mxu0 0.0
  %3640 = vmatpush1.msra.mxu0 0.0
  %3641 = vmatprep.mubr.f32.mxu0 0.0
  %3642 = vmatmul.mubr.f32.gmra.mrb[0].mxu0 %v3496
  %v3643 = vpop.f32.mrb[0].mxu0
  %v3644 = vadd.f32 0.0, %v3643
  %v3645 = vpop.f32.mrb[0].mxu0
  %v3646 = vadd.f32 0.0, %v3645
  %3647 = vdwg.mxu0
  %v3648 = vadd.f32 %v3464, %v3573
  %v3649 = vadd.f32 %v3465, %v3575
  %v3650 = vadd.f32 %v3466, %v3644
  %v3651 = vadd.f32 %v3467, %v3646
  %v3652 = vld [vmem:[%s5] sm:$0xf]
  %3654 = vset.pattern.permute.xlu0 0
  %3655 = vperm.xlu0 %3654, %v3652
  %v3656 = vpop.permute.xlu0 %3655
  %v3658 = vadd.f32 %v3648, %v3656
  %v3659 = vadd.f32 %v3649, %v3656
  %v3660 = vadd.f32 %v3650, %v3656
  %v3661 = vadd.f32 %v3651, %v3656
  %v3662 = vmax.f32 %v3658, 0.0
  %v3663 = vmax.f32 %v3659, 0.0
  %v3664 = vmax.f32 %v3660, 0.0
  %v3665 = vmax.f32 %v3661, 0.0
  %v3666 = vld [vmem:[%s12] sm:$0xff]
  %v3667 = vld [vmem:[%s12 + $0x8] sm:$0xff]
  %v3668 = vld [vmem:[%s12 + $0x10] sm:$0xff]
  %v3669 = vld [vmem:[%s12 + $0x18] sm:$0xff]
  %v3670 = vld [vmem:[%s12 + $0x20] sm:$0xff]
  %v3671 = vld [vmem:[%s12 + $0x28] sm:$0xff]
  %v3672 = vld [vmem:[%s12 + $0x30] sm:$0xff]
  %v3673 = vld [vmem:[%s12 + $0x38] sm:$0xff]
  %v3674 = vld [vmem:[%s12 + $0x40] sm:$0xff]
  %v3675 = vld [vmem:[%s12 + $0x48] sm:$0xff]
  %v3676 = vld [vmem:[%s12 + $0x50] sm:$0xff]
  %v3677 = vld [vmem:[%s12 + $0x58] sm:$0xff]
  %v3678 = vld [vmem:[%s12 + $0x60] sm:$0xff]
  %v3679 = vld [vmem:[%s12 + $0x68] sm:$0xff]
  %v3680 = vld [vmem:[%s12 + $0x70] sm:$0xff]
  %v3681 = vld [vmem:[%s12 + $0x78] sm:$0xff]
  %v3682 = vld [vmem:[%s12 + $0x80] sm:$0xff]
  %v3683 = vld [vmem:[%s12 + $0x88] sm:$0xff]
  %v3684 = vld [vmem:[%s12 + $0x90] sm:$0xff]
  %v3685 = vld [vmem:[%s12 + $0x98] sm:$0xff]
  %v3686 = vld [vmem:[%s12 + $0xa0] sm:$0xff]
  %v3687 = vld [vmem:[%s12 + $0xa8] sm:$0xff]
  %v3688 = vld [vmem:[%s12 + $0xb0] sm:$0xff]
  %v3689 = vld [vmem:[%s12 + $0xb8] sm:$0xff]
  %v3690 = vld [vmem:[%s12 + $0xc0] sm:$0xff]
  %v3691 = vld [vmem:[%s12 + $0xc8] sm:$0xff]
  %v3692 = vld [vmem:[%s12 + $0xd0] sm:$0xff]
  %v3693 = vld [vmem:[%s12 + $0xd8] sm:$0xff]
  %v3694 = vld [vmem:[%s12 + $0xe0] sm:$0xff]
  %v3695 = vld [vmem:[%s12 + $0xe8] sm:$0xff]
  %v3696 = vld [vmem:[%s12 + $0xf0] sm:$0xff]
  %v3697 = vld [vmem:[%s12 + $0xf8] sm:$0xff]
  %v3698 = vld [vmem:[%s12 + $0x100] sm:$0xff]
  %v3699 = vld [vmem:[%s12 + $0x108] sm:$0xff]
  %v3700 = vld [vmem:[%s12 + $0x110] sm:$0xff]
  %v3701 = vld [vmem:[%s12 + $0x118] sm:$0xff]
  %v3702 = vld [vmem:[%s12 + $0x120] sm:$0xff]
  %v3703 = vld [vmem:[%s12 + $0x128] sm:$0xff]
  %v3704 = vld [vmem:[%s12 + $0x130] sm:$0xff]
  %v3705 = vld [vmem:[%s12 + $0x138] sm:$0xff]
  %v3706 = vld [vmem:[%s12 + $0x140] sm:$0xff]
  %v3707 = vld [vmem:[%s12 + $0x148] sm:$0xff]
  %v3708 = vld [vmem:[%s12 + $0x150] sm:$0xff]
  %v3709 = vld [vmem:[%s12 + $0x158] sm:$0xff]
  %v3710 = vld [vmem:[%s12 + $0x160] sm:$0xff]
  %v3711 = vld [vmem:[%s12 + $0x168] sm:$0xff]
  %v3712 = vld [vmem:[%s12 + $0x170] sm:$0xff]
  %v3713 = vld [vmem:[%s12 + $0x178] sm:$0xff]
  %v3714 = vld [vmem:[%s12 + $0x180] sm:$0xff]
  %v3715 = vld [vmem:[%s12 + $0x188] sm:$0xff]
  %v3716 = vld [vmem:[%s12 + $0x190] sm:$0xff]
  %v3717 = vld [vmem:[%s12 + $0x198] sm:$0xff]
  %v3718 = vld [vmem:[%s12 + $0x1a0] sm:$0xff]
  %v3719 = vld [vmem:[%s12 + $0x1a8] sm:$0xff]
  %v3720 = vld [vmem:[%s12 + $0x1b0] sm:$0xff]
  %v3721 = vld [vmem:[%s12 + $0x1b8] sm:$0xff]
  %v3722 = vld [vmem:[%s12 + $0x1c0] sm:$0xff]
  %v3723 = vld [vmem:[%s12 + $0x1c8] sm:$0xff]
  %v3724 = vld [vmem:[%s12 + $0x1d0] sm:$0xff]
  %v3725 = vld [vmem:[%s12 + $0x1d8] sm:$0xff]
  %v3726 = vld [vmem:[%s12 + $0x1e0] sm:$0xff]
  %v3727 = vld [vmem:[%s12 + $0x1e8] sm:$0xff]
  %v3728 = vld [vmem:[%s12 + $0x1f0] sm:$0xff]
  %v3729 = vld [vmem:[%s12 + $0x1f8] sm:$0xff]
  %3730 = vmatprep.subr.mxu0 0.0
  %3731 = vmatpush1.msra.mxu0 %v3666
  %3732 = vmatprep.subr.mxu0 0.0
  %3733 = vmatpush1.msra.mxu0 %v3667
  %3734 = vmatprep.subr.mxu0 0.0
  %3735 = vmatpush1.msra.mxu0 %v3668
  %3736 = vmatprep.subr.mxu0 0.0
  %3737 = vmatpush1.msra.mxu0 %v3669
  %3738 = vmatprep.subr.mxu0 0.0
  %3739 = vmatpush1.msra.mxu0 %v3670
  %3740 = vmatprep.subr.mxu0 0.0
  %3741 = vmatpush1.msra.mxu0 %v3671
  %3742 = vmatprep.subr.mxu0 0.0
  %3743 = vmatpush1.msra.mxu0 %v3672
  %3744 = vmatprep.subr.mxu0 0.0
  %3745 = vmatpush1.msra.mxu0 %v3673
  %3746 = vmatprep.subr.mxu0 0.0
  %3747 = vmatpush1.msra.mxu0 %v3674
  %3748 = vmatprep.subr.mxu0 0.0
  %3749 = vmatpush1.msra.mxu0 %v3675
  %3750 = vmatprep.subr.mxu0 0.0
  %3751 = vmatpush1.msra.mxu0 %v3676
  %3752 = vmatprep.subr.mxu0 0.0
  %3753 = vmatpush1.msra.mxu0 %v3677
  %3754 = vmatprep.subr.mxu0 0.0
  %3755 = vmatpush1.msra.mxu0 %v3678
  %3756 = vmatprep.subr.mxu0 0.0
  %3757 = vmatpush1.msra.mxu0 %v3679
  %3758 = vmatprep.subr.mxu0 0.0
  %3759 = vmatpush1.msra.mxu0 %v3680
  %3760 = vmatprep.subr.mxu0 0.0
  %3761 = vmatpush1.msra.mxu0 %v3681
  %3762 = vmatprep.subr.mxu0 0.0
  %3763 = vmatpush1.msra.mxu0 %v3682
  %3764 = vmatprep.subr.mxu0 0.0
  %3765 = vmatpush1.msra.mxu0 %v3683
  %3766 = vmatprep.subr.mxu0 0.0
  %3767 = vmatpush1.msra.mxu0 %v3684
  %3768 = vmatprep.subr.mxu0 0.0
  %3769 = vmatpush1.msra.mxu0 %v3685
  %3770 = vmatprep.subr.mxu0 0.0
  %3771 = vmatpush1.msra.mxu0 %v3686
  %3772 = vmatprep.subr.mxu0 0.0
  %3773 = vmatpush1.msra.mxu0 %v3687
  %3774 = vmatprep.subr.mxu0 0.0
  %3775 = vmatpush1.msra.mxu0 %v3688
  %3776 = vmatprep.subr.mxu0 0.0
  %3777 = vmatpush1.msra.mxu0 %v3689
  %3778 = vmatprep.subr.mxu0 0.0
  %3779 = vmatpush1.msra.mxu0 %v3690
  %3780 = vmatprep.subr.mxu0 0.0
  %3781 = vmatpush1.msra.mxu0 %v3691
  %3782 = vmatprep.subr.mxu0 0.0
  %3783 = vmatpush1.msra.mxu0 %v3692
  %3784 = vmatprep.subr.mxu0 0.0
  %3785 = vmatpush1.msra.mxu0 %v3693
  %3786 = vmatprep.subr.mxu0 0.0
  %3787 = vmatpush1.msra.mxu0 %v3694
  %3788 = vmatprep.subr.mxu0 0.0
  %3789 = vmatpush1.msra.mxu0 %v3695
  %3790 = vmatprep.subr.mxu0 0.0
  %3791 = vmatpush1.msra.mxu0 %v3696
  %3792 = vmatprep.subr.mxu0 0.0
  %3793 = vmatpush1.msra.mxu0 %v3697
  %3794 = vmatprep.mubr.f32.mxu0 %v3663
  %3795 = vmatmul.mubr.f32.gmra.mrb[0].mxu0 %v3662
  %v3796 = vpop.f32.mrb[0].mxu0
  %v3797 = vadd.f32 0.0, %v3796
  %v3798 = vpop.f32.mrb[0].mxu0
  %3799 = vdwg.mxu0
  %3800 = vmatprep.subr.mxu0 0.0
  %3801 = vmatpush1.msra.mxu0 %v3698
  %3802 = vmatprep.subr.mxu0 0.0
  %3803 = vmatpush1.msra.mxu0 %v3699
  %3804 = vmatprep.subr.mxu0 0.0
  %3805 = vmatpush1.msra.mxu0 %v3700
  %3806 = vmatprep.subr.mxu0 0.0
  %3807 = vmatpush1.msra.mxu0 %v3701
  %3808 = vmatprep.subr.mxu0 0.0
  %3809 = vmatpush1.msra.mxu0 %v3702
  %3810 = vmatprep.subr.mxu0 0.0
  %3811 = vmatpush1.msra.mxu0 %v3703
  %3812 = vmatprep.subr.mxu0 0.0
  %3813 = vmatpush1.msra.mxu0 %v3704
  %3814 = vmatprep.subr.mxu0 0.0
  %3815 = vmatpush1.msra.mxu0 %v3705
  %3816 = vmatprep.subr.mxu0 0.0
  %3817 = vmatpush1.msra.mxu0 %v3706
  %3818 = vmatprep.subr.mxu0 0.0
  %3819 = vmatpush1.msra.mxu0 %v3707
  %3820 = vmatprep.subr.mxu0 0.0
  %3821 = vmatpush1.msra.mxu0 %v3708
  %3822 = vmatprep.subr.mxu0 0.0
  %3823 = vmatpush1.msra.mxu0 %v3709
  %3824 = vmatprep.subr.mxu0 0.0
  %3825 = vmatpush1.msra.mxu0 %v3710
  %3826 = vmatprep.subr.mxu0 0.0
  %3827 = vmatpush1.msra.mxu0 %v3711
  %3828 = vmatprep.subr.mxu0 0.0
  %3829 = vmatpush1.msra.mxu0 %v3712
  %3830 = vmatprep.subr.mxu0 0.0
  %3831 = vmatpush1.msra.mxu0 %v3713
  %3832 = vmatprep.subr.mxu0 0.0
  %3833 = vmatpush1.msra.mxu0 %v3714
  %3834 = vmatprep.subr.mxu0 0.0
  %3835 = vmatpush1.msra.mxu0 %v3715
  %3836 = vmatprep.subr.mxu0 0.0
  %3837 = vmatpush1.msra.mxu0 %v3716
  %3838 = vmatprep.subr.mxu0 0.0
  %3839 = vmatpush1.msra.mxu0 %v3717
  %3840 = vmatprep.subr.mxu0 0.0
  %3841 = vmatpush1.msra.mxu0 %v3718
  %3842 = vmatprep.subr.mxu0 0.0
  %3843 = vmatpush1.msra.mxu0 %v3719
  %3844 = vmatprep.subr.mxu0 0.0
  %3845 = vmatpush1.msra.mxu0 %v3720
  %3846 = vmatprep.subr.mxu0 0.0
  %3847 = vmatpush1.msra.mxu0 %v3721
  %3848 = vmatprep.subr.mxu0 0.0
  %3849 = vmatpush1.msra.mxu0 %v3722
  %3850 = vmatprep.subr.mxu0 0.0
  %3851 = vmatpush1.msra.mxu0 %v3723
  %3852 = vmatprep.subr.mxu0 0.0
  %3853 = vmatpush1.msra.mxu0 %v3724
  %3854 = vmatprep.subr.mxu0 0.0
  %3855 = vmatpush1.msra.mxu0 %v3725
  %3856 = vmatprep.subr.mxu0 0.0
  %3857 = vmatpush1.msra.mxu0 %v3726
  %3858 = vmatprep.subr.mxu0 0.0
  %3859 = vmatpush1.msra.mxu0 %v3727
  %3860 = vmatprep.subr.mxu0 0.0
  %3861 = vmatpush1.msra.mxu0 %v3728
  %3862 = vmatprep.subr.mxu0 0.0
  %3863 = vmatpush1.msra.mxu0 %v3729
  %3864 = vmatprep.mubr.f32.mxu0 %v3665
  %3865 = vmatmul.mubr.f32.gmra.mrb[0].mxu0 %v3664
  %v3866 = vpop.f32.mrb[0].mxu0
  %v3867 = vadd.f32 %v3797, %v3866
  %v3868 = vpop.f32.mrb[0].mxu0
  %3869 = vdwg.mxu0
  %v3870 = vld [vmem:[%s13] sm:$0xff]
  %v3871 = vld [vmem:[%s13 + $0x8] sm:$0xff]
  %v3872 = vld [vmem:[%s13 + $0x10] sm:$0xff]
  %v3873 = vld [vmem:[%s13 + $0x18] sm:$0xff]
  %v3874 = vld [vmem:[%s13 + $0x20] sm:$0xff]
  %v3875 = vld [vmem:[%s13 + $0x28] sm:$0xff]
  %v3876 = vld [vmem:[%s13 + $0x30] sm:$0xff]
  %v3877 = vld [vmem:[%s13 + $0x38] sm:$0xff]
  %v3878 = vld [vmem:[%s13 + $0x40] sm:$0xff]
  %v3879 = vld [vmem:[%s13 + $0x48] sm:$0xff]
  %v3880 = vld [vmem:[%s13 + $0x50] sm:$0xff]
  %v3881 = vld [vmem:[%s13 + $0x58] sm:$0xff]
  %v3882 = vld [vmem:[%s13 + $0x60] sm:$0xff]
  %v3883 = vld [vmem:[%s13 + $0x68] sm:$0xff]
  %v3884 = vld [vmem:[%s13 + $0x70] sm:$0xff]
  %v3885 = vld [vmem:[%s13 + $0x78] sm:$0xff]
  %v3886 = vld [vmem:[%s13 + $0x80] sm:$0xff]
  %v3887 = vld [vmem:[%s13 + $0x88] sm:$0xff]
  %v3888 = vld [vmem:[%s13 + $0x90] sm:$0xff]
  %v3889 = vld [vmem:[%s13 + $0x98] sm:$0xff]
  %v3890 = vld [vmem:[%s13 + $0xa0] sm:$0xff]
  %v3891 = vld [vmem:[%s13 + $0xa8] sm:$0xff]
  %v3892 = vld [vmem:[%s13 + $0xb0] sm:$0xff]
  %v3893 = vld [vmem:[%s13 + $0xb8] sm:$0xff]
  %v3894 = vld [vmem:[%s13 + $0xc0] sm:$0xff]
  %v3895 = vld [vmem:[%s13 + $0xc8] sm:$0xff]
  %v3896 = vld [vmem:[%s13 + $0xd0] sm:$0xff]
  %v3897 = vld [vmem:[%s13 + $0xd8] sm:$0xff]
  %v3898 = vld [vmem:[%s13 + $0xe0] sm:$0xff]
  %v3899 = vld [vmem:[%s13 + $0xe8] sm:$0xff]
  %v3900 = vld [vmem:[%s13 + $0xf0] sm:$0xff]
  %v3901 = vld [vmem:[%s13 + $0xf8] sm:$0xff]
  %v3902 = vld [vmem:[%s13 + $0x100] sm:$0xff]
  %v3903 = vld [vmem:[%s13 + $0x108] sm:$0xff]
  %v3904 = vld [vmem:[%s13 + $0x110] sm:$0xff]
  %v3905 = vld [vmem:[%s13 + $0x118] sm:$0xff]
  %v3906 = vld [vmem:[%s13 + $0x120] sm:$0xff]
  %v3907 = vld [vmem:[%s13 + $0x128] sm:$0xff]
  %v3908 = vld [vmem:[%s13 + $0x130] sm:$0xff]
  %v3909 = vld [vmem:[%s13 + $0x138] sm:$0xff]
  %v3910 = vld [vmem:[%s13 + $0x140] sm:$0xff]
  %v3911 = vld [vmem:[%s13 + $0x148] sm:$0xff]
  %v3912 = vld [vmem:[%s13 + $0x150] sm:$0xff]
  %v3913 = vld [vmem:[%s13 + $0x158] sm:$0xff]
  %v3914 = vld [vmem:[%s13 + $0x160] sm:$0xff]
  %v3915 = vld [vmem:[%s13 + $0x168] sm:$0xff]
  %v3916 = vld [vmem:[%s13 + $0x170] sm:$0xff]
  %v3917 = vld [vmem:[%s13 + $0x178] sm:$0xff]
  %v3918 = vld [vmem:[%s13 + $0x180] sm:$0xff]
  %v3919 = vld [vmem:[%s13 + $0x188] sm:$0xff]
  %v3920 = vld [vmem:[%s13 + $0x190] sm:$0xff]
  %v3921 = vld [vmem:[%s13 + $0x198] sm:$0xff]
  %v3922 = vld [vmem:[%s13 + $0x1a0] sm:$0xff]
  %v3923 = vld [vmem:[%s13 + $0x1a8] sm:$0xff]
  %v3924 = vld [vmem:[%s13 + $0x1b0] sm:$0xff]
  %v3925 = vld [vmem:[%s13 + $0x1b8] sm:$0xff]
  %v3926 = vld [vmem:[%s13 + $0x1c0] sm:$0xff]
  %v3927 = vld [vmem:[%s13 + $0x1c8] sm:$0xff]
  %v3928 = vld [vmem:[%s13 + $0x1d0] sm:$0xff]
  %v3929 = vld [vmem:[%s13 + $0x1d8] sm:$0xff]
  %v3930 = vld [vmem:[%s13 + $0x1e0] sm:$0xff]
  %v3931 = vld [vmem:[%s13 + $0x1e8] sm:$0xff]
  %v3932 = vld [vmem:[%s13 + $0x1f0] sm:$0xff]
  %v3933 = vld [vmem:[%s13 + $0x1f8] sm:$0xff]
  %3934 = vmatprep.subr.mxu0 0.0
  %3935 = vmatpush1.msra.mxu0 %v3870
  %3936 = vmatprep.subr.mxu0 0.0
  %3937 = vmatpush1.msra.mxu0 %v3871
  %3938 = vmatprep.subr.mxu0 0.0
  %3939 = vmatpush1.msra.mxu0 %v3872
  %3940 = vmatprep.subr.mxu0 0.0
  %3941 = vmatpush1.msra.mxu0 %v3873
  %3942 = vmatprep.subr.mxu0 0.0
  %3943 = vmatpush1.msra.mxu0 %v3874
  %3944 = vmatprep.subr.mxu0 0.0
  %3945 = vmatpush1.msra.mxu0 %v3875
  %3946 = vmatprep.subr.mxu0 0.0
  %3947 = vmatpush1.msra.mxu0 %v3876
  %3948 = vmatprep.subr.mxu0 0.0
  %3949 = vmatpush1.msra.mxu0 %v3877
  %3950 = vmatprep.subr.mxu0 0.0
  %3951 = vmatpush1.msra.mxu0 %v3878
  %3952 = vmatprep.subr.mxu0 0.0
  %3953 = vmatpush1.msra.mxu0 %v3879
  %3954 = vmatprep.subr.mxu0 0.0
  %3955 = vmatpush1.msra.mxu0 %v3880
  %3956 = vmatprep.subr.mxu0 0.0
  %3957 = vmatpush1.msra.mxu0 %v3881
  %3958 = vmatprep.subr.mxu0 0.0
  %3959 = vmatpush1.msra.mxu0 %v3882
  %3960 = vmatprep.subr.mxu0 0.0
  %3961 = vmatpush1.msra.mxu0 %v3883
  %3962 = vmatprep.subr.mxu0 0.0
  %3963 = vmatpush1.msra.mxu0 %v3884
  %3964 = vmatprep.subr.mxu0 0.0
  %3965 = vmatpush1.msra.mxu0 %v3885
  %3966 = vmatprep.subr.mxu0 0.0
  %3967 = vmatpush1.msra.mxu0 %v3886
  %3968 = vmatprep.subr.mxu0 0.0
  %3969 = vmatpush1.msra.mxu0 %v3887
  %3970 = vmatprep.subr.mxu0 0.0
  %3971 = vmatpush1.msra.mxu0 %v3888
  %3972 = vmatprep.subr.mxu0 0.0
  %3973 = vmatpush1.msra.mxu0 %v3889
  %3974 = vmatprep.subr.mxu0 0.0
  %3975 = vmatpush1.msra.mxu0 %v3890
  %3976 = vmatprep.subr.mxu0 0.0
  %3977 = vmatpush1.msra.mxu0 %v3891
  %3978 = vmatprep.subr.mxu0 0.0
  %3979 = vmatpush1.msra.mxu0 %v3892
  %3980 = vmatprep.subr.mxu0 0.0
  %3981 = vmatpush1.msra.mxu0 %v3893
  %3982 = vmatprep.subr.mxu0 0.0
  %3983 = vmatpush1.msra.mxu0 %v3894
  %3984 = vmatprep.subr.mxu0 0.0
  %3985 = vmatpush1.msra.mxu0 %v3895
  %3986 = vmatprep.subr.mxu0 0.0
  %3987 = vmatpush1.msra.mxu0 %v3896
  %3988 = vmatprep.subr.mxu0 0.0
  %3989 = vmatpush1.msra.mxu0 %v3897
  %3990 = vmatprep.subr.mxu0 0.0
  %3991 = vmatpush1.msra.mxu0 %v3898
  %3992 = vmatprep.subr.mxu0 0.0
  %3993 = vmatpush1.msra.mxu0 %v3899
  %3994 = vmatprep.subr.mxu0 0.0
  %3995 = vmatpush1.msra.mxu0 %v3900
  %3996 = vmatprep.subr.mxu0 0.0
  %3997 = vmatpush1.msra.mxu0 %v3901
  %3998 = vmatprep.mubr.f32.mxu0 %v3663
  %3999 = vmatmul.mubr.f32.gmra.mrb[0].mxu0 %v3662
  %v4000 = vpop.f32.mrb[0].mxu0
  %v4001 = vadd.f32 0.0, %v4000
  %v4002 = vpop.f32.mrb[0].mxu0
  %4003 = vdwg.mxu0
  %4004 = vmatprep.subr.mxu0 0.0
  %4005 = vmatpush1.msra.mxu0 %v3902
  %4006 = vmatprep.subr.mxu0 0.0
  %4007 = vmatpush1.msra.mxu0 %v3903
  %4008 = vmatprep.subr.mxu0 0.0
  %4009 = vmatpush1.msra.mxu0 %v3904
  %4010 = vmatprep.subr.mxu0 0.0
  %4011 = vmatpush1.msra.mxu0 %v3905
  %4012 = vmatprep.subr.mxu0 0.0
  %4013 = vmatpush1.msra.mxu0 %v3906
  %4014 = vmatprep.subr.mxu0 0.0
  %4015 = vmatpush1.msra.mxu0 %v3907
  %4016 = vmatprep.subr.mxu0 0.0
  %4017 = vmatpush1.msra.mxu0 %v3908
  %4018 = vmatprep.subr.mxu0 0.0
  %4019 = vmatpush1.msra.mxu0 %v3909
  %4020 = vmatprep.subr.mxu0 0.0
  %4021 = vmatpush1.msra.mxu0 %v3910
  %4022 = vmatprep.subr.mxu0 0.0
  %4023 = vmatpush1.msra.mxu0 %v3911
  %4024 = vmatprep.subr.mxu0 0.0
  %4025 = vmatpush1.msra.mxu0 %v3912
  %4026 = vmatprep.subr.mxu0 0.0
  %4027 = vmatpush1.msra.mxu0 %v3913
  %4028 = vmatprep.subr.mxu0 0.0
  %4029 = vmatpush1.msra.mxu0 %v3914
  %4030 = vmatprep.subr.mxu0 0.0
  %4031 = vmatpush1.msra.mxu0 %v3915
  %4032 = vmatprep.subr.mxu0 0.0
  %4033 = vmatpush1.msra.mxu0 %v3916
  %4034 = vmatprep.subr.mxu0 0.0
  %4035 = vmatpush1.msra.mxu0 %v3917
  %4036 = vmatprep.subr.mxu0 0.0
  %4037 = vmatpush1.msra.mxu0 %v3918
  %4038 = vmatprep.subr.mxu0 0.0
  %4039 = vmatpush1.msra.mxu0 %v3919
  %4040 = vmatprep.subr.mxu0 0.0
  %4041 = vmatpush1.msra.mxu0 %v3920
  %4042 = vmatprep.subr.mxu0 0.0
  %4043 = vmatpush1.msra.mxu0 %v3921
  %4044 = vmatprep.subr.mxu0 0.0
  %4045 = vmatpush1.msra.mxu0 %v3922
  %4046 = vmatprep.subr.mxu0 0.0
  %4047 = vmatpush1.msra.mxu0 %v3923
  %4048 = vmatprep.subr.mxu0 0.0
  %4049 = vmatpush1.msra.mxu0 %v3924
  %4050 = vmatprep.subr.mxu0 0.0
  %4051 = vmatpush1.msra.mxu0 %v3925
  %4052 = vmatprep.subr.mxu0 0.0
  %4053 = vmatpush1.msra.mxu0 %v3926
  %4054 = vmatprep.subr.mxu0 0.0
  %4055 = vmatpush1.msra.mxu0 %v3927
  %4056 = vmatprep.subr.mxu0 0.0
  %4057 = vmatpush1.msra.mxu0 %v3928
  %4058 = vmatprep.subr.mxu0 0.0
  %4059 = vmatpush1.msra.mxu0 %v3929
  %4060 = vmatprep.subr.mxu0 0.0
  %4061 = vmatpush1.msra.mxu0 %v3930
  %4062 = vmatprep.subr.mxu0 0.0
  %4063 = vmatpush1.msra.mxu0 %v3931
  %4064 = vmatprep.subr.mxu0 0.0
  %4065 = vmatpush1.msra.mxu0 %v3932
  %4066 = vmatprep.subr.mxu0 0.0
  %4067 = vmatpush1.msra.mxu0 %v3933
  %4068 = vmatprep.mubr.f32.mxu0 %v3665
  %4069 = vmatmul.mubr.f32.gmra.mrb[0].mxu0 %v3664
  %v4070 = vpop.f32.mrb[0].mxu0
  %v4071 = vadd.f32 %v4001, %v4070
  %v4072 = vpop.f32.mrb[0].mxu0
  %4073 = vdwg.mxu0
  %v4074 = vld [vmem:[%s6] sm:$0xff]
  %v4075 = vld [vmem:[%s7] sm:$0xff]
  %4077 = vset.pattern.permute.xlu0 0
  %4078 = vperm.xlu0 %4077, %v4075
  %v4079 = vpop.permute.xlu0 %4078
  %v4082 = vsel %vm171, %v4074, 0
  %v4085 = vsel %vm101, %v3867, 0
  %4087 = vmatprep.subr.mxu0 0.0
  %4088 = vmatpush1.msra.mxu0 %v4085
  %4089 = vmatprep.subr.mxu0 0.0
  %4090 = vmatpush1.msra.mxu0 0.0
  %4091 = vmatprep.subr.mxu0 0.0
  %4092 = vmatpush1.msra.mxu0 0.0
  %4093 = vmatprep.subr.mxu0 0.0
  %4094 = vmatpush1.msra.mxu0 0.0
  %4095 = vmatprep.subr.mxu0 0.0
  %4096 = vmatpush1.msra.mxu0 0.0
  %4097 = vmatprep.subr.mxu0 0.0
  %4098 = vmatpush1.msra.mxu0 0.0
  %4099 = vmatprep.subr.mxu0 0.0
  %4100 = vmatpush1.msra.mxu0 0.0
  %4101 = vmatprep.subr.mxu0 0.0
  %4102 = vmatpush1.msra.mxu0 0.0
  %4103 = vmatprep.subr.mxu0 0.0
  %4104 = vmatpush1.msra.mxu0 0.0
  %4105 = vmatprep.subr.mxu0 0.0
  %4106 = vmatpush1.msra.mxu0 0.0
  %4107 = vmatprep.subr.mxu0 0.0
  %4108 = vmatpush1.msra.mxu0 0.0
  %4109 = vmatprep.subr.mxu0 0.0
  %4110 = vmatpush1.msra.mxu0 0.0
  %4111 = vmatprep.subr.mxu0 0.0
  %4112 = vmatpush1.msra.mxu0 0.0
  %4113 = vmatprep.subr.mxu0 0.0
  %4114 = vmatpush1.msra.mxu0 0.0
  %4115 = vmatprep.subr.mxu0 0.0
  %4116 = vmatpush1.msra.mxu0 0.0
  %4117 = vmatprep.subr.mxu0 0.0
  %4118 = vmatpush1.msra.mxu0 0.0
  %4119 = vmatprep.subr.mxu0 0.0
  %4120 = vmatpush1.msra.mxu0 0.0
  %4121 = vmatprep.subr.mxu0 0.0
  %4122 = vmatpush1.msra.mxu0 0.0
  %4123 = vmatprep.subr.mxu0 0.0
  %4124 = vmatpush1.msra.mxu0 0.0
  %4125 = vmatprep.subr.mxu0 0.0
  %4126 = vmatpush1.msra.mxu0 0.0
  %4127 = vmatprep.subr.mxu0 0.0
  %4128 = vmatpush1.msra.mxu0 0.0
  %4129 = vmatprep.subr.mxu0 0.0
  %4130 = vmatpush1.msra.mxu0 0.0
  %4131 = vmatprep.subr.mxu0 0.0
  %4132 = vmatpush1.msra.mxu0 0.0
  %4133 = vmatprep.subr.mxu0 0.0
  %4134 = vmatpush1.msra.mxu0 0.0
  %4135 = vmatprep.subr.mxu0 0.0
  %4136 = vmatpush1.msra.mxu0 0.0
  %4137 = vmatprep.subr.mxu0 0.0
  %4138 = vmatpush1.msra.mxu0 0.0
  %4139 = vmatprep.subr.mxu0 0.0
  %4140 = vmatpush1.msra.mxu0 0.0
  %4141 = vmatprep.subr.mxu0 0.0
  %4142 = vmatpush1.msra.mxu0 0.0
  %4143 = vmatprep.subr.mxu0 0.0
  %4144 = vmatpush1.msra.mxu0 0.0
  %4145 = vmatprep.subr.mxu0 0.0
  %4146 = vmatpush1.msra.mxu0 0.0
  %4147 = vmatprep.subr.mxu0 0.0
  %4148 = vmatpush1.msra.mxu0 0.0
  %4149 = vmatprep.subr.mxu0 0.0
  %4150 = vmatpush1.msra.mxu0 0.0
  %4151 = vmatprep.mubr.f32.mxu0 0.0
  %4152 = vmatmul.mubr.f32.gmra.mrb[0].mxu0 %v4082
  %v4153 = vpop.f32.mrb[0].mxu0
  %v4154 = vadd.f32 %v4079, %v4153
  %v4155 = vpop.f32.mrb[0].mxu0
  %4156 = vdwg.mxu0
  %v4157 = vadd.f32 %v4154, 3.0
  %v4158 = vmax.f32 %v4157, 0.0
  %v4159 = vmin.f32 %v4158, 6.0
  %v4160 = vmul.f32 %v4154, %v4159
  %v4161 = vmul.f32 %v4160, 0.16666667
  %v4163 = vsel %vm101, %v4071, 0
  %4165 = vmatprep.subr.mxu0 0.0
  %4166 = vmatpush1.msra.mxu0 %v4163
  %4167 = vmatprep.subr.mxu0 0.0
  %4168 = vmatpush1.msra.mxu0 0.0
  %4169 = vmatprep.subr.mxu0 0.0
  %4170 = vmatpush1.msra.mxu0 0.0
  %4171 = vmatprep.subr.mxu0 0.0
  %4172 = vmatpush1.msra.mxu0 0.0
  %4173 = vmatprep.subr.mxu0 0.0
  %4174 = vmatpush1.msra.mxu0 0.0
  %4175 = vmatprep.subr.mxu0 0.0
  %4176 = vmatpush1.msra.mxu0 0.0
  %4177 = vmatprep.subr.mxu0 0.0
  %4178 = vmatpush1.msra.mxu0 0.0
  %4179 = vmatprep.subr.mxu0 0.0
  %4180 = vmatpush1.msra.mxu0 0.0
  %4181 = vmatprep.subr.mxu0 0.0
  %4182 = vmatpush1.msra.mxu0 0.0
  %4183 = vmatprep.subr.mxu0 0.0
  %4184 = vmatpush1.msra.mxu0 0.0
  %4185 = vmatprep.subr.mxu0 0.0
  %4186 = vmatpush1.msra.mxu0 0.0
  %4187 = vmatprep.subr.mxu0 0.0
  %4188 = vmatpush1.msra.mxu0 0.0
  %4189 = vmatprep.subr.mxu0 0.0
  %4190 = vmatpush1.msra.mxu0 0.0
  %4191 = vmatprep.subr.mxu0 0.0
  %4192 = vmatpush1.msra.mxu0 0.0
  %4193 = vmatprep.subr.mxu0 0.0
  %4194 = vmatpush1.msra.mxu0 0.0
  %4195 = vmatprep.subr.mxu0 0.0
  %4196 = vmatpush1.msra.mxu0 0.0
  %4197 = vmatprep.subr.mxu0 0.0
  %4198 = vmatpush1.msra.mxu0 0.0
  %4199 = vmatprep.subr.mxu0 0.0
  %4200 = vmatpush1.msra.mxu0 0.0
  %4201 = vmatprep.subr.mxu0 0.0
  %4202 = vmatpush1.msra.mxu0 0.0
  %4203 = vmatprep.subr.mxu0 0.0
  %4204 = vmatpush1.msra.mxu0 0.0
  %4205 = vmatprep.subr.mxu0 0.0
  %4206 = vmatpush1.msra.mxu0 0.0
  %4207 = vmatprep.subr.mxu0 0.0
  %4208 = vmatpush1.msra.mxu0 0.0
  %4209 = vmatprep.subr.mxu0 0.0
  %4210 = vmatpush1.msra.mxu0 0.0
  %4211 = vmatprep.subr.mxu0 0.0
  %4212 = vmatpush1.msra.mxu0 0.0
  %4213 = vmatprep.subr.mxu0 0.0
  %4214 = vmatpush1.msra.mxu0 0.0
  %4215 = vmatprep.subr.mxu0 0.0
  %4216 = vmatpush1.msra.mxu0 0.0
  %4217 = vmatprep.subr.mxu0 0.0
  %4218 = vmatpush1.msra.mxu0 0.0
  %4219 = vmatprep.subr.mxu0 0.0
  %4220 = vmatpush1.msra.mxu0 0.0
  %4221 = vmatprep.subr.mxu0 0.0
  %4222 = vmatpush1.msra.mxu0 0.0
  %4223 = vmatprep.subr.mxu0 0.0
  %4224 = vmatpush1.msra.mxu0 0.0
  %4225 = vmatprep.subr.mxu0 0.0
  %4226 = vmatpush1.msra.mxu0 0.0
  %4227 = vmatprep.subr.mxu0 0.0
  %4228 = vmatpush1.msra.mxu0 0.0
  %4229 = vmatprep.mubr.f32.mxu0 0.0
  %4230 = vmatmul.mubr.f32.gmra.mrb[0].mxu0 %v4082
  %v4231 = vpop.f32.mrb[0].mxu0
  %v4232 = vadd.f32 %v4079, %v4231
  %v4233 = vpop.f32.mrb[0].mxu0
  %4234 = vdwg.mxu0
  %v4235 = vadd.f32 %v4232, 3.0
  %v4236 = vmax.f32 %v4235, 0.0
  %v4237 = vmin.f32 %v4236, 6.0
  %v4238 = vmul.f32 %v4232, %v4237
  %v4239 = vmul.f32 %v4238, 0.16666667
  %v4240 = vld [vmem:[%s8] sm:$0xf]
  %v4241 = vld [vmem:[%s9] sm:$0xf]
  %4243 = vset.pattern.permute.xlu0 0
  %4244 = vperm.xlu0 %4243, %v4241
  %v4245 = vpop.permute.xlu0 %4244
  %vm4247 = vcmask 64512
  %v4249 = vsel %vm4247, %v4240, 0
  %4251 = vmatprep.subr.mxu0 0.0
  %4252 = vmatpush1.msra.mxu0 %v4161
  %4253 = vmatprep.subr.mxu0 0.0
  %4254 = vmatpush1.msra.mxu0 0.0
  %4255 = vmatprep.subr.mxu0 0.0
  %4256 = vmatpush1.msra.mxu0 0.0
  %4257 = vmatprep.subr.mxu0 0.0
  %4258 = vmatpush1.msra.mxu0 0.0
  %4259 = vmatprep.subr.mxu0 0.0
  %4260 = vmatpush1.msra.mxu0 0.0
  %4261 = vmatprep.subr.mxu0 0.0
  %4262 = vmatpush1.msra.mxu0 0.0
  %4263 = vmatprep.subr.mxu0 0.0
  %4264 = vmatpush1.msra.mxu0 0.0
  %4265 = vmatprep.subr.mxu0 0.0
  %4266 = vmatpush1.msra.mxu0 0.0
  %4267 = vmatprep.subr.mxu0 0.0
  %4268 = vmatpush1.msra.mxu0 0.0
  %4269 = vmatprep.subr.mxu0 0.0
  %4270 = vmatpush1.msra.mxu0 0.0
  %4271 = vmatprep.subr.mxu0 0.0
  %4272 = vmatpush1.msra.mxu0 0.0
  %4273 = vmatprep.subr.mxu0 0.0
  %4274 = vmatpush1.msra.mxu0 0.0
  %4275 = vmatprep.subr.mxu0 0.0
  %4276 = vmatpush1.msra.mxu0 0.0
  %4277 = vmatprep.subr.mxu0 0.0
  %4278 = vmatpush1.msra.mxu0 0.0
  %4279 = vmatprep.subr.mxu0 0.0
  %4280 = vmatpush1.msra.mxu0 0.0
  %4281 = vmatprep.subr.mxu0 0.0
  %4282 = vmatpush1.msra.mxu0 0.0
  %4283 = vmatprep.subr.mxu0 0.0
  %4284 = vmatpush1.msra.mxu0 0.0
  %4285 = vmatprep.subr.mxu0 0.0
  %4286 = vmatpush1.msra.mxu0 0.0
  %4287 = vmatprep.subr.mxu0 0.0
  %4288 = vmatpush1.msra.mxu0 0.0
  %4289 = vmatprep.subr.mxu0 0.0
  %4290 = vmatpush1.msra.mxu0 0.0
  %4291 = vmatprep.subr.mxu0 0.0
  %4292 = vmatpush1.msra.mxu0 0.0
  %4293 = vmatprep.subr.mxu0 0.0
  %4294 = vmatpush1.msra.mxu0 0.0
  %4295 = vmatprep.subr.mxu0 0.0
  %4296 = vmatpush1.msra.mxu0 0.0
  %4297 = vmatprep.subr.mxu0 0.0
  %4298 = vmatpush1.msra.mxu0 0.0
  %4299 = vmatprep.subr.mxu0 0.0
  %4300 = vmatpush1.msra.mxu0 0.0
  %4301 = vmatprep.subr.mxu0 0.0
  %4302 = vmatpush1.msra.mxu0 0.0
  %4303 = vmatprep.subr.mxu0 0.0
  %4304 = vmatpush1.msra.mxu0 0.0
  %4305 = vmatprep.subr.mxu0 0.0
  %4306 = vmatpush1.msra.mxu0 0.0
  %4307 = vmatprep.subr.mxu0 0.0
  %4308 = vmatpush1.msra.mxu0 0.0
  %4309 = vmatprep.subr.mxu0 0.0
  %4310 = vmatpush1.msra.mxu0 0.0
  %4311 = vmatprep.subr.mxu0 0.0
  %4312 = vmatpush1.msra.mxu0 0.0
  %4313 = vmatprep.subr.mxu0 0.0
  %4314 = vmatpush1.msra.mxu0 0.0
  %4315 = vmatprep.mubr.f32.mxu0 0.0
  %4316 = vmatmul.mubr.f32.gmra.mrb[0].mxu0 %v4249
  %v4317 = vpop.f32.mrb[0].mxu0
  %v4318 = vadd.f32 %v4245, %v4317
  %v4319 = vpop.f32.mrb[0].mxu0
  %4320 = vdwg.mxu0
  %v4321 = vsub.f32 0.0, %v4318
  %v4322 = vmul.f32 %v4321, 1.442695
  %v4323 = vpow.pop %v4322
  %v4324 = vadd.f32 %v4323, 1.0
  %v4325 = vrcp.pop %v4324
  %v4326 = vmul.f32 1.0, %v4325
  %v4327 = vld [vmem:[%s10] sm:$0xf]
  %v4328 = vld [vmem:[%s11] sm:$0xf]
  %4330 = vset.pattern.permute.xlu0 0
  %4331 = vperm.xlu0 %4330, %v4328
  %v4332 = vpop.permute.xlu0 %4331
  %v4335 = vsel %vm4247, %v4327, 0
  %4337 = vmatprep.subr.mxu0 0.0
  %4338 = vmatpush1.msra.mxu0 %v4239
  %4339 = vmatprep.subr.mxu0 0.0
  %4340 = vmatpush1.msra.mxu0 0.0
  %4341 = vmatprep.subr.mxu0 0.0
  %4342 = vmatpush1.msra.mxu0 0.0
  %4343 = vmatprep.subr.mxu0 0.0
  %4344 = vmatpush1.msra.mxu0 0.0
  %4345 = vmatprep.subr.mxu0 0.0
  %4346 = vmatpush1.msra.mxu0 0.0
  %4347 = vmatprep.subr.mxu0 0.0
  %4348 = vmatpush1.msra.mxu0 0.0
  %4349 = vmatprep.subr.mxu0 0.0
  %4350 = vmatpush1.msra.mxu0 0.0
  %4351 = vmatprep.subr.mxu0 0.0
  %4352 = vmatpush1.msra.mxu0 0.0
  %4353 = vmatprep.subr.mxu0 0.0
  %4354 = vmatpush1.msra.mxu0 0.0
  %4355 = vmatprep.subr.mxu0 0.0
  %4356 = vmatpush1.msra.mxu0 0.0
  %4357 = vmatprep.subr.mxu0 0.0
  %4358 = vmatpush1.msra.mxu0 0.0
  %4359 = vmatprep.subr.mxu0 0.0
  %4360 = vmatpush1.msra.mxu0 0.0
  %4361 = vmatprep.subr.mxu0 0.0
  %4362 = vmatpush1.msra.mxu0 0.0
  %4363 = vmatprep.subr.mxu0 0.0
  %4364 = vmatpush1.msra.mxu0 0.0
  %4365 = vmatprep.subr.mxu0 0.0
  %4366 = vmatpush1.msra.mxu0 0.0
  %4367 = vmatprep.subr.mxu0 0.0
  %4368 = vmatpush1.msra.mxu0 0.0
  %4369 = vmatprep.subr.mxu0 0.0
  %4370 = vmatpush1.msra.mxu0 0.0
  %4371 = vmatprep.subr.mxu0 0.0
  %4372 = vmatpush1.msra.mxu0 0.0
  %4373 = vmatprep.subr.mxu0 0.0
  %4374 = vmatpush1.msra.mxu0 0.0
  %4375 = vmatprep.subr.mxu0 0.0
  %4376 = vmatpush1.msra.mxu0 0.0
  %4377 = vmatprep.subr.mxu0 0.0
  %4378 = vmatpush1.msra.mxu0 0.0
  %4379 = vmatprep.subr.mxu0 0.0
  %4380 = vmatpush1.msra.mxu0 0.0
  %4381 = vmatprep.subr.mxu0 0.0
  %4382 = vmatpush1.msra.mxu0 0.0
  %4383 = vmatprep.subr.mxu0 0.0
  %4384 = vmatpush1.msra.mxu0 0.0
  %4385 = vmatprep.subr.mxu0 0.0
  %4386 = vmatpush1.msra.mxu0 0.0
  %4387 = vmatprep.subr.mxu0 0.0
  %4388 = vmatpush1.msra.mxu0 0.0
  %4389 = vmatprep.subr.mxu0 0.0
  %4390 = vmatpush1.msra.mxu0 0.0
  %4391 = vmatprep.subr.mxu0 0.0
  %4392 = vmatpush1.msra.mxu0 0.0
  %4393 = vmatprep.subr.mxu0 0.0
  %4394 = vmatpush1.msra.mxu0 0.0
  %4395 = vmatprep.subr.mxu0 0.0
  %4396 = vmatpush1.msra.mxu0 0.0
  %4397 = vmatprep.subr.mxu0 0.0
  %4398 = vmatpush1.msra.mxu0 0.0
  %4399 = vmatprep.subr.mxu0 0.0
  %4400 = vmatpush1.msra.mxu0 0.0
  %4401 = vmatprep.mubr.f32.mxu0 0.0
  %4402 = vmatmul.mubr.f32.gmra.mrb[0].mxu0 %v4335
  %v4403 = vpop.f32.mrb[0].mxu0
  %v4404 = vadd.f32 %v4332, %v4403
  %v4405 = vpop.f32.mrb[0].mxu0
  %4406 = vdwg.mxu0
  %v4407 = vsub.f32 0.0, %v4404
  %v4408 = vmul.f32 %v4407, 1.442695
  %v4409 = vpow.pop %v4408
  %v4410 = vadd.f32 %v4409, 1.0
  %v4411 = vrcp.pop %v4410
  %v4412 = vmul.f32 1.0, %v4411
  %v4413 = vld [vmem:[%s14] sm:$0xff]
  %v4414 = vld [vmem:[%s14 + $0x8] sm:$0xff]
  %v4415 = vld [vmem:[%s14 + $0x10] sm:$0xff]
  %v4416 = vld [vmem:[%s14 + $0x18] sm:$0xff]
  %v4417 = vld [vmem:[%s14 + $0x20] sm:$0xff]
  %v4418 = vld [vmem:[%s14 + $0x28] sm:$0xff]
  %v4419 = vld [vmem:[%s14 + $0x30] sm:$0xff]
  %v4420 = vld [vmem:[%s14 + $0x38] sm:$0xff]
  %v4421 = vld [vmem:[%s14 + $0x40] sm:$0xff]
  %v4422 = vld [vmem:[%s14 + $0x48] sm:$0xff]
  %v4423 = vld [vmem:[%s14 + $0x50] sm:$0xff]
  %v4424 = vld [vmem:[%s14 + $0x58] sm:$0xff]
  %v4425 = vld [vmem:[%s14 + $0x60] sm:$0xff]
  %v4426 = vld [vmem:[%s14 + $0x68] sm:$0xff]
  %v4427 = vld [vmem:[%s14 + $0x70] sm:$0xff]
  %v4428 = vld [vmem:[%s14 + $0x78] sm:$0xff]
  %vm4429 = vcmask 261120
  %v4431 = vsel %vm4429, %v4326, 0
  %4433 = vmatprep.subr.mxu0 %v4414
  %4434 = vmatpush1.msra.mxu0 %v4413
  %4435 = vmatprep.subr.mxu0 %v4418
  %4436 = vmatpush1.msra.mxu0 %v4417
  %4437 = vmatprep.subr.mxu0 %v4422
  %4438 = vmatpush1.msra.mxu0 %v4421
  %4439 = vmatprep.subr.mxu0 %v4426
  %4440 = vmatpush1.msra.mxu0 %v4425
  %4441 = vmatprep.subr.mxu0 0.0
  %4442 = vmatpush1.msra.mxu0 0.0
  %4443 = vmatprep.subr.mxu0 0.0
  %4444 = vmatpush1.msra.mxu0 0.0
  %4445 = vmatprep.subr.mxu0 0.0
  %4446 = vmatpush1.msra.mxu0 0.0
  %4447 = vmatprep.subr.mxu0 0.0
  %4448 = vmatpush1.msra.mxu0 0.0
  %4449 = vmatprep.subr.mxu0 0.0
  %4450 = vmatpush1.msra.mxu0 0.0
  %4451 = vmatprep.subr.mxu0 0.0
  %4452 = vmatpush1.msra.mxu0 0.0
  %4453 = vmatprep.subr.mxu0 0.0
  %4454 = vmatpush1.msra.mxu0 0.0
  %4455 = vmatprep.subr.mxu0 0.0
  %4456 = vmatpush1.msra.mxu0 0.0
  %4457 = vmatprep.subr.mxu0 0.0
  %4458 = vmatpush1.msra.mxu0 0.0
  %4459 = vmatprep.subr.mxu0 0.0
  %4460 = vmatpush1.msra.mxu0 0.0
  %4461 = vmatprep.subr.mxu0 0.0
  %4462 = vmatpush1.msra.mxu0 0.0
  %4463 = vmatprep.subr.mxu0 0.0
  %4464 = vmatpush1.msra.mxu0 0.0
  %4465 = vmatprep.subr.mxu0 0.0
  %4466 = vmatpush1.msra.mxu0 0.0
  %4467 = vmatprep.subr.mxu0 0.0
  %4468 = vmatpush1.msra.mxu0 0.0
  %4469 = vmatprep.subr.mxu0 0.0
  %4470 = vmatpush1.msra.mxu0 0.0
  %4471 = vmatprep.subr.mxu0 0.0
  %4472 = vmatpush1.msra.mxu0 0.0
  %4473 = vmatprep.subr.mxu0 0.0
  %4474 = vmatpush1.msra.mxu0 0.0
  %4475 = vmatprep.subr.mxu0 0.0
  %4476 = vmatpush1.msra.mxu0 0.0
  %4477 = vmatprep.subr.mxu0 0.0
  %4478 = vmatpush1.msra.mxu0 0.0
  %4479 = vmatprep.subr.mxu0 0.0
  %4480 = vmatpush1.msra.mxu0 0.0
  %4481 = vmatprep.subr.mxu0 0.0
  %4482 = vmatpush1.msra.mxu0 0.0
  %4483 = vmatprep.subr.mxu0 0.0
  %4484 = vmatpush1.msra.mxu0 0.0
  %4485 = vmatprep.subr.mxu0 0.0
  %4486 = vmatpush1.msra.mxu0 0.0
  %4487 = vmatprep.subr.mxu0 0.0
  %4488 = vmatpush1.msra.mxu0 0.0
  %4489 = vmatprep.subr.mxu0 0.0
  %4490 = vmatpush1.msra.mxu0 0.0
  %4491 = vmatprep.subr.mxu0 0.0
  %4492 = vmatpush1.msra.mxu0 0.0
  %4493 = vmatprep.subr.mxu0 0.0
  %4494 = vmatpush1.msra.mxu0 0.0
  %4495 = vmatprep.subr.mxu0 0.0
  %4496 = vmatpush1.msra.mxu0 0.0
  %4497 = vmatprep.mubr.f32.mxu0 0.0
  %4498 = vmatmul.mubr.f32.gmra.mrb[0].mxu0 %v4431
  %v4499 = vpop.f32.mrb[0].mxu0
  %v4500 = vadd.f32 0.0, %v4499
  %v4501 = vpop.f32.mrb[0].mxu0
  %v4502 = vadd.f32 0.0, %v4501
  %4503 = vdwg.mxu0
  %4504 = vmatprep.subr.mxu0 %v4416
  %4505 = vmatpush1.msra.mxu0 %v4415
  %4506 = vmatprep.subr.mxu0 %v4420
  %4507 = vmatpush1.msra.mxu0 %v4419
  %4508 = vmatprep.subr.mxu0 %v4424
  %4509 = vmatpush1.msra.mxu0 %v4423
  %4510 = vmatprep.subr.mxu0 %v4428
  %4511 = vmatpush1.msra.mxu0 %v4427
  %4512 = vmatprep.subr.mxu0 0.0
  %4513 = vmatpush1.msra.mxu0 0.0
  %4514 = vmatprep.subr.mxu0 0.0
  %4515 = vmatpush1.msra.mxu0 0.0
  %4516 = vmatprep.subr.mxu0 0.0
  %4517 = vmatpush1.msra.mxu0 0.0
  %4518 = vmatprep.subr.mxu0 0.0
  %4519 = vmatpush1.msra.mxu0 0.0
  %4520 = vmatprep.subr.mxu0 0.0
  %4521 = vmatpush1.msra.mxu0 0.0
  %4522 = vmatprep.subr.mxu0 0.0
  %4523 = vmatpush1.msra.mxu0 0.0
  %4524 = vmatprep.subr.mxu0 0.0
  %4525 = vmatpush1.msra.mxu0 0.0
  %4526 = vmatprep.subr.mxu0 0.0
  %4527 = vmatpush1.msra.mxu0 0.0
  %4528 = vmatprep.subr.mxu0 0.0
  %4529 = vmatpush1.msra.mxu0 0.0
  %4530 = vmatprep.subr.mxu0 0.0
  %4531 = vmatpush1.msra.mxu0 0.0
  %4532 = vmatprep.subr.mxu0 0.0
  %4533 = vmatpush1.msra.mxu0 0.0
  %4534 = vmatprep.subr.mxu0 0.0
  %4535 = vmatpush1.msra.mxu0 0.0
  %4536 = vmatprep.subr.mxu0 0.0
  %4537 = vmatpush1.msra.mxu0 0.0
  %4538 = vmatprep.subr.mxu0 0.0
  %4539 = vmatpush1.msra.mxu0 0.0
  %4540 = vmatprep.subr.mxu0 0.0
  %4541 = vmatpush1.msra.mxu0 0.0
  %4542 = vmatprep.subr.mxu0 0.0
  %4543 = vmatpush1.msra.mxu0 0.0
  %4544 = vmatprep.subr.mxu0 0.0
  %4545 = vmatpush1.msra.mxu0 0.0
  %4546 = vmatprep.subr.mxu0 0.0
  %4547 = vmatpush1.msra.mxu0 0.0
  %4548 = vmatprep.subr.mxu0 0.0
  %4549 = vmatpush1.msra.mxu0 0.0
  %4550 = vmatprep.subr.mxu0 0.0
  %4551 = vmatpush1.msra.mxu0 0.0
  %4552 = vmatprep.subr.mxu0 0.0
  %4553 = vmatpush1.msra.mxu0 0.0
  %4554 = vmatprep.subr.mxu0 0.0
  %4555 = vmatpush1.msra.mxu0 0.0
  %4556 = vmatprep.subr.mxu0 0.0
  %4557 = vmatpush1.msra.mxu0 0.0
  %4558 = vmatprep.subr.mxu0 0.0
  %4559 = vmatpush1.msra.mxu0 0.0
  %4560 = vmatprep.subr.mxu0 0.0
  %4561 = vmatpush1.msra.mxu0 0.0
  %4562 = vmatprep.subr.mxu0 0.0
  %4563 = vmatpush1.msra.mxu0 0.0
  %4564 = vmatprep.subr.mxu0 0.0
  %4565 = vmatpush1.msra.mxu0 0.0
  %4566 = vmatprep.subr.mxu0 0.0
  %4567 = vmatpush1.msra.mxu0 0.0
  %4568 = vmatprep.mubr.f32.mxu0 0.0
  %4569 = vmatmul.mubr.f32.gmra.mrb[0].mxu0 %v4431
  %v4570 = vpop.f32.mrb[0].mxu0
  %v4571 = vadd.f32 0.0, %v4570
  %v4572 = vpop.f32.mrb[0].mxu0
  %v4573 = vadd.f32 0.0, %v4572
  %4574 = vdwg.mxu0
  %v4575 = vld [vmem:[%s15] sm:$0xff]
  %v4576 = vld [vmem:[%s15 + $0x8] sm:$0xff]
  %v4577 = vld [vmem:[%s15 + $0x10] sm:$0xff]
  %v4578 = vld [vmem:[%s15 + $0x18] sm:$0xff]
  %v4579 = vld [vmem:[%s15 + $0x20] sm:$0xff]
  %v4580 = vld [vmem:[%s15 + $0x28] sm:$0xff]
  %v4581 = vld [vmem:[%s15 + $0x30] sm:$0xff]
  %v4582 = vld [vmem:[%s15 + $0x38] sm:$0xff]
  %v4583 = vld [vmem:[%s15 + $0x40] sm:$0xff]
  %v4584 = vld [vmem:[%s15 + $0x48] sm:$0xff]
  %v4585 = vld [vmem:[%s15 + $0x50] sm:$0xff]
  %v4586 = vld [vmem:[%s15 + $0x58] sm:$0xff]
  %v4587 = vld [vmem:[%s15 + $0x60] sm:$0xff]
  %v4588 = vld [vmem:[%s15 + $0x68] sm:$0xff]
  %v4589 = vld [vmem:[%s15 + $0x70] sm:$0xff]
  %v4590 = vld [vmem:[%s15 + $0x78] sm:$0xff]
  %v4592 = vsel %vm4429, %v4412, 0
  %4594 = vmatprep.subr.mxu0 %v4576
  %4595 = vmatpush1.msra.mxu0 %v4575
  %4596 = vmatprep.subr.mxu0 %v4580
  %4597 = vmatpush1.msra.mxu0 %v4579
  %4598 = vmatprep.subr.mxu0 %v4584
  %4599 = vmatpush1.msra.mxu0 %v4583
  %4600 = vmatprep.subr.mxu0 %v4588
  %4601 = vmatpush1.msra.mxu0 %v4587
  %4602 = vmatprep.subr.mxu0 0.0
  %4603 = vmatpush1.msra.mxu0 0.0
  %4604 = vmatprep.subr.mxu0 0.0
  %4605 = vmatpush1.msra.mxu0 0.0
  %4606 = vmatprep.subr.mxu0 0.0
  %4607 = vmatpush1.msra.mxu0 0.0
  %4608 = vmatprep.subr.mxu0 0.0
  %4609 = vmatpush1.msra.mxu0 0.0
  %4610 = vmatprep.subr.mxu0 0.0
  %4611 = vmatpush1.msra.mxu0 0.0
  %4612 = vmatprep.subr.mxu0 0.0
  %4613 = vmatpush1.msra.mxu0 0.0
  %4614 = vmatprep.subr.mxu0 0.0
  %4615 = vmatpush1.msra.mxu0 0.0
  %4616 = vmatprep.subr.mxu0 0.0
  %4617 = vmatpush1.msra.mxu0 0.0
  %4618 = vmatprep.subr.mxu0 0.0
  %4619 = vmatpush1.msra.mxu0 0.0
  %4620 = vmatprep.subr.mxu0 0.0
  %4621 = vmatpush1.msra.mxu0 0.0
  %4622 = vmatprep.subr.mxu0 0.0
  %4623 = vmatpush1.msra.mxu0 0.0
  %4624 = vmatprep.subr.mxu0 0.0
  %4625 = vmatpush1.msra.mxu0 0.0
  %4626 = vmatprep.subr.mxu0 0.0
  %4627 = vmatpush1.msra.mxu0 0.0
  %4628 = vmatprep.subr.mxu0 0.0
  %4629 = vmatpush1.msra.mxu0 0.0
  %4630 = vmatprep.subr.mxu0 0.0
  %4631 = vmatpush1.msra.mxu0 0.0
  %4632 = vmatprep.subr.mxu0 0.0
  %4633 = vmatpush1.msra.mxu0 0.0
  %4634 = vmatprep.subr.mxu0 0.0
  %4635 = vmatpush1.msra.mxu0 0.0
  %4636 = vmatprep.subr.mxu0 0.0
  %4637 = vmatpush1.msra.mxu0 0.0
  %4638 = vmatprep.subr.mxu0 0.0
  %4639 = vmatpush1.msra.mxu0 0.0
  %4640 = vmatprep.subr.mxu0 0.0
  %4641 = vmatpush1.msra.mxu0 0.0
  %4642 = vmatprep.subr.mxu0 0.0
  %4643 = vmatpush1.msra.mxu0 0.0
  %4644 = vmatprep.subr.mxu0 0.0
  %4645 = vmatpush1.msra.mxu0 0.0
  %4646 = vmatprep.subr.mxu0 0.0
  %4647 = vmatpush1.msra.mxu0 0.0
  %4648 = vmatprep.subr.mxu0 0.0
  %4649 = vmatpush1.msra.mxu0 0.0
  %4650 = vmatprep.subr.mxu0 0.0
  %4651 = vmatpush1.msra.mxu0 0.0
  %4652 = vmatprep.subr.mxu0 0.0
  %4653 = vmatpush1.msra.mxu0 0.0
  %4654 = vmatprep.subr.mxu0 0.0
  %4655 = vmatpush1.msra.mxu0 0.0
  %4656 = vmatprep.subr.mxu0 0.0
  %4657 = vmatpush1.msra.mxu0 0.0
  %4658 = vmatprep.mubr.f32.mxu0 0.0
  %4659 = vmatmul.mubr.f32.gmra.mrb[0].mxu0 %v4592
  %v4660 = vpop.f32.mrb[0].mxu0
  %v4661 = vadd.f32 0.0, %v4660
  %v4662 = vpop.f32.mrb[0].mxu0
  %v4663 = vadd.f32 0.0, %v4662
  %4664 = vdwg.mxu0
  %4665 = vmatprep.subr.mxu0 %v4578
  %4666 = vmatpush1.msra.mxu0 %v4577
  %4667 = vmatprep.subr.mxu0 %v4582
  %4668 = vmatpush1.msra.mxu0 %v4581
  %4669 = vmatprep.subr.mxu0 %v4586
  %4670 = vmatpush1.msra.mxu0 %v4585
  %4671 = vmatprep.subr.mxu0 %v4590
  %4672 = vmatpush1.msra.mxu0 %v4589
  %4673 = vmatprep.subr.mxu0 0.0
  %4674 = vmatpush1.msra.mxu0 0.0
  %4675 = vmatprep.subr.mxu0 0.0
  %4676 = vmatpush1.msra.mxu0 0.0
  %4677 = vmatprep.subr.mxu0 0.0
  %4678 = vmatpush1.msra.mxu0 0.0
  %4679 = vmatprep.subr.mxu0 0.0
  %4680 = vmatpush1.msra.mxu0 0.0
  %4681 = vmatprep.subr.mxu0 0.0
  %4682 = vmatpush1.msra.mxu0 0.0
  %4683 = vmatprep.subr.mxu0 0.0
  %4684 = vmatpush1.msra.mxu0 0.0
  %4685 = vmatprep.subr.mxu0 0.0
  %4686 = vmatpush1.msra.mxu0 0.0
  %4687 = vmatprep.subr.mxu0 0.0
  %4688 = vmatpush1.msra.mxu0 0.0
  %4689 = vmatprep.subr.mxu0 0.0
  %4690 = vmatpush1.msra.mxu0 0.0
  %4691 = vmatprep.subr.mxu0 0.0
  %4692 = vmatpush1.msra.mxu0 0.0
  %4693 = vmatprep.subr.mxu0 0.0
  %4694 = vmatpush1.msra.mxu0 0.0
  %4695 = vmatprep.subr.mxu0 0.0
  %4696 = vmatpush1.msra.mxu0 0.0
  %4697 = vmatprep.subr.mxu0 0.0
  %4698 = vmatpush1.msra.mxu0 0.0
  %4699 = vmatprep.subr.mxu0 0.0
  %4700 = vmatpush1.msra.mxu0 0.0
  %4701 = vmatprep.subr.mxu0 0.0
  %4702 = vmatpush1.msra.mxu0 0.0
  %4703 = vmatprep.subr.mxu0 0.0
  %4704 = vmatpush1.msra.mxu0 0.0
  %4705 = vmatprep.subr.mxu0 0.0
  %4706 = vmatpush1.msra.mxu0 0.0
  %4707 = vmatprep.subr.mxu0 0.0
  %4708 = vmatpush1.msra.mxu0 0.0
  %4709 = vmatprep.subr.mxu0 0.0
  %4710 = vmatpush1.msra.mxu0 0.0
  %4711 = vmatprep.subr.mxu0 0.0
  %4712 = vmatpush1.msra.mxu0 0.0
  %4713 = vmatprep.subr.mxu0 0.0
  %4714 = vmatpush1.msra.mxu0 0.0
  %4715 = vmatprep.subr.mxu0 0.0
  %4716 = vmatpush1.msra.mxu0 0.0
  %4717 = vmatprep.subr.mxu0 0.0
  %4718 = vmatpush1.msra.mxu0 0.0
  %4719 = vmatprep.subr.mxu0 0.0
  %4720 = vmatpush1.msra.mxu0 0.0
  %4721 = vmatprep.subr.mxu0 0.0
  %4722 = vmatpush1.msra.mxu0 0.0
  %4723 = vmatprep.subr.mxu0 0.0
  %4724 = vmatpush1.msra.mxu0 0.0
  %4725 = vmatprep.subr.mxu0 0.0
  %4726 = vmatpush1.msra.mxu0 0.0
  %4727 = vmatprep.subr.mxu0 0.0
  %4728 = vmatpush1.msra.mxu0 0.0
  %4729 = vmatprep.mubr.f32.mxu0 0.0
  %4730 = vmatmul.mubr.f32.gmra.mrb[0].mxu0 %v4592
  %v4731 = vpop.f32.mrb[0].mxu0
  %v4732 = vadd.f32 0.0, %v4731
  %v4733 = vpop.f32.mrb[0].mxu0
  %v4734 = vadd.f32 0.0, %v4733
  %4735 = vdwg.mxu0
  %v4736 = vmul.f32 %v3662, %v4661
  %v4737 = vmul.f32 %v3663, %v4663
  %v4738 = vmul.f32 %v3664, %v4732
  %v4739 = vmul.f32 %v3665, %v4734
  %v4740 = vmul.f32 %v4736, %v4500
  %v4741 = vmul.f32 %v4737, %v4502
  %v4742 = vmul.f32 %v4738, %v4571
  %v4743 = vmul.f32 %v4739, %v4573
  %v4746 = vcombine.high %v53, %v53
  %v4747 = vcombine.high %v54, %v54
  %v4750 = vadd.f32 %v4740, %v53
  %v4751 = vadd.f32 %v4741, %v4746
  %v4752 = vadd.f32 %v4742, %v54
  %v4753 = vadd.f32 %v4743, %v4747
  %v4754 = vmax.f32 %v4750, 0.0
  %v4755 = vmax.f32 %v4751, 0.0
  %v4756 = vmax.f32 %v4752, 0.0
  %v4757 = vmax.f32 %v4753, 0.0
  %v4762 = vcombine.low %v4754, %v4755
  %v4763 = vcombine.low %v4756, %v4757
  %4766 = vst [vmem:[%s16] sm:$0xff] %v4762
  %4767 = vst [vmem:[%s16 + $0x8] sm:$0xff] %v4763
  // Predicated region
  $region66: #{basic_block_forward.1} parent=0 // pred_check
    _
  $region67: #{basic_block_forward.1} parent=0 // pred_check_branch
    %4769 = sbr.rel (0) target = $region69
  $region68: #{basic_block_forward.1} parent=0 // pred_region
    _
  $region69: #{basic_block_forward.1} parent=0 // pred_fallthru
    _
  // Predicated region
  $region70: #{basic_block_forward.1} parent=0 // pred_check
    _
  $region71: #{basic_block_forward.1} parent=0 // pred_check_branch
    %4771 = sbr.rel (0) target = $region73
  $region72: #{basic_block_forward.1} parent=0 // pred_region
    _
  $region73: #{basic_block_forward.1} parent=0 // pred_fallthru
    _

</llo_original>
